<compile_context>
chip_gen: v6e
topology: v6e:2x2x1
jax: 0.10.0
libtpu: 0.0.40
codegen_flags: <defaults>
</compile_context>

<pallas_src>
import jax
import jax.numpy as jnp
from jax.experimental import pallas as pl
from jax.experimental.pallas import tpu as pltpu

# ---- model hyper-parameters (small, consistent with a transformer encoder) ----
B = 2          # batch ("number of sentences")
S = 8          # sequence length
D = 32         # hidden size (word embedding dimension)
H = 2          # attention heads
DH = D // H    # head dim
FF = 64        # feed-forward inner dim
V = 64         # vocab size
N_LAYERS = 2   # encoder layers
SCALE = 1.0 / float(DH) ** 0.5
EPS = 1e-5


# ----------------------------- in-kernel helpers -------------------------------
def _gelu(x):
    # tanh-approx GELU (EUP tanh; PyTorch default is erf-based -- tiny delta)
    return 0.5 * x * (1.0 + jnp.tanh(0.7978845608028654 * (x + 0.044715 * x * x * x)))


def _layernorm(x, g, b):
    mu = jnp.mean(x, axis=-1, keepdims=True)
    var = jnp.mean((x - mu) * (x - mu), axis=-1, keepdims=True)
    return (x - mu) * jax.lax.rsqrt(var + EPS) * g + b


# ------------------------------ fused Pallas kernel ----------------------------
def text_encoder_kernel(x_ref, mask_ref, eg_ref, eb_ref,
                        wq_ref, bq_ref, wk_ref, bk_ref, wv_ref, bv_ref,
                        wo_ref, bo_ref, ln1g_ref, ln1b_ref,
                        w1_ref, b1_ref, w2_ref, b2_ref, ln2g_ref, ln2b_ref,
                        out_ref, x_sc):
    # x_ref:    (B*S, D) word+pos embeddings (pre embedding-LN), f32
    # mask_ref: (B, S)   attention mask (1 = valid, 0 = pad), f32
    # weights:  ONE layer's weights per grid step (layer axis squeezed away);
    #           matmul weights are bf16, biases / LN params are f32.
    #           wq/wk/wv: (H, D, DH), wo: (H, DH, D) -- pre-split per head.
    # x_sc:     (B*S, D) f32 VMEM scratch, resident across the layer grid.
    l = pl.program_id(0)

    @pl.when(l == 0)
    def _init():
        # embedding layernorm; activations stay resident in VMEM from here on
        x_sc[...] = _layernorm(x_ref[...], eg_ref[...], eb_ref[...])

    mask = mask_ref[...]                              # (B, S) f32
    x = x_sc[...]                                     # f32 activations
    xb = x.astype(jnp.bfloat16)                       # bf16 MXU operand

    # per-head Q/K/V projections over ALL B*S rows at once (scale folded in wq/bq)
    q = [jnp.dot(xb, wq_ref[h], preferred_element_type=jnp.float32) + bq_ref[h]
         for h in range(H)]
    k = [jnp.dot(xb, wk_ref[h], preferred_element_type=jnp.float32) + bk_ref[h]
         for h in range(H)]
    v = [jnp.dot(xb, wv_ref[h], preferred_element_type=jnp.float32) + bv_ref[h]
         for h in range(H)]

    # per-batch attention on (S, S) blocks; key-padding bias built in-kernel
    attn_blocks = []
    for b in range(B):                                # static loop, B tiny
        r = slice(b * S, (b + 1) * S)                 # sublane-aligned row block
        key_bias = (mask[b:b + 1, :] - 1.0) * 1e9     # (1, S): 0 valid / -1e9 pad, f32
        acc = jnp.zeros((S, D), jnp.float32)
        for h in range(H):                            # static loop over heads
            qb = q[h][r, :]
            kb = k[h][r, :]
            vb = v[h][r, :]
            # q @ k^T via dot_general contracting the last axes (no XLU transpose)
            s = jax.lax.dot_general(
                qb.astype(jnp.bfloat16), kb.astype(jnp.bfloat16),
                (((1,), (1,)), ((), ())),
                preferred_element_type=jnp.float32) + key_bias          # (S, S) f32
            m = jnp.max(s, axis=-1, keepdims=True)
            e = jnp.exp(s - m)
            p = e / jnp.sum(e, axis=-1, keepdims=True)                  # exact softmax
            ctx = jnp.dot(p.astype(jnp.bfloat16), vb.astype(jnp.bfloat16),
                          preferred_element_type=jnp.float32)           # (S, DH)
            # fold head context straight into the output projection (no column store)
            acc = acc + jnp.dot(ctx.astype(jnp.bfloat16), wo_ref[h],
                                preferred_element_type=jnp.float32)     # (S, D)
        attn_blocks.append(acc)
    attn = jnp.concatenate(attn_blocks, axis=0) + bo_ref[...]           # (B*S, D)

    x1 = _layernorm(x + attn, ln1g_ref[...], ln1b_ref[...])
    hdn = _gelu(jnp.dot(x1.astype(jnp.bfloat16), w1_ref[...],
                        preferred_element_type=jnp.float32) + b1_ref[...])
    ffn = jnp.dot(hdn.astype(jnp.bfloat16), w2_ref[...],
                  preferred_element_type=jnp.float32) + b2_ref[...]
    x_sc[...] = _layernorm(x1 + ffn, ln2g_ref[...], ln2b_ref[...])

    # masked mean pooling after the last layer
    @pl.when(l == pl.num_programs(0) - 1)
    def _finalize():
        xf = x_sc[...]
        outs = []
        for b in range(B):
            r = slice(b * S, (b + 1) * S)
            mrow = mask[b:b + 1, :]                                     # (1, S)
            summed = jnp.dot(mrow, xf[r, :],
                             preferred_element_type=jnp.float32)        # (1, D)
            denom = jnp.maximum(jnp.sum(mrow, axis=-1, keepdims=True), 1e-9)
            outs.append(summed * pl.reciprocal(denom, approx=True))
        out_ref[...] = jnp.concatenate(outs, axis=0)                    # (B, D)


# ------------------------------- wrapper ----------------------------------------
def text_encoder_forward(token_ids, attention_mask, params):
    f32, bf16 = jnp.float32, jnp.bfloat16
    L = N_LAYERS

    # glue (plain JAX): embedding gather + positional add
    x = params["emb"][token_ids] + params["pos"][None, :, :]            # (B, S, D)
    x_flat = x.reshape(B * S, D).astype(f32)
    mask2d = attention_mask.astype(f32)                                 # (B, S)

    # pre-split per-head weights; fold softmax SCALE into wq/bq; bf16 matmul weights
    def split_cols(w):   # (L, D, D) -> (L, H, D, DH)   (column blocks per head)
        return w.reshape(L, D, H, DH).transpose(0, 2, 1, 3)

    def split_bias(b):   # (L, 1, D) -> (L, H, 1, DH)
        return b.reshape(L, 1, H, DH).transpose(0, 2, 1, 3)

    wq = (split_cols(params["wq"]) * SCALE).astype(bf16)
    bq = (split_bias(params["bq"]) * SCALE).astype(f32)
    wk = split_cols(params["wk"]).astype(bf16)
    bk = split_bias(params["bk"]).astype(f32)
    wv = split_cols(params["wv"]).astype(bf16)
    bv = split_bias(params["bv"]).astype(f32)
    wo = params["wo"].reshape(L, H, DH, D).astype(bf16)                 # row blocks per head
    bo = params["bo"].astype(f32)
    w1 = params["w1"].astype(bf16)
    w2 = params["w2"].astype(bf16)

    inputs = (x_flat, mask2d, params["emb_ln_g"], params["emb_ln_b"],
              wq, bq, wk, bk, wv, bv, wo, bo,
              params["ln1_g"], params["ln1_b"],
              w1, params["b1"], w2, params["b2"],
              params["ln2_g"], params["ln2_b"])

    const = lambda shape: pl.BlockSpec(shape, lambda l: tuple(0 for _ in shape))
    layer = lambda shape: pl.BlockSpec((None,) + shape,
                                       lambda l: (l,) + tuple(0 for _ in shape))

    grid_spec = pltpu.PrefetchScalarGridSpec(
        num_scalar_prefetch=0,
        grid=(N_LAYERS,),                               # stream one layer per step
        in_specs=[
            const((B * S, D)),                          # x (layer-invariant)
            const((B, S)),                              # mask
            const((1, D)), const((1, D)),               # embedding LN gamma/beta
            layer((H, D, DH)), layer((H, 1, DH)),       # wq, bq
            layer((H, D, DH)), layer((H, 1, DH)),       # wk, bk
            layer((H, D, DH)), layer((H, 1, DH)),       # wv, bv
            layer((H, DH, D)), layer((1, D)),           # wo, bo
            layer((1, D)), layer((1, D)),               # ln1 gamma/beta
            layer((D, FF)), layer((1, FF)),             # w1, b1
            layer((FF, D)), layer((1, D)),              # w2, b2
            layer((1, D)), layer((1, D)),               # ln2 gamma/beta
        ],
        out_specs=pl.BlockSpec((B, D), lambda l: (0, 0)),
        scratch_shapes=[pltpu.VMEM((B * S, D), jnp.float32)],   # resident activations
    )

    return pl.pallas_call(
        text_encoder_kernel,
        out_shape=jax.ShapeDtypeStruct((B, D), jnp.float32),
        grid_spec=grid_spec,
        compiler_params=pltpu.CompilerParams(
            dimension_semantics=("arbitrary",),         # layer axis is sequential
            vmem_limit_bytes=32 * 1024 * 1024),         # re-derive for real sizes
    )(*inputs)


# ---------------------------- parameter construction ----------------------------
def init_params(key):
    keys = iter(jax.random.split(key, 16))

    def w(shape, scale=0.02):
        return (scale * jax.random.normal(next(keys), shape)).astype(jnp.float32)

    zeros = lambda shape: jnp.zeros(shape, jnp.float32)
    ones = lambda shape: jnp.ones(shape, jnp.float32)

    return {
        "emb": w((V, D)),
        "pos": w((S, D)),
        "emb_ln_g": ones((1, D)), "emb_ln_b": zeros((1, D)),
        # per-layer weights stacked along a leading layer axis
        "wq": w((N_LAYERS, D, D)),   "bq": zeros((N_LAYERS, 1, D)),
        "wk": w((N_LAYERS, D, D)),   "bk": zeros((N_LAYERS, 1, D)),
        "wv": w((N_LAYERS, D, D)),   "bv": zeros((N_LAYERS, 1, D)),
        "wo": w((N_LAYERS, D, D)),   "bo": zeros((N_LAYERS, 1, D)),
        "ln1_g": ones((N_LAYERS, 1, D)), "ln1_b": zeros((N_LAYERS, 1, D)),
        "w1": w((N_LAYERS, D, FF)),  "b1": zeros((N_LAYERS, 1, FF)),
        "w2": w((N_LAYERS, FF, D)),  "b2": zeros((N_LAYERS, 1, D)),
        "ln2_g": ones((N_LAYERS, 1, D)), "ln2_b": zeros((N_LAYERS, 1, D)),
    }


# ----------------------------------- main ----------------------------------------
if __name__ == "__main__":
    key = jax.random.PRNGKey(0)
    k_params, k_tok = jax.random.split(key)

    params = init_params(k_params)

    # "text" stands in as pre-tokenized integer ids + attention mask
    token_ids = jax.random.randint(k_tok, (B, S), 0, V, dtype=jnp.int32)
    lengths = jnp.array([S, 5], dtype=jnp.int32)          # second sentence padded
    attention_mask = (jnp.arange(S)[None, :] < lengths[:, None]).astype(jnp.float32)

    fwd = jax.jit(text_encoder_forward)
    emb = fwd(token_ids, attention_mask, params)
    emb = jax.block_until_ready(emb)

    assert emb.shape == (B, D) and emb.dtype == jnp.float32
    assert bool(jnp.all(jnp.isfinite(emb)))
    print("KERNEL_OK")
</pallas_src>

<mosaic_0001>
module attributes {stable_mosaic.version = 11 : i64} {
  func.func @text_encoder_kernel(%arg0: i32, %arg1: memref<16x32xf32, #tpu.memory_space<vmem>>, %arg2: memref<2x8xf32, #tpu.memory_space<vmem>>, %arg3: memref<1x32xf32, #tpu.memory_space<vmem>>, %arg4: memref<1x32xf32, #tpu.memory_space<vmem>>, %arg5: memref<1x2x32x16xbf16, #tpu.memory_space<vmem>>, %arg6: memref<1x2x1x16xf32, #tpu.memory_space<vmem>>, %arg7: memref<1x2x32x16xbf16, #tpu.memory_space<vmem>>, %arg8: memref<1x2x1x16xf32, #tpu.memory_space<vmem>>, %arg9: memref<1x2x32x16xbf16, #tpu.memory_space<vmem>>, %arg10: memref<1x2x1x16xf32, #tpu.memory_space<vmem>>, %arg11: memref<1x2x16x32xbf16, #tpu.memory_space<vmem>>, %arg12: memref<1x1x32xf32, #tpu.memory_space<vmem>>, %arg13: memref<1x1x32xf32, #tpu.memory_space<vmem>>, %arg14: memref<1x1x32xf32, #tpu.memory_space<vmem>>, %arg15: memref<1x32x64xbf16, #tpu.memory_space<vmem>>, %arg16: memref<1x1x64xf32, #tpu.memory_space<vmem>>, %arg17: memref<1x64x32xbf16, #tpu.memory_space<vmem>>, %arg18: memref<1x1x32xf32, #tpu.memory_space<vmem>>, %arg19: memref<1x1x32xf32, #tpu.memory_space<vmem>>, %arg20: memref<1x1x32xf32, #tpu.memory_space<vmem>>, %arg21: memref<2x32xf32, #tpu.memory_space<vmem>>, %arg22: memref<16x32xf32, #tpu.memory_space<vmem>>) attributes {dimension_semantics = [#tpu.dimension_semantics<arbitrary>], iteration_bounds = array<i64: 2>, scalar_prefetch = 0 : i64, scratch_operands = 1 : i64, tpu.core_type = #tpu.core_type<tc>, window_params = [{pipeline_mode = #tpu.pipeline_mode<synchronous>, transform_indices = @transform_0, window_bounds = array<i64: 16, 32>}, {pipeline_mode = #tpu.pipeline_mode<synchronous>, transform_indices = @transform_1, window_bounds = array<i64: 2, 8>}, {pipeline_mode = #tpu.pipeline_mode<synchronous>, transform_indices = @transform_2, window_bounds = array<i64: 1, 32>}, {pipeline_mode = #tpu.pipeline_mode<synchronous>, transform_indices = @transform_3, window_bounds = array<i64: 1, 32>}, {transform_indices = @transform_4, window_bounds = array<i64: 1, 2, 32, 16>}, {transform_indices = @transform_5, window_bounds = array<i64: 1, 2, 1, 16>}, {transform_indices = @transform_6, window_bounds = array<i64: 1, 2, 32, 16>}, {transform_indices = @transform_7, window_bounds = array<i64: 1, 2, 1, 16>}, {transform_indices = @transform_8, window_bounds = array<i64: 1, 2, 32, 16>}, {transform_indices = @transform_9, window_bounds = array<i64: 1, 2, 1, 16>}, {transform_indices = @transform_10, window_bounds = array<i64: 1, 2, 16, 32>}, {transform_indices = @transform_11, window_bounds = array<i64: 1, 1, 32>}, {transform_indices = @transform_12, window_bounds = array<i64: 1, 1, 32>}, {transform_indices = @transform_13, window_bounds = array<i64: 1, 1, 32>}, {transform_indices = @transform_14, window_bounds = array<i64: 1, 32, 64>}, {transform_indices = @transform_15, window_bounds = array<i64: 1, 1, 64>}, {transform_indices = @transform_16, window_bounds = array<i64: 1, 64, 32>}, {transform_indices = @transform_17, window_bounds = array<i64: 1, 1, 32>}, {transform_indices = @transform_18, window_bounds = array<i64: 1, 1, 32>}, {transform_indices = @transform_19, window_bounds = array<i64: 1, 1, 32>}, {pipeline_mode = #tpu.pipeline_mode<synchronous>, transform_indices = @transform_20, window_bounds = array<i64: 2, 32>}]} {
    %c0_i32 = arith.constant 0 : i32
    %0 = arith.cmpi eq, %arg0, %c0_i32 : i32
    %1 = arith.extui %0 : i1 to i32
    %c0_i32_0 = arith.constant 0 : i32
    %2 = arith.cmpi ne, %1, %c0_i32_0 : i32
    scf.if %2 {
      %c0_144 = arith.constant 0 : index
      %c0_145 = arith.constant 0 : index
      %256 = vector.load %arg1[%c0_144, %c0_145] : memref<16x32xf32, #tpu.memory_space<vmem>>, vector<16x32xf32>
      %c0_146 = arith.constant 0 : index
      %c0_147 = arith.constant 0 : index
      %257 = vector.load %arg3[%c0_146, %c0_147] : memref<1x32xf32, #tpu.memory_space<vmem>>, vector<1x32xf32>
      %c0_148 = arith.constant 0 : index
      %c0_149 = arith.constant 0 : index
      %258 = vector.load %arg4[%c0_148, %c0_149] : memref<1x32xf32, #tpu.memory_space<vmem>>, vector<1x32xf32>
      %cst_150 = arith.constant dense<0.000000e+00> : vector<16xf32>
      %259 = vector.multi_reduction <add>, %256, %cst_150 [1] : vector<16x32xf32> to vector<16xf32>
      %260 = vector.shape_cast %259 : vector<16xf32> to vector<16x1xf32>
      %cst_151 = arith.constant 3.200000e+01 : f32
      %261 = vector.broadcast %cst_151 : f32 to vector<16x1xf32>
      %262 = arith.divf %260, %261 : vector<16x1xf32>
      %263 = vector.broadcast %262 : vector<16x1xf32> to vector<16x32xf32>
      %264 = arith.subf %256, %263 : vector<16x32xf32>
      %265 = vector.broadcast %262 : vector<16x1xf32> to vector<16x32xf32>
      %266 = arith.subf %256, %265 : vector<16x32xf32>
      %267 = arith.mulf %264, %266 : vector<16x32xf32>
      %cst_152 = arith.constant dense<0.000000e+00> : vector<16xf32>
      %268 = vector.multi_reduction <add>, %267, %cst_152 [1] : vector<16x32xf32> to vector<16xf32>
      %269 = vector.shape_cast %268 : vector<16xf32> to vector<16x1xf32>
      %cst_153 = arith.constant 3.200000e+01 : f32
      %270 = vector.broadcast %cst_153 : f32 to vector<16x1xf32>
      %271 = arith.divf %269, %270 : vector<16x1xf32>
      %272 = vector.broadcast %262 : vector<16x1xf32> to vector<16x32xf32>
      %273 = arith.subf %256, %272 : vector<16x32xf32>
      %cst_154 = arith.constant 9.99999974E-6 : f32
      %274 = vector.broadcast %cst_154 : f32 to vector<16x1xf32>
      %275 = arith.addf %271, %274 : vector<16x1xf32>
      %276 = math.rsqrt %275 : vector<16x1xf32>
      %277 = vector.broadcast %276 : vector<16x1xf32> to vector<16x32xf32>
      %278 = arith.mulf %273, %277 : vector<16x32xf32>
      %279 = vector.broadcast %257 : vector<1x32xf32> to vector<16x32xf32>
      %280 = arith.mulf %278, %279 : vector<16x32xf32>
      %281 = vector.broadcast %258 : vector<1x32xf32> to vector<16x32xf32>
      %282 = arith.addf %280, %281 : vector<16x32xf32>
      %c0_155 = arith.constant 0 : index
      %c0_156 = arith.constant 0 : index
      %283 = vector.load %arg22[%c0_155, %c0_156] : memref<16x32xf32, #tpu.memory_space<vmem>>, vector<16x32xf32>
      tpu.vector_store %arg22[%c0_155, %c0_156], %282 {strides = array<i32>} : memref<16x32xf32, #tpu.memory_space<vmem>>, vector<16x32xf32>,
    } else {
    }
    %c0 = arith.constant 0 : index
    %c0_1 = arith.constant 0 : index
    %3 = vector.load %arg2[%c0, %c0_1] : memref<2x8xf32, #tpu.memory_space<vmem>>, vector<2x8xf32>
    %c0_2 = arith.constant 0 : index
    %c0_3 = arith.constant 0 : index
    %4 = vector.load %arg22[%c0_2, %c0_3] : memref<16x32xf32, #tpu.memory_space<vmem>>, vector<16x32xf32>
    %5 = arith.truncf %4 : vector<16x32xf32> to vector<16x32xbf16>
    %c0_4 = arith.constant 0 : index
    %c0_5 = arith.constant 0 : index
    %c0_6 = arith.constant 0 : index
    %c0_7 = arith.constant 0 : index
    %6 = vector.load %arg5[%c0_4, %c0_5, %c0_6, %c0_7] : memref<1x2x32x16xbf16, #tpu.memory_space<vmem>>, vector<1x1x32x16xbf16>
    %7 = vector.shape_cast %6 : vector<1x1x32x16xbf16> to vector<32x16xbf16>
    %cst = arith.constant dense<0.000000e+00> : vector<16x16xf32>
    %8 = tpu.matmul %5, %7, %cst {dimension_numbers = #tpu.dot_dimension_numbers<[1], [0], [0], [1], [0, 0, 1, 1], [], []>} : vector<16x32xbf16>, vector<32x16xbf16>, vector<16x16xf32> -> vector<16x16xf32>
    %c0_8 = arith.constant 0 : index
    %c0_9 = arith.constant 0 : index
    %c0_10 = arith.constant 0 : index
    %c0_11 = arith.constant 0 : index
    %9 = vector.load %arg6[%c0_8, %c0_9, %c0_10, %c0_11] : memref<1x2x1x16xf32, #tpu.memory_space<vmem>>, vector<1x1x1x16xf32>
    %10 = vector.shape_cast %9 : vector<1x1x1x16xf32> to vector<1x16xf32>
    %11 = vector.broadcast %10 : vector<1x16xf32> to vector<16x16xf32>
    %12 = arith.addf %8, %11 : vector<16x16xf32>
    %c0_12 = arith.constant 0 : index
    %c1 = arith.constant 1 : index
    %c0_13 = arith.constant 0 : index
    %c0_14 = arith.constant 0 : index
    %13 = vector.load %arg5[%c0_12, %c1, %c0_13, %c0_14] : memref<1x2x32x16xbf16, #tpu.memory_space<vmem>>, vector<1x1x32x16xbf16>
    %14 = vector.shape_cast %13 : vector<1x1x32x16xbf16> to vector<32x16xbf16>
    %cst_15 = arith.constant dense<0.000000e+00> : vector<16x16xf32>
    %15 = tpu.matmul %5, %14, %cst_15 {dimension_numbers = #tpu.dot_dimension_numbers<[1], [0], [0], [1], [0, 0, 1, 1], [], []>} : vector<16x32xbf16>, vector<32x16xbf16>, vector<16x16xf32> -> vector<16x16xf32>
    %c0_16 = arith.constant 0 : index
    %c1_17 = arith.constant 1 : index
    %c0_18 = arith.constant 0 : index
    %c0_19 = arith.constant 0 : index
    %16 = vector.load %arg6[%c0_16, %c1_17, %c0_18, %c0_19] : memref<1x2x1x16xf32, #tpu.memory_space<vmem>>, vector<1x1x1x16xf32>
    %17 = vector.shape_cast %16 : vector<1x1x1x16xf32> to vector<1x16xf32>
    %18 = vector.broadcast %17 : vector<1x16xf32> to vector<16x16xf32>
    %19 = arith.addf %15, %18 : vector<16x16xf32>
    %c0_20 = arith.constant 0 : index
    %c0_21 = arith.constant 0 : index
    %c0_22 = arith.constant 0 : index
    %c0_23 = arith.constant 0 : index
    %20 = vector.load %arg7[%c0_20, %c0_21, %c0_22, %c0_23] : memref<1x2x32x16xbf16, #tpu.memory_space<vmem>>, vector<1x1x32x16xbf16>
    %21 = vector.shape_cast %20 : vector<1x1x32x16xbf16> to vector<32x16xbf16>
    %cst_24 = arith.constant dense<0.000000e+00> : vector<16x16xf32>
    %22 = tpu.matmul %5, %21, %cst_24 {dimension_numbers = #tpu.dot_dimension_numbers<[1], [0], [0], [1], [0, 0, 1, 1], [], []>} : vector<16x32xbf16>, vector<32x16xbf16>, vector<16x16xf32> -> vector<16x16xf32>
    %c0_25 = arith.constant 0 : index
    %c0_26 = arith.constant 0 : index
    %c0_27 = arith.constant 0 : index
    %c0_28 = arith.constant 0 : index
    %23 = vector.load %arg8[%c0_25, %c0_26, %c0_27, %c0_28] : memref<1x2x1x16xf32, #tpu.memory_space<vmem>>, vector<1x1x1x16xf32>
    %24 = vector.shape_cast %23 : vector<1x1x1x16xf32> to vector<1x16xf32>
    %25 = vector.broadcast %24 : vector<1x16xf32> to vector<16x16xf32>
    %26 = arith.addf %22, %25 : vector<16x16xf32>
    %c0_29 = arith.constant 0 : index
    %c1_30 = arith.constant 1 : index
    %c0_31 = arith.constant 0 : index
    %c0_32 = arith.constant 0 : index
    %27 = vector.load %arg7[%c0_29, %c1_30, %c0_31, %c0_32] : memref<1x2x32x16xbf16, #tpu.memory_space<vmem>>, vector<1x1x32x16xbf16>
    %28 = vector.shape_cast %27 : vector<1x1x32x16xbf16> to vector<32x16xbf16>
    %cst_33 = arith.constant dense<0.000000e+00> : vector<16x16xf32>
    %29 = tpu.matmul %5, %28, %cst_33 {dimension_numbers = #tpu.dot_dimension_numbers<[1], [0], [0], [1], [0, 0, 1, 1], [], []>} : vector<16x32xbf16>, vector<32x16xbf16>, vector<16x16xf32> -> vector<16x16xf32>
    %c0_34 = arith.constant 0 : index
    %c1_35 = arith.constant 1 : index
    %c0_36 = arith.constant 0 : index
    %c0_37 = arith.constant 0 : index
    %30 = vector.load %arg8[%c0_34, %c1_35, %c0_36, %c0_37] : memref<1x2x1x16xf32, #tpu.memory_space<vmem>>, vector<1x1x1x16xf32>
    %31 = vector.shape_cast %30 : vector<1x1x1x16xf32> to vector<1x16xf32>
    %32 = vector.broadcast %31 : vector<1x16xf32> to vector<16x16xf32>
    %33 = arith.addf %29, %32 : vector<16x16xf32>
    %c0_38 = arith.constant 0 : index
    %c0_39 = arith.constant 0 : index
    %c0_40 = arith.constant 0 : index
    %c0_41 = arith.constant 0 : index
    %34 = vector.load %arg9[%c0_38, %c0_39, %c0_40, %c0_41] : memref<1x2x32x16xbf16, #tpu.memory_space<vmem>>, vector<1x1x32x16xbf16>
    %35 = vector.shape_cast %34 : vector<1x1x32x16xbf16> to vector<32x16xbf16>
    %cst_42 = arith.constant dense<0.000000e+00> : vector<16x16xf32>
    %36 = tpu.matmul %5, %35, %cst_42 {dimension_numbers = #tpu.dot_dimension_numbers<[1], [0], [0], [1], [0, 0, 1, 1], [], []>} : vector<16x32xbf16>, vector<32x16xbf16>, vector<16x16xf32> -> vector<16x16xf32>
    %c0_43 = arith.constant 0 : index
    %c0_44 = arith.constant 0 : index
    %c0_45 = arith.constant 0 : index
    %c0_46 = arith.constant 0 : index
    %37 = vector.load %arg10[%c0_43, %c0_44, %c0_45, %c0_46] : memref<1x2x1x16xf32, #tpu.memory_space<vmem>>, vector<1x1x1x16xf32>
    %38 = vector.shape_cast %37 : vector<1x1x1x16xf32> to vector<1x16xf32>
    %39 = vector.broadcast %38 : vector<1x16xf32> to vector<16x16xf32>
    %40 = arith.addf %36, %39 : vector<16x16xf32>
    %c0_47 = arith.constant 0 : index
    %c1_48 = arith.constant 1 : index
    %c0_49 = arith.constant 0 : index
    %c0_50 = arith.constant 0 : index
    %41 = vector.load %arg9[%c0_47, %c1_48, %c0_49, %c0_50] : memref<1x2x32x16xbf16, #tpu.memory_space<vmem>>, vector<1x1x32x16xbf16>
    %42 = vector.shape_cast %41 : vector<1x1x32x16xbf16> to vector<32x16xbf16>
    %cst_51 = arith.constant dense<0.000000e+00> : vector<16x16xf32>
    %43 = tpu.matmul %5, %42, %cst_51 {dimension_numbers = #tpu.dot_dimension_numbers<[1], [0], [0], [1], [0, 0, 1, 1], [], []>} : vector<16x32xbf16>, vector<32x16xbf16>, vector<16x16xf32> -> vector<16x16xf32>
    %c0_52 = arith.constant 0 : index
    %c1_53 = arith.constant 1 : index
    %c0_54 = arith.constant 0 : index
    %c0_55 = arith.constant 0 : index
    %44 = vector.load %arg10[%c0_52, %c1_53, %c0_54, %c0_55] : memref<1x2x1x16xf32, #tpu.memory_space<vmem>>, vector<1x1x1x16xf32>
    %45 = vector.shape_cast %44 : vector<1x1x1x16xf32> to vector<1x16xf32>
    %46 = vector.broadcast %45 : vector<1x16xf32> to vector<16x16xf32>
    %47 = arith.addf %43, %46 : vector<16x16xf32>
    %48 = vector.extract_strided_slice %3 {offsets = [0, 0], sizes = [1, 8], strides = [1, 1]} : vector<2x8xf32> to vector<1x8xf32>
    %cst_56 = arith.constant 1.000000e+00 : f32
    %49 = vector.broadcast %cst_56 : f32 to vector<1x8xf32>
    %50 = arith.subf %48, %49 : vector<1x8xf32>
    %cst_57 = arith.constant 1.000000e+09 : f32
    %51 = vector.broadcast %cst_57 : f32 to vector<1x8xf32>
    %52 = arith.mulf %50, %51 : vector<1x8xf32>
    %cst_58 = arith.constant 0.000000e+00 : f32
    %53 = vector.broadcast %cst_58 : f32 to vector<8x32xf32>
    %54 = vector.extract_strided_slice %12 {offsets = [0, 0], sizes = [8, 16], strides = [1, 1]} : vector<16x16xf32> to vector<8x16xf32>
    %55 = vector.extract_strided_slice %26 {offsets = [0, 0], sizes = [8, 16], strides = [1, 1]} : vector<16x16xf32> to vector<8x16xf32>
    %56 = vector.extract_strided_slice %40 {offsets = [0, 0], sizes = [8, 16], strides = [1, 1]} : vector<16x16xf32> to vector<8x16xf32>
    %57 = arith.truncf %54 : vector<8x16xf32> to vector<8x16xbf16>
    %58 = arith.truncf %55 : vector<8x16xf32> to vector<8x16xbf16>
    %cst_59 = arith.constant dense<0.000000e+00> : vector<8x8xf32>
    %59 = tpu.matmul %57, %58, %cst_59 {dimension_numbers = #tpu.dot_dimension_numbers<[1], [1], [0], [0], [0, 0, 1, 0], [], []>} : vector<8x16xbf16>, vector<8x16xbf16>, vector<8x8xf32> -> vector<8x8xf32>
    %60 = vector.broadcast %52 : vector<1x8xf32> to vector<8x8xf32>
    %61 = arith.addf %59, %60 : vector<8x8xf32>
    %cst_60 = arith.constant dense<0xFF800000> : vector<8xf32>
    %62 = vector.multi_reduction <maximumf>, %61, %cst_60 [1] : vector<8x8xf32> to vector<8xf32>
    %63 = vector.shape_cast %62 : vector<8xf32> to vector<8x1xf32>
    %64 = vector.broadcast %63 : vector<8x1xf32> to vector<8x8xf32>
    %65 = arith.subf %61, %64 : vector<8x8xf32>
    %66 = math.exp %65 : vector<8x8xf32>
    %cst_61 = arith.constant dense<0.000000e+00> : vector<8xf32>
    %67 = vector.multi_reduction <add>, %66, %cst_61 [1] : vector<8x8xf32> to vector<8xf32>
    %68 = vector.shape_cast %67 : vector<8xf32> to vector<8x1xf32>
    %69 = vector.broadcast %68 : vector<8x1xf32> to vector<8x8xf32>
    %70 = arith.divf %66, %69 : vector<8x8xf32>
    %71 = arith.truncf %70 : vector<8x8xf32> to vector<8x8xbf16>
    %72 = arith.truncf %56 : vector<8x16xf32> to vector<8x16xbf16>
    %cst_62 = arith.constant dense<0.000000e+00> : vector<8x16xf32>
    %73 = tpu.matmul %71, %72, %cst_62 {dimension_numbers = #tpu.dot_dimension_numbers<[1], [0], [0], [1], [0, 0, 1, 1], [], []>} : vector<8x8xbf16>, vector<8x16xbf16>, vector<8x16xf32> -> vector<8x16xf32>
    %74 = arith.truncf %73 : vector<8x16xf32> to vector<8x16xbf16>
    %c0_63 = arith.constant 0 : index
    %c0_64 = arith.constant 0 : index
    %c0_65 = arith.constant 0 : index
    %c0_66 = arith.constant 0 : index
    %75 = vector.load %arg11[%c0_63, %c0_64, %c0_65, %c0_66] : memref<1x2x16x32xbf16, #tpu.memory_space<vmem>>, vector<1x1x16x32xbf16>
    %76 = vector.shape_cast %75 : vector<1x1x16x32xbf16> to vector<16x32xbf16>
    %cst_67 = arith.constant dense<0.000000e+00> : vector<8x32xf32>
    %77 = tpu.matmul %74, %76, %cst_67 {dimension_numbers = #tpu.dot_dimension_numbers<[1], [0], [0], [1], [0, 0, 1, 1], [], []>} : vector<8x16xbf16>, vector<16x32xbf16>, vector<8x32xf32> -> vector<8x32xf32>
    %78 = arith.addf %53, %77 : vector<8x32xf32>
    %79 = vector.extract_strided_slice %19 {offsets = [0, 0], sizes = [8, 16], strides = [1, 1]} : vector<16x16xf32> to vector<8x16xf32>
    %80 = vector.extract_strided_slice %33 {offsets = [0, 0], sizes = [8, 16], strides = [1, 1]} : vector<16x16xf32> to vector<8x16xf32>
    %81 = vector.extract_strided_slice %47 {offsets = [0, 0], sizes = [8, 16], strides = [1, 1]} : vector<16x16xf32> to vector<8x16xf32>
    %82 = arith.truncf %79 : vector<8x16xf32> to vector<8x16xbf16>
    %83 = arith.truncf %80 : vector<8x16xf32> to vector<8x16xbf16>
    %cst_68 = arith.constant dense<0.000000e+00> : vector<8x8xf32>
    %84 = tpu.matmul %82, %83, %cst_68 {dimension_numbers = #tpu.dot_dimension_numbers<[1], [1], [0], [0], [0, 0, 1, 0], [], []>} : vector<8x16xbf16>, vector<8x16xbf16>, vector<8x8xf32> -> vector<8x8xf32>
    %85 = vector.broadcast %52 : vector<1x8xf32> to vector<8x8xf32>
    %86 = arith.addf %84, %85 : vector<8x8xf32>
    %cst_69 = arith.constant dense<0xFF800000> : vector<8xf32>
    %87 = vector.multi_reduction <maximumf>, %86, %cst_69 [1] : vector<8x8xf32> to vector<8xf32>
    %88 = vector.shape_cast %87 : vector<8xf32> to vector<8x1xf32>
    %89 = vector.broadcast %88 : vector<8x1xf32> to vector<8x8xf32>
    %90 = arith.subf %86, %89 : vector<8x8xf32>
    %91 = math.exp %90 : vector<8x8xf32>
    %cst_70 = arith.constant dense<0.000000e+00> : vector<8xf32>
    %92 = vector.multi_reduction <add>, %91, %cst_70 [1] : vector<8x8xf32> to vector<8xf32>
    %93 = vector.shape_cast %92 : vector<8xf32> to vector<8x1xf32>
    %94 = vector.broadcast %93 : vector<8x1xf32> to vector<8x8xf32>
    %95 = arith.divf %91, %94 : vector<8x8xf32>
    %96 = arith.truncf %95 : vector<8x8xf32> to vector<8x8xbf16>
    %97 = arith.truncf %81 : vector<8x16xf32> to vector<8x16xbf16>
    %cst_71 = arith.constant dense<0.000000e+00> : vector<8x16xf32>
    %98 = tpu.matmul %96, %97, %cst_71 {dimension_numbers = #tpu.dot_dimension_numbers<[1], [0], [0], [1], [0, 0, 1, 1], [], []>} : vector<8x8xbf16>, vector<8x16xbf16>, vector<8x16xf32> -> vector<8x16xf32>
    %99 = arith.truncf %98 : vector<8x16xf32> to vector<8x16xbf16>
    %c0_72 = arith.constant 0 : index
    %c1_73 = arith.constant 1 : index
    %c0_74 = arith.constant 0 : index
    %c0_75 = arith.constant 0 : index
    %100 = vector.load %arg11[%c0_72, %c1_73, %c0_74, %c0_75] : memref<1x2x16x32xbf16, #tpu.memory_space<vmem>>, vector<1x1x16x32xbf16>
    %101 = vector.shape_cast %100 : vector<1x1x16x32xbf16> to vector<16x32xbf16>
    %cst_76 = arith.constant dense<0.000000e+00> : vector<8x32xf32>
    %102 = tpu.matmul %99, %101, %cst_76 {dimension_numbers = #tpu.dot_dimension_numbers<[1], [0], [0], [1], [0, 0, 1, 1], [], []>} : vector<8x16xbf16>, vector<16x32xbf16>, vector<8x32xf32> -> vector<8x32xf32>
    %103 = arith.addf %78, %102 : vector<8x32xf32>
    %104 = vector.extract_strided_slice %3 {offsets = [1, 0], sizes = [1, 8], strides = [1, 1]} : vector<2x8xf32> to vector<1x8xf32>
    %cst_77 = arith.constant 1.000000e+00 : f32
    %105 = vector.broadcast %cst_77 : f32 to vector<1x8xf32>
    %106 = arith.subf %104, %105 : vector<1x8xf32>
    %cst_78 = arith.constant 1.000000e+09 : f32
    %107 = vector.broadcast %cst_78 : f32 to vector<1x8xf32>
    %108 = arith.mulf %106, %107 : vector<1x8xf32>
    %cst_79 = arith.constant 0.000000e+00 : f32
    %109 = vector.broadcast %cst_79 : f32 to vector<8x32xf32>
    %110 = vector.extract_strided_slice %12 {offsets = [8, 0], sizes = [8, 16], strides = [1, 1]} : vector<16x16xf32> to vector<8x16xf32>
    %111 = vector.extract_strided_slice %26 {offsets = [8, 0], sizes = [8, 16], strides = [1, 1]} : vector<16x16xf32> to vector<8x16xf32>
    %112 = vector.extract_strided_slice %40 {offsets = [8, 0], sizes = [8, 16], strides = [1, 1]} : vector<16x16xf32> to vector<8x16xf32>
    %113 = arith.truncf %110 : vector<8x16xf32> to vector<8x16xbf16>
    %114 = arith.truncf %111 : vector<8x16xf32> to vector<8x16xbf16>
    %cst_80 = arith.constant dense<0.000000e+00> : vector<8x8xf32>
    %115 = tpu.matmul %113, %114, %cst_80 {dimension_numbers = #tpu.dot_dimension_numbers<[1], [1], [0], [0], [0, 0, 1, 0], [], []>} : vector<8x16xbf16>, vector<8x16xbf16>, vector<8x8xf32> -> vector<8x8xf32>
    %116 = vector.broadcast %108 : vector<1x8xf32> to vector<8x8xf32>
    %117 = arith.addf %115, %116 : vector<8x8xf32>
    %cst_81 = arith.constant dense<0xFF800000> : vector<8xf32>
    %118 = vector.multi_reduction <maximumf>, %117, %cst_81 [1] : vector<8x8xf32> to vector<8xf32>
    %119 = vector.shape_cast %118 : vector<8xf32> to vector<8x1xf32>
    %120 = vector.broadcast %119 : vector<8x1xf32> to vector<8x8xf32>
    %121 = arith.subf %117, %120 : vector<8x8xf32>
    %122 = math.exp %121 : vector<8x8xf32>
    %cst_82 = arith.constant dense<0.000000e+00> : vector<8xf32>
    %123 = vector.multi_reduction <add>, %122, %cst_82 [1] : vector<8x8xf32> to vector<8xf32>
    %124 = vector.shape_cast %123 : vector<8xf32> to vector<8x1xf32>
    %125 = vector.broadcast %124 : vector<8x1xf32> to vector<8x8xf32>
    %126 = arith.divf %122, %125 : vector<8x8xf32>
    %127 = arith.truncf %126 : vector<8x8xf32> to vector<8x8xbf16>
    %128 = arith.truncf %112 : vector<8x16xf32> to vector<8x16xbf16>
    %cst_83 = arith.constant dense<0.000000e+00> : vector<8x16xf32>
    %129 = tpu.matmul %127, %128, %cst_83 {dimension_numbers = #tpu.dot_dimension_numbers<[1], [0], [0], [1], [0, 0, 1, 1], [], []>} : vector<8x8xbf16>, vector<8x16xbf16>, vector<8x16xf32> -> vector<8x16xf32>
    %130 = arith.truncf %129 : vector<8x16xf32> to vector<8x16xbf16>
    %c0_84 = arith.constant 0 : index
    %c0_85 = arith.constant 0 : index
    %c0_86 = arith.constant 0 : index
    %c0_87 = arith.constant 0 : index
    %131 = vector.load %arg11[%c0_84, %c0_85, %c0_86, %c0_87] : memref<1x2x16x32xbf16, #tpu.memory_space<vmem>>, vector<1x1x16x32xbf16>
    %132 = vector.shape_cast %131 : vector<1x1x16x32xbf16> to vector<16x32xbf16>
    %cst_88 = arith.constant dense<0.000000e+00> : vector<8x32xf32>
    %133 = tpu.matmul %130, %132, %cst_88 {dimension_numbers = #tpu.dot_dimension_numbers<[1], [0], [0], [1], [0, 0, 1, 1], [], []>} : vector<8x16xbf16>, vector<16x32xbf16>, vector<8x32xf32> -> vector<8x32xf32>
    %134 = arith.addf %109, %133 : vector<8x32xf32>
    %135 = vector.extract_strided_slice %19 {offsets = [8, 0], sizes = [8, 16], strides = [1, 1]} : vector<16x16xf32> to vector<8x16xf32>
    %136 = vector.extract_strided_slice %33 {offsets = [8, 0], sizes = [8, 16], strides = [1, 1]} : vector<16x16xf32> to vector<8x16xf32>
    %137 = vector.extract_strided_slice %47 {offsets = [8, 0], sizes = [8, 16], strides = [1, 1]} : vector<16x16xf32> to vector<8x16xf32>
    %138 = arith.truncf %135 : vector<8x16xf32> to vector<8x16xbf16>
    %139 = arith.truncf %136 : vector<8x16xf32> to vector<8x16xbf16>
    %cst_89 = arith.constant dense<0.000000e+00> : vector<8x8xf32>
    %140 = tpu.matmul %138, %139, %cst_89 {dimension_numbers = #tpu.dot_dimension_numbers<[1], [1], [0], [0], [0, 0, 1, 0], [], []>} : vector<8x16xbf16>, vector<8x16xbf16>, vector<8x8xf32> -> vector<8x8xf32>
    %141 = vector.broadcast %108 : vector<1x8xf32> to vector<8x8xf32>
    %142 = arith.addf %140, %141 : vector<8x8xf32>
    %cst_90 = arith.constant dense<0xFF800000> : vector<8xf32>
    %143 = vector.multi_reduction <maximumf>, %142, %cst_90 [1] : vector<8x8xf32> to vector<8xf32>
    %144 = vector.shape_cast %143 : vector<8xf32> to vector<8x1xf32>
    %145 = vector.broadcast %144 : vector<8x1xf32> to vector<8x8xf32>
    %146 = arith.subf %142, %145 : vector<8x8xf32>
    %147 = math.exp %146 : vector<8x8xf32>
    %cst_91 = arith.constant dense<0.000000e+00> : vector<8xf32>
    %148 = vector.multi_reduction <add>, %147, %cst_91 [1] : vector<8x8xf32> to vector<8xf32>
    %149 = vector.shape_cast %148 : vector<8xf32> to vector<8x1xf32>
    %150 = vector.broadcast %149 : vector<8x1xf32> to vector<8x8xf32>
    %151 = arith.divf %147, %150 : vector<8x8xf32>
    %152 = arith.truncf %151 : vector<8x8xf32> to vector<8x8xbf16>
    %153 = arith.truncf %137 : vector<8x16xf32> to vector<8x16xbf16>
    %cst_92 = arith.constant dense<0.000000e+00> : vector<8x16xf32>
    %154 = tpu.matmul %152, %153, %cst_92 {dimension_numbers = #tpu.dot_dimension_numbers<[1], [0], [0], [1], [0, 0, 1, 1], [], []>} : vector<8x8xbf16>, vector<8x16xbf16>, vector<8x16xf32> -> vector<8x16xf32>
    %155 = arith.truncf %154 : vector<8x16xf32> to vector<8x16xbf16>
    %c0_93 = arith.constant 0 : index
    %c1_94 = arith.constant 1 : index
    %c0_95 = arith.constant 0 : index
    %c0_96 = arith.constant 0 : index
    %156 = vector.load %arg11[%c0_93, %c1_94, %c0_95, %c0_96] : memref<1x2x16x32xbf16, #tpu.memory_space<vmem>>, vector<1x1x16x32xbf16>
    %157 = vector.shape_cast %156 : vector<1x1x16x32xbf16> to vector<16x32xbf16>
    %cst_97 = arith.constant dense<0.000000e+00> : vector<8x32xf32>
    %158 = tpu.matmul %155, %157, %cst_97 {dimension_numbers = #tpu.dot_dimension_numbers<[1], [0], [0], [1], [0, 0, 1, 1], [], []>} : vector<8x16xbf16>, vector<16x32xbf16>, vector<8x32xf32> -> vector<8x32xf32>
    %159 = arith.addf %134, %158 : vector<8x32xf32>
    %160 = tpu.concatenate %103, %159 in 0 : vector<8x32xf32>, vector<8x32xf32> -> vector<16x32xf32>
    %c0_98 = arith.constant 0 : index
    %c0_99 = arith.constant 0 : index
    %c0_100 = arith.constant 0 : index
    %161 = vector.load %arg12[%c0_98, %c0_99, %c0_100] : memref<1x1x32xf32, #tpu.memory_space<vmem>>, vector<1x1x32xf32>
    %162 = vector.shape_cast %161 : vector<1x1x32xf32> to vector<1x32xf32>
    %163 = vector.broadcast %162 : vector<1x32xf32> to vector<16x32xf32>
    %164 = arith.addf %160, %163 : vector<16x32xf32>
    %165 = arith.addf %4, %164 : vector<16x32xf32>
    %c0_101 = arith.constant 0 : index
    %c0_102 = arith.constant 0 : index
    %c0_103 = arith.constant 0 : index
    %166 = vector.load %arg13[%c0_101, %c0_102, %c0_103] : memref<1x1x32xf32, #tpu.memory_space<vmem>>, vector<1x1x32xf32>
    %167 = vector.shape_cast %166 : vector<1x1x32xf32> to vector<1x32xf32>
    %c0_104 = arith.constant 0 : index
    %c0_105 = arith.constant 0 : index
    %c0_106 = arith.constant 0 : index
    %168 = vector.load %arg14[%c0_104, %c0_105, %c0_106] : memref<1x1x32xf32, #tpu.memory_space<vmem>>, vector<1x1x32xf32>
    %169 = vector.shape_cast %168 : vector<1x1x32xf32> to vector<1x32xf32>
    %cst_107 = arith.constant dense<0.000000e+00> : vector<16xf32>
    %170 = vector.multi_reduction <add>, %165, %cst_107 [1] : vector<16x32xf32> to vector<16xf32>
    %171 = vector.shape_cast %170 : vector<16xf32> to vector<16x1xf32>
    %cst_108 = arith.constant 3.200000e+01 : f32
    %172 = vector.broadcast %cst_108 : f32 to vector<16x1xf32>
    %173 = arith.divf %171, %172 : vector<16x1xf32>
    %174 = vector.broadcast %173 : vector<16x1xf32> to vector<16x32xf32>
    %175 = arith.subf %165, %174 : vector<16x32xf32>
    %176 = vector.broadcast %173 : vector<16x1xf32> to vector<16x32xf32>
    %177 = arith.subf %165, %176 : vector<16x32xf32>
    %178 = arith.mulf %175, %177 : vector<16x32xf32>
    %cst_109 = arith.constant dense<0.000000e+00> : vector<16xf32>
    %179 = vector.multi_reduction <add>, %178, %cst_109 [1] : vector<16x32xf32> to vector<16xf32>
    %180 = vector.shape_cast %179 : vector<16xf32> to vector<16x1xf32>
    %cst_110 = arith.constant 3.200000e+01 : f32
    %181 = vector.broadcast %cst_110 : f32 to vector<16x1xf32>
    %182 = arith.divf %180, %181 : vector<16x1xf32>
    %183 = vector.broadcast %173 : vector<16x1xf32> to vector<16x32xf32>
    %184 = arith.subf %165, %183 : vector<16x32xf32>
    %cst_111 = arith.constant 9.99999974E-6 : f32
    %185 = vector.broadcast %cst_111 : f32 to vector<16x1xf32>
    %186 = arith.addf %182, %185 : vector<16x1xf32>
    %187 = math.rsqrt %186 : vector<16x1xf32>
    %188 = vector.broadcast %187 : vector<16x1xf32> to vector<16x32xf32>
    %189 = arith.mulf %184, %188 : vector<16x32xf32>
    %190 = vector.broadcast %167 : vector<1x32xf32> to vector<16x32xf32>
    %191 = arith.mulf %189, %190 : vector<16x32xf32>
    %192 = vector.broadcast %169 : vector<1x32xf32> to vector<16x32xf32>
    %193 = arith.addf %191, %192 : vector<16x32xf32>
    %194 = arith.truncf %193 : vector<16x32xf32> to vector<16x32xbf16>
    %c0_112 = arith.constant 0 : index
    %c0_113 = arith.constant 0 : index
    %c0_114 = arith.constant 0 : index
    %195 = vector.load %arg15[%c0_112, %c0_113, %c0_114] : memref<1x32x64xbf16, #tpu.memory_space<vmem>>, vector<1x32x64xbf16>
    %196 = vector.shape_cast %195 : vector<1x32x64xbf16> to vector<32x64xbf16>
    %cst_115 = arith.constant dense<0.000000e+00> : vector<16x64xf32>
    %197 = tpu.matmul %194, %196, %cst_115 {dimension_numbers = #tpu.dot_dimension_numbers<[1], [0], [0], [1], [0, 0, 1, 1], [], []>} : vector<16x32xbf16>, vector<32x64xbf16>, vector<16x64xf32> -> vector<16x64xf32>
    %c0_116 = arith.constant 0 : index
    %c0_117 = arith.constant 0 : index
    %c0_118 = arith.constant 0 : index
    %198 = vector.load %arg16[%c0_116, %c0_117, %c0_118] : memref<1x1x64xf32, #tpu.memory_space<vmem>>, vector<1x1x64xf32>
    %199 = vector.shape_cast %198 : vector<1x1x64xf32> to vector<1x64xf32>
    %200 = vector.broadcast %199 : vector<1x64xf32> to vector<16x64xf32>
    %201 = arith.addf %197, %200 : vector<16x64xf32>
    %cst_119 = arith.constant 5.000000e-01 : f32
    %202 = vector.broadcast %cst_119 : f32 to vector<16x64xf32>
    %203 = arith.mulf %202, %201 : vector<16x64xf32>
    %cst_120 = arith.constant 4.471500e-02 : f32
    %204 = vector.broadcast %cst_120 : f32 to vector<16x64xf32>
    %205 = arith.mulf %204, %201 : vector<16x64xf32>
    %206 = arith.mulf %205, %201 : vector<16x64xf32>
    %207 = arith.mulf %206, %201 : vector<16x64xf32>
    %208 = arith.addf %201, %207 : vector<16x64xf32>
    %cst_121 = arith.constant 0.797884583 : f32
    %209 = vector.broadcast %cst_121 : f32 to vector<16x64xf32>
    %210 = arith.mulf %209, %208 : vector<16x64xf32>
    %211 = math.tanh %210 : vector<16x64xf32>
    %cst_122 = arith.constant 1.000000e+00 : f32
    %212 = vector.broadcast %cst_122 : f32 to vector<16x64xf32>
    %213 = arith.addf %212, %211 : vector<16x64xf32>
    %214 = arith.mulf %203, %213 : vector<16x64xf32>
    %215 = arith.truncf %214 : vector<16x64xf32> to vector<16x64xbf16>
    %c0_123 = arith.constant 0 : index
    %c0_124 = arith.constant 0 : index
    %c0_125 = arith.constant 0 : index
    %216 = vector.load %arg17[%c0_123, %c0_124, %c0_125] : memref<1x64x32xbf16, #tpu.memory_space<vmem>>, vector<1x64x32xbf16>
    %217 = vector.shape_cast %216 : vector<1x64x32xbf16> to vector<64x32xbf16>
    %cst_126 = arith.constant dense<0.000000e+00> : vector<16x32xf32>
    %218 = tpu.matmul %215, %217, %cst_126 {dimension_numbers = #tpu.dot_dimension_numbers<[1], [0], [0], [1], [0, 0, 1, 1], [], []>} : vector<16x64xbf16>, vector<64x32xbf16>, vector<16x32xf32> -> vector<16x32xf32>
    %c0_127 = arith.constant 0 : index
    %c0_128 = arith.constant 0 : index
    %c0_129 = arith.constant 0 : index
    %219 = vector.load %arg18[%c0_127, %c0_128, %c0_129] : memref<1x1x32xf32, #tpu.memory_space<vmem>>, vector<1x1x32xf32>
    %220 = vector.shape_cast %219 : vector<1x1x32xf32> to vector<1x32xf32>
    %221 = vector.broadcast %220 : vector<1x32xf32> to vector<16x32xf32>
    %222 = arith.addf %218, %221 : vector<16x32xf32>
    %223 = arith.addf %193, %222 : vector<16x32xf32>
    %c0_130 = arith.constant 0 : index
    %c0_131 = arith.constant 0 : index
    %c0_132 = arith.constant 0 : index
    %224 = vector.load %arg19[%c0_130, %c0_131, %c0_132] : memref<1x1x32xf32, #tpu.memory_space<vmem>>, vector<1x1x32xf32>
    %225 = vector.shape_cast %224 : vector<1x1x32xf32> to vector<1x32xf32>
    %c0_133 = arith.constant 0 : index
    %c0_134 = arith.constant 0 : index
    %c0_135 = arith.constant 0 : index
    %226 = vector.load %arg20[%c0_133, %c0_134, %c0_135] : memref<1x1x32xf32, #tpu.memory_space<vmem>>, vector<1x1x32xf32>
    %227 = vector.shape_cast %226 : vector<1x1x32xf32> to vector<1x32xf32>
    %cst_136 = arith.constant dense<0.000000e+00> : vector<16xf32>
    %228 = vector.multi_reduction <add>, %223, %cst_136 [1] : vector<16x32xf32> to vector<16xf32>
    %229 = vector.shape_cast %228 : vector<16xf32> to vector<16x1xf32>
    %cst_137 = arith.constant 3.200000e+01 : f32
    %230 = vector.broadcast %cst_137 : f32 to vector<16x1xf32>
    %231 = arith.divf %229, %230 : vector<16x1xf32>
    %232 = vector.broadcast %231 : vector<16x1xf32> to vector<16x32xf32>
    %233 = arith.subf %223, %232 : vector<16x32xf32>
    %234 = vector.broadcast %231 : vector<16x1xf32> to vector<16x32xf32>
    %235 = arith.subf %223, %234 : vector<16x32xf32>
    %236 = arith.mulf %233, %235 : vector<16x32xf32>
    %cst_138 = arith.constant dense<0.000000e+00> : vector<16xf32>
    %237 = vector.multi_reduction <add>, %236, %cst_138 [1] : vector<16x32xf32> to vector<16xf32>
    %238 = vector.shape_cast %237 : vector<16xf32> to vector<16x1xf32>
    %cst_139 = arith.constant 3.200000e+01 : f32
    %239 = vector.broadcast %cst_139 : f32 to vector<16x1xf32>
    %240 = arith.divf %238, %239 : vector<16x1xf32>
    %241 = vector.broadcast %231 : vector<16x1xf32> to vector<16x32xf32>
    %242 = arith.subf %223, %241 : vector<16x32xf32>
    %cst_140 = arith.constant 9.99999974E-6 : f32
    %243 = vector.broadcast %cst_140 : f32 to vector<16x1xf32>
    %244 = arith.addf %240, %243 : vector<16x1xf32>
    %245 = math.rsqrt %244 : vector<16x1xf32>
    %246 = vector.broadcast %245 : vector<16x1xf32> to vector<16x32xf32>
    %247 = arith.mulf %242, %246 : vector<16x32xf32>
    %248 = vector.broadcast %225 : vector<1x32xf32> to vector<16x32xf32>
    %249 = arith.mulf %247, %248 : vector<16x32xf32>
    %250 = vector.broadcast %227 : vector<1x32xf32> to vector<16x32xf32>
    %251 = arith.addf %249, %250 : vector<16x32xf32>
    %c0_141 = arith.constant 0 : index
    %c0_142 = arith.constant 0 : index
    %252 = vector.load %arg22[%c0_141, %c0_142] : memref<16x32xf32, #tpu.memory_space<vmem>>, vector<16x32xf32>
    tpu.vector_store %arg22[%c0_141, %c0_142], %251 {strides = array<i32>} : memref<16x32xf32, #tpu.memory_space<vmem>>, vector<16x32xf32>,
    %c1_i32 = arith.constant 1 : i32
    %253 = arith.cmpi eq, %arg0, %c1_i32 : i32
    %254 = arith.extui %253 : i1 to i32
    %c0_i32_143 = arith.constant 0 : i32
    %255 = arith.cmpi ne, %254, %c0_i32_143 : i32
    scf.if %255 {
      %c0_144 = arith.constant 0 : index
      %c0_145 = arith.constant 0 : index
      %256 = vector.load %arg22[%c0_144, %c0_145] : memref<16x32xf32, #tpu.memory_space<vmem>>, vector<16x32xf32>
      %257 = vector.extract_strided_slice %3 {offsets = [0, 0], sizes = [1, 8], strides = [1, 1]} : vector<2x8xf32> to vector<1x8xf32>
      %258 = vector.extract_strided_slice %256 {offsets = [0, 0], sizes = [8, 32], strides = [1, 1]} : vector<16x32xf32> to vector<8x32xf32>
      %cst_146 = arith.constant dense<0.000000e+00> : vector<1x32xf32>
      %259 = tpu.matmul %257, %258, %cst_146 {dimension_numbers = #tpu.dot_dimension_numbers<[1], [0], [0], [1], [0, 0, 1, 1], [], []>} : vector<1x8xf32>, vector<8x32xf32>, vector<1x32xf32> -> vector<1x32xf32>
      %cst_147 = arith.constant dense<0.000000e+00> : vector<1xf32>
      %260 = vector.multi_reduction <add>, %257, %cst_147 [1] : vector<1x8xf32> to vector<1xf32>
      %261 = vector.shape_cast %260 : vector<1xf32> to vector<1x1xf32>
      %cst_148 = arith.constant 9.99999971E-10 : f32
      %262 = vector.broadcast %cst_148 : f32 to vector<1x1xf32>
      %263 = arith.maximumf %261, %262 : vector<1x1xf32>
      %264 = tpu.reciprocal %263 {approx = true} : vector<1x1xf32> -> vector<1x1xf32>
      %265 = vector.broadcast %264 : vector<1x1xf32> to vector<1x32xf32>
      %266 = arith.mulf %259, %265 : vector<1x32xf32>
      %267 = vector.extract_strided_slice %3 {offsets = [1, 0], sizes = [1, 8], strides = [1, 1]} : vector<2x8xf32> to vector<1x8xf32>
      %268 = vector.extract_strided_slice %256 {offsets = [8, 0], sizes = [8, 32], strides = [1, 1]} : vector<16x32xf32> to vector<8x32xf32>
      %cst_149 = arith.constant dense<0.000000e+00> : vector<1x32xf32>
      %269 = tpu.matmul %267, %268, %cst_149 {dimension_numbers = #tpu.dot_dimension_numbers<[1], [0], [0], [1], [0, 0, 1, 1], [], []>} : vector<1x8xf32>, vector<8x32xf32>, vector<1x32xf32> -> vector<1x32xf32>
      %cst_150 = arith.constant dense<0.000000e+00> : vector<1xf32>
      %270 = vector.multi_reduction <add>, %267, %cst_150 [1] : vector<1x8xf32> to vector<1xf32>
      %271 = vector.shape_cast %270 : vector<1xf32> to vector<1x1xf32>
      %cst_151 = arith.constant 9.99999971E-10 : f32
      %272 = vector.broadcast %cst_151 : f32 to vector<1x1xf32>
      %273 = arith.maximumf %271, %272 : vector<1x1xf32>
      %274 = tpu.reciprocal %273 {approx = true} : vector<1x1xf32> -> vector<1x1xf32>
      %275 = vector.broadcast %274 : vector<1x1xf32> to vector<1x32xf32>
      %276 = arith.mulf %269, %275 : vector<1x32xf32>
      %277 = tpu.concatenate %266, %276 in 0 : vector<1x32xf32>, vector<1x32xf32> -> vector<2x32xf32>
      %c0_152 = arith.constant 0 : index
      %c0_153 = arith.constant 0 : index
      %278 = vector.load %arg21[%c0_152, %c0_153] : memref<2x32xf32, #tpu.memory_space<vmem>>, vector<2x32xf32>
      tpu.vector_store %arg21[%c0_152, %c0_153], %277 {strides = array<i32>} : memref<2x32xf32, #tpu.memory_space<vmem>>, vector<2x32xf32>,
    } else {
    }
    return
  }
  func.func @transform_0(%arg0: i32) -> (i32, i32) {
    %c0_i32 = arith.constant 0 : i32
    %c0_i32_0 = arith.constant 0 : i32
    %c0_i32_1 = arith.constant 0 : i32
    return %c0_i32, %c0_i32_0 : i32, i32
  }
  func.func @transform_1(%arg0: i32) -> (i32, i32) {
    %c0_i32 = arith.constant 0 : i32
    %c0_i32_0 = arith.constant 0 : i32
    %c0_i32_1 = arith.constant 0 : i32
    return %c0_i32, %c0_i32_0 : i32, i32
  }
  func.func @transform_2(%arg0: i32) -> (i32, i32) {
    %c0_i32 = arith.constant 0 : i32
    %c0_i32_0 = arith.constant 0 : i32
    %c0_i32_1 = arith.constant 0 : i32
    return %c0_i32, %c0_i32_0 : i32, i32
  }
  func.func @transform_3(%arg0: i32) -> (i32, i32) {
    %c0_i32 = arith.constant 0 : i32
    %c0_i32_0 = arith.constant 0 : i32
    %c0_i32_1 = arith.constant 0 : i32
    return %c0_i32, %c0_i32_0 : i32, i32
  }
  func.func @transform_4(%arg0: i32) -> (i32, i32, i32, i32) {
    %c0_i32 = arith.constant 0 : i32
    %c0_i32_0 = arith.constant 0 : i32
    %c0_i32_1 = arith.constant 0 : i32
    %c0_i32_2 = arith.constant 0 : i32
    return %arg0, %c0_i32, %c0_i32_0, %c0_i32_1 : i32, i32, i32, i32
  }
  func.func @transform_5(%arg0: i32) -> (i32, i32, i32, i32) {
    %c0_i32 = arith.constant 0 : i32
    %c0_i32_0 = arith.constant 0 : i32
    %c0_i32_1 = arith.constant 0 : i32
    %c0_i32_2 = arith.constant 0 : i32
    return %arg0, %c0_i32, %c0_i32_0, %c0_i32_1 : i32, i32, i32, i32
  }
  func.func @transform_6(%arg0: i32) -> (i32, i32, i32, i32) {
    %c0_i32 = arith.constant 0 : i32
    %c0_i32_0 = arith.constant 0 : i32
    %c0_i32_1 = arith.constant 0 : i32
    %c0_i32_2 = arith.constant 0 : i32
    return %arg0, %c0_i32, %c0_i32_0, %c0_i32_1 : i32, i32, i32, i32
  }
  func.func @transform_7(%arg0: i32) -> (i32, i32, i32, i32) {
    %c0_i32 = arith.constant 0 : i32
    %c0_i32_0 = arith.constant 0 : i32
    %c0_i32_1 = arith.constant 0 : i32
    %c0_i32_2 = arith.constant 0 : i32
    return %arg0, %c0_i32, %c0_i32_0, %c0_i32_1 : i32, i32, i32, i32
  }
  func.func @transform_8(%arg0: i32) -> (i32, i32, i32, i32) {
    %c0_i32 = arith.constant 0 : i32
    %c0_i32_0 = arith.constant 0 : i32
    %c0_i32_1 = arith.constant 0 : i32
    %c0_i32_2 = arith.constant 0 : i32
    return %arg0, %c0_i32, %c0_i32_0, %c0_i32_1 : i32, i32, i32, i32
  }
  func.func @transform_9(%arg0: i32) -> (i32, i32, i32, i32) {
    %c0_i32 = arith.constant 0 : i32
    %c0_i32_0 = arith.constant 0 : i32
    %c0_i32_1 = arith.constant 0 : i32
    %c0_i32_2 = arith.constant 0 : i32
    return %arg0, %c0_i32, %c0_i32_0, %c0_i32_1 : i32, i32, i32, i32
  }
  func.func @transform_10(%arg0: i32) -> (i32, i32, i32, i32) {
    %c0_i32 = arith.constant 0 : i32
    %c0_i32_0 = arith.constant 0 : i32
    %c0_i32_1 = arith.constant 0 : i32
    %c0_i32_2 = arith.constant 0 : i32
    return %arg0, %c0_i32, %c0_i32_0, %c0_i32_1 : i32, i32, i32, i32
  }
  func.func @transform_11(%arg0: i32) -> (i32, i32, i32) {
    %c0_i32 = arith.constant 0 : i32
    %c0_i32_0 = arith.constant 0 : i32
    %c0_i32_1 = arith.constant 0 : i32
    return %arg0, %c0_i32, %c0_i32_0 : i32, i32, i32
  }
  func.func @transform_12(%arg0: i32) -> (i32, i32, i32) {
    %c0_i32 = arith.constant 0 : i32
    %c0_i32_0 = arith.constant 0 : i32
    %c0_i32_1 = arith.constant 0 : i32
    return %arg0, %c0_i32, %c0_i32_0 : i32, i32, i32
  }
  func.func @transform_13(%arg0: i32) -> (i32, i32, i32) {
    %c0_i32 = arith.constant 0 : i32
    %c0_i32_0 = arith.constant 0 : i32
    %c0_i32_1 = arith.constant 0 : i32
    return %arg0, %c0_i32, %c0_i32_0 : i32, i32, i32
  }
  func.func @transform_14(%arg0: i32) -> (i32, i32, i32) {
    %c0_i32 = arith.constant 0 : i32
    %c0_i32_0 = arith.constant 0 : i32
    %c0_i32_1 = arith.constant 0 : i32
    return %arg0, %c0_i32, %c0_i32_0 : i32, i32, i32
  }
  func.func @transform_15(%arg0: i32) -> (i32, i32, i32) {
    %c0_i32 = arith.constant 0 : i32
    %c0_i32_0 = arith.constant 0 : i32
    %c0_i32_1 = arith.constant 0 : i32
    return %arg0, %c0_i32, %c0_i32_0 : i32, i32, i32
  }
  func.func @transform_16(%arg0: i32) -> (i32, i32, i32) {
    %c0_i32 = arith.constant 0 : i32
    %c0_i32_0 = arith.constant 0 : i32
    %c0_i32_1 = arith.constant 0 : i32
    return %arg0, %c0_i32, %c0_i32_0 : i32, i32, i32
  }
  func.func @transform_17(%arg0: i32) -> (i32, i32, i32) {
    %c0_i32 = arith.constant 0 : i32
    %c0_i32_0 = arith.constant 0 : i32
    %c0_i32_1 = arith.constant 0 : i32
    return %arg0, %c0_i32, %c0_i32_0 : i32, i32, i32
  }
  func.func @transform_18(%arg0: i32) -> (i32, i32, i32) {
    %c0_i32 = arith.constant 0 : i32
    %c0_i32_0 = arith.constant 0 : i32
    %c0_i32_1 = arith.constant 0 : i32
    return %arg0, %c0_i32, %c0_i32_0 : i32, i32, i32
  }
  func.func @transform_19(%arg0: i32) -> (i32, i32, i32) {
    %c0_i32 = arith.constant 0 : i32
    %c0_i32_0 = arith.constant 0 : i32
    %c0_i32_1 = arith.constant 0 : i32
    return %arg0, %c0_i32, %c0_i32_0 : i32, i32, i32
  }
  func.func @transform_20(%arg0: i32) -> (i32, i32) {
    %c0_i32 = arith.constant 0 : i32
    %c0_i32_0 = arith.constant 0 : i32
    %c0_i32_1 = arith.constant 0 : i32
    return %c0_i32, %c0_i32_0 : i32, i32
  }
}

</mosaic_0001>

<llo_original>
// kernel: text_encoder_forward.1
$region0: #{text_encoder_forward.1}
  #allocation0 [shape = 'u32[]', space=smem, size = 0x4, offset = 0x4, fixed_abs, tag = 'smem constant byte address 0x4 - core index']
  #allocation1 [shape = 'u32[144,128]{1,0:T(1,128)}', space=vmem, size = 0x12000, scoped, tag = 'internal scratch']
  #allocation2 [shape = 'f32[16,32]{1,0:T(8,128)}', space=vmem, size = 0x2000, scoped, tag = 'scratch operand']
  %s0 = inlined_call_operand.vmem [shape: f32[16,32], index: 0, kind: input, shape index: {}]
  %s1 = inlined_call_operand.vmem [shape: f32[2,8], index: 1, kind: input, shape index: {}]
  %s2 = inlined_call_operand.vmem [shape: f32[1,32], index: 2, kind: input, shape index: {}]
  %s3 = inlined_call_operand.vmem [shape: f32[1,32], index: 3, kind: input, shape index: {}]
  %s4 = inlined_call_operand.vmem [shape: bf16[2,2,32,16], index: 4, kind: input, shape index: {}]
  %s5 = inlined_call_operand.vmem [shape: f32[2,2,1,16], index: 5, kind: input, shape index: {}]
  %s6 = inlined_call_operand.vmem [shape: bf16[2,2,32,16], index: 6, kind: input, shape index: {}]
  %s7 = inlined_call_operand.vmem [shape: f32[2,2,1,16], index: 7, kind: input, shape index: {}]
  %s8 = inlined_call_operand.vmem [shape: bf16[2,2,32,16], index: 8, kind: input, shape index: {}]
  %s9 = inlined_call_operand.vmem [shape: f32[2,2,1,16], index: 9, kind: input, shape index: {}]
  %s10 = inlined_call_operand.vmem [shape: bf16[2,2,16,32], index: 10, kind: input, shape index: {}]
  %s11 = inlined_call_operand.vmem [shape: f32[2,1,32], index: 11, kind: input, shape index: {}]
  %s12 = inlined_call_operand.vmem [shape: f32[2,1,32], index: 12, kind: input, shape index: {}]
  %s13 = inlined_call_operand.vmem [shape: f32[2,1,32], index: 13, kind: input, shape index: {}]
  %s14 = inlined_call_operand.vmem [shape: bf16[2,32,64], index: 14, kind: input, shape index: {}]
  %s15 = inlined_call_operand.vmem [shape: f32[2,1,64], index: 15, kind: input, shape index: {}]
  %s16 = inlined_call_operand.vmem [shape: bf16[2,64,32], index: 16, kind: input, shape index: {}]
  %s17 = inlined_call_operand.vmem [shape: f32[2,1,32], index: 17, kind: input, shape index: {}]
  %s18 = inlined_call_operand.vmem [shape: f32[2,1,32], index: 18, kind: input, shape index: {}]
  %s19 = inlined_call_operand.vmem [shape: f32[2,1,32], index: 19, kind: input, shape index: {}]
  %s20 = inlined_call_operand.hbm [shape: f32[2,32], index: 20, kind: output, shape index: {}]
  %s21 = sld [smem:[#allocation0]]
  $region121: #{text_encoder_forward.1} parent=0
    _
  %s23 = ssub.s32 1, %s21
  %s24 = scalar_select 0, %s23, %s21
  $region1: #{text_encoder_forward.1} parent=0
    #allocation3 [shape = 'u8[1024]{0}', space=vmem, size = 0x400, scoped, tag = 'output window, operand 0, single buffered']
    #allocation4 [shape = 's32[2]{0}', space=sflag, size = 0x8, scoped, tag = 'scoped memory for text_encoder_forward.1']
    %25 = vsyncpa [#allocation4], 0
    loop: start=0, step=1, limit=4
    $region2: #{text_encoder_forward.1} parent=1 // loop_pre_header
      _
    $region3: #{text_encoder_forward.1} parent=1 // loop_header
      %s27 = sphi 0, %s31
      %p28 = scmp.ge.s32.totalorder %s27, 4
      %s35 = sphi 0, %s35
      %s37 = sphi 0, %s35
      %s38 = sphi 0, %s37
      %s52 = sphi 0, %s38
      %s56 = sphi 0, %s56
      %s58 = sphi 0, %s56
      %s59 = sphi 0, %s58
      %s73 = sphi 0, %s59
      %s77 = sphi 0, %s77
      %s79 = sphi 0, %s77
      %s80 = sphi 0, %s79
      %s94 = sphi 0, %s80
      %s98 = sphi 0, %s98
      %s100 = sphi 0, %s98
      %s101 = sphi 0, %s100
      %s115 = sphi 0, %s101
      %s121 = sphi 0, %s123
      %s124 = sphi 0, %s121
      %s125 = sphi 0, %s124
      %s141 = sphi 0, %s125
      %s147 = sphi 0, %s149
      %s150 = sphi 0, %s147
      %s151 = sphi 0, %s150
      %s167 = sphi 0, %s151
      %s173 = sphi 0, %s175
      %s176 = sphi 0, %s173
      %s177 = sphi 0, %s176
      %s193 = sphi 0, %s177
      %s199 = sphi 0, %s201
      %s202 = sphi 0, %s199
      %s203 = sphi 0, %s202
      %s219 = sphi 0, %s203
      %s225 = sphi 0, %s227
      %s228 = sphi 0, %s225
      %s229 = sphi 0, %s228
      %s245 = sphi 0, %s229
      %s251 = sphi 0, %s253
      %s254 = sphi 0, %s251
      %s255 = sphi 0, %s254
      %s271 = sphi 0, %s255
      %s277 = sphi 0, %s279
      %s280 = sphi 0, %s277
      %s281 = sphi 0, %s280
      %s297 = sphi 0, %s281
      %s303 = sphi 0, %s305
      %s306 = sphi 0, %s303
      %s307 = sphi 0, %s306
      %s323 = sphi 0, %s307
      %s329 = sphi 0, %s331
      %s332 = sphi 0, %s329
      %s333 = sphi 0, %s332
      %s349 = sphi 0, %s333
      %s355 = sphi 0, %s357
      %s358 = sphi 0, %s355
      %s359 = sphi 0, %s358
      %s375 = sphi 0, %s359
      %s381 = sphi 0, %s383
      %s384 = sphi 0, %s381
      %s385 = sphi 0, %s384
      %s401 = sphi 0, %s385
      %s407 = sphi 0, %s409
      %s410 = sphi 0, %s407
      %s411 = sphi 0, %s410
      %s427 = sphi 0, %s411
      %s433 = sphi 0, %s435
      %s436 = sphi 0, %s433
      %s437 = sphi 0, %s436
      %s453 = sphi 0, %s437
      %s459 = sphi 0, %s461
      %s462 = sphi 0, %s459
      %s463 = sphi 0, %s462
      %s479 = sphi 0, %s463
      %s485 = sphi 0, %s487
      %s488 = sphi 0, %s485
      %s489 = sphi 0, %s488
      %s505 = sphi 0, %s489
      %s511 = sphi 0, %s513
      %s514 = sphi 0, %s511
      %s515 = sphi 0, %s514
      %s531 = sphi 0, %s515
      %s535 = sphi 0, %s535
      %s537 = sphi 0, %s535
      %s538 = sphi 0, %s537
      %s552 = sphi 0, %s538
    $region4: #{text_encoder_forward.1} parent=1 // loop_header_branch
      %30 = sbr.rel (%p28) target = $region8
    $region5: #{text_encoder_forward.1} parent=1 // loop_body
      %s32 = ssub.s32 %s27, 1
      %s33 = ssub.s32 %s27, 2
      %s34 = sadd.s32 %s27, 1
      %s36 = sadd.s32 %s35, 1
      %p39 = scmp.eq.s32.totalorder %s27, 1
      %p40 = scmp.ne.s32.totalorder %s35, %s37
      %p41 = scmp.eq.s32.totalorder %s27, 0
      %p42 = por %p40, %p41
      %p43 = scmp.ne.s32.totalorder %s35, %s37
      %p44 = scmp.eq.s32.totalorder %s32, 1
      %p45 = por %p43, %p44
      %p46 = scmp.ne.s32.totalorder %s37, %s38
      %p47 = scmp.eq.s32.totalorder %s32, 0
      %p48 = por %p46, %p47
      %p49 = scmp.ne.s32.totalorder %s37, %s38
      %p50 = scmp.eq.s32.totalorder %s33, 1
      %p51 = por %p49, %p50
      %p53 = scmp.ne.s32.totalorder %s38, %s52
      %p54 = scmp.eq.s32.totalorder %s33, 0
      %p55 = por %p53, %p54
      %s57 = sadd.s32 %s56, 1
      %p60 = scmp.eq.s32.totalorder %s27, 1
      %p61 = scmp.ne.s32.totalorder %s56, %s58
      %p62 = scmp.eq.s32.totalorder %s27, 0
      %p63 = por %p61, %p62
      %p64 = scmp.ne.s32.totalorder %s56, %s58
      %p65 = scmp.eq.s32.totalorder %s32, 1
      %p66 = por %p64, %p65
      %p67 = scmp.ne.s32.totalorder %s58, %s59
      %p68 = scmp.eq.s32.totalorder %s32, 0
      %p69 = por %p67, %p68
      %p70 = scmp.ne.s32.totalorder %s58, %s59
      %p71 = scmp.eq.s32.totalorder %s33, 1
      %p72 = por %p70, %p71
      %p74 = scmp.ne.s32.totalorder %s59, %s73
      %p75 = scmp.eq.s32.totalorder %s33, 0
      %p76 = por %p74, %p75
      %s78 = sadd.s32 %s77, 1
      %p81 = scmp.eq.s32.totalorder %s27, 1
      %p82 = scmp.ne.s32.totalorder %s77, %s79
      %p83 = scmp.eq.s32.totalorder %s27, 0
      %p84 = por %p82, %p83
      %p85 = scmp.ne.s32.totalorder %s77, %s79
      %p86 = scmp.eq.s32.totalorder %s32, 1
      %p87 = por %p85, %p86
      %p88 = scmp.ne.s32.totalorder %s79, %s80
      %p89 = scmp.eq.s32.totalorder %s32, 0
      %p90 = por %p88, %p89
      %p91 = scmp.ne.s32.totalorder %s79, %s80
      %p92 = scmp.eq.s32.totalorder %s33, 1
      %p93 = por %p91, %p92
      %p95 = scmp.ne.s32.totalorder %s80, %s94
      %p96 = scmp.eq.s32.totalorder %s33, 0
      %p97 = por %p95, %p96
      %s99 = sadd.s32 %s98, 1
      %p102 = scmp.eq.s32.totalorder %s27, 1
      %p103 = scmp.ne.s32.totalorder %s98, %s100
      %p104 = scmp.eq.s32.totalorder %s27, 0
      %p105 = por %p103, %p104
      %p106 = scmp.ne.s32.totalorder %s98, %s100
      %p107 = scmp.eq.s32.totalorder %s32, 1
      %p108 = por %p106, %p107
      %p109 = scmp.ne.s32.totalorder %s100, %s101
      %p110 = scmp.eq.s32.totalorder %s32, 0
      %p111 = por %p109, %p110
      %p112 = scmp.ne.s32.totalorder %s100, %s101
      %p113 = scmp.eq.s32.totalorder %s33, 1
      %p114 = por %p112, %p113
      %p116 = scmp.ne.s32.totalorder %s101, %s115
      %p117 = scmp.eq.s32.totalorder %s33, 0
      %p118 = por %p116, %p117
      %s119 = ssub.s32 %s27, %s34
      %p120 = scmp.eq.s32.totalorder %s119, 0
      %s122 = sadd.s32 %s121, 1
      %s123 = scalar_select %p120, %s121, %s122
      %p126 = pneg %p120
      %p127 = scmp.eq.s32.totalorder %s27, 1
      %p128 = por %p126, %p127
      %p129 = scmp.ne.s32.totalorder %s121, %s124
      %p130 = scmp.eq.s32.totalorder %s27, 0
      %p131 = por %p129, %p130
      %p132 = scmp.ne.s32.totalorder %s121, %s124
      %p133 = scmp.eq.s32.totalorder %s32, 1
      %p134 = por %p132, %p133
      %p135 = scmp.ne.s32.totalorder %s124, %s125
      %p136 = scmp.eq.s32.totalorder %s32, 0
      %p137 = por %p135, %p136
      %p138 = scmp.ne.s32.totalorder %s124, %s125
      %p139 = scmp.eq.s32.totalorder %s33, 1
      %p140 = por %p138, %p139
      %p142 = scmp.ne.s32.totalorder %s125, %s141
      %p143 = scmp.eq.s32.totalorder %s33, 0
      %p144 = por %p142, %p143
      %s145 = ssub.s32 %s27, %s34
      %p146 = scmp.eq.s32.totalorder %s145, 0
      %s148 = sadd.s32 %s147, 1
      %s149 = scalar_select %p146, %s147, %s148
      %p152 = pneg %p146
      %p153 = scmp.eq.s32.totalorder %s27, 1
      %p154 = por %p152, %p153
      %p155 = scmp.ne.s32.totalorder %s147, %s150
      %p156 = scmp.eq.s32.totalorder %s27, 0
      %p157 = por %p155, %p156
      %p158 = scmp.ne.s32.totalorder %s147, %s150
      %p159 = scmp.eq.s32.totalorder %s32, 1
      %p160 = por %p158, %p159
      %p161 = scmp.ne.s32.totalorder %s150, %s151
      %p162 = scmp.eq.s32.totalorder %s32, 0
      %p163 = por %p161, %p162
      %p164 = scmp.ne.s32.totalorder %s150, %s151
      %p165 = scmp.eq.s32.totalorder %s33, 1
      %p166 = por %p164, %p165
      %p168 = scmp.ne.s32.totalorder %s151, %s167
      %p169 = scmp.eq.s32.totalorder %s33, 0
      %p170 = por %p168, %p169
      %s171 = ssub.s32 %s27, %s34
      %p172 = scmp.eq.s32.totalorder %s171, 0
      %s174 = sadd.s32 %s173, 1
      %s175 = scalar_select %p172, %s173, %s174
      %p178 = pneg %p172
      %p179 = scmp.eq.s32.totalorder %s27, 1
      %p180 = por %p178, %p179
      %p181 = scmp.ne.s32.totalorder %s173, %s176
      %p182 = scmp.eq.s32.totalorder %s27, 0
      %p183 = por %p181, %p182
      %p184 = scmp.ne.s32.totalorder %s173, %s176
      %p185 = scmp.eq.s32.totalorder %s32, 1
      %p186 = por %p184, %p185
      %p187 = scmp.ne.s32.totalorder %s176, %s177
      %p188 = scmp.eq.s32.totalorder %s32, 0
      %p189 = por %p187, %p188
      %p190 = scmp.ne.s32.totalorder %s176, %s177
      %p191 = scmp.eq.s32.totalorder %s33, 1
      %p192 = por %p190, %p191
      %p194 = scmp.ne.s32.totalorder %s177, %s193
      %p195 = scmp.eq.s32.totalorder %s33, 0
      %p196 = por %p194, %p195
      %s197 = ssub.s32 %s27, %s34
      %p198 = scmp.eq.s32.totalorder %s197, 0
      %s200 = sadd.s32 %s199, 1
      %s201 = scalar_select %p198, %s199, %s200
      %p204 = pneg %p198
      %p205 = scmp.eq.s32.totalorder %s27, 1
      %p206 = por %p204, %p205
      %p207 = scmp.ne.s32.totalorder %s199, %s202
      %p208 = scmp.eq.s32.totalorder %s27, 0
      %p209 = por %p207, %p208
      %p210 = scmp.ne.s32.totalorder %s199, %s202
      %p211 = scmp.eq.s32.totalorder %s32, 1
      %p212 = por %p210, %p211
      %p213 = scmp.ne.s32.totalorder %s202, %s203
      %p214 = scmp.eq.s32.totalorder %s32, 0
      %p215 = por %p213, %p214
      %p216 = scmp.ne.s32.totalorder %s202, %s203
      %p217 = scmp.eq.s32.totalorder %s33, 1
      %p218 = por %p216, %p217
      %p220 = scmp.ne.s32.totalorder %s203, %s219
      %p221 = scmp.eq.s32.totalorder %s33, 0
      %p222 = por %p220, %p221
      %s223 = ssub.s32 %s27, %s34
      %p224 = scmp.eq.s32.totalorder %s223, 0
      %s226 = sadd.s32 %s225, 1
      %s227 = scalar_select %p224, %s225, %s226
      %p230 = pneg %p224
      %p231 = scmp.eq.s32.totalorder %s27, 1
      %p232 = por %p230, %p231
      %p233 = scmp.ne.s32.totalorder %s225, %s228
      %p234 = scmp.eq.s32.totalorder %s27, 0
      %p235 = por %p233, %p234
      %p236 = scmp.ne.s32.totalorder %s225, %s228
      %p237 = scmp.eq.s32.totalorder %s32, 1
      %p238 = por %p236, %p237
      %p239 = scmp.ne.s32.totalorder %s228, %s229
      %p240 = scmp.eq.s32.totalorder %s32, 0
      %p241 = por %p239, %p240
      %p242 = scmp.ne.s32.totalorder %s228, %s229
      %p243 = scmp.eq.s32.totalorder %s33, 1
      %p244 = por %p242, %p243
      %p246 = scmp.ne.s32.totalorder %s229, %s245
      %p247 = scmp.eq.s32.totalorder %s33, 0
      %p248 = por %p246, %p247
      %s249 = ssub.s32 %s27, %s34
      %p250 = scmp.eq.s32.totalorder %s249, 0
      %s252 = sadd.s32 %s251, 1
      %s253 = scalar_select %p250, %s251, %s252
      %p256 = pneg %p250
      %p257 = scmp.eq.s32.totalorder %s27, 1
      %p258 = por %p256, %p257
      %p259 = scmp.ne.s32.totalorder %s251, %s254
      %p260 = scmp.eq.s32.totalorder %s27, 0
      %p261 = por %p259, %p260
      %p262 = scmp.ne.s32.totalorder %s251, %s254
      %p263 = scmp.eq.s32.totalorder %s32, 1
      %p264 = por %p262, %p263
      %p265 = scmp.ne.s32.totalorder %s254, %s255
      %p266 = scmp.eq.s32.totalorder %s32, 0
      %p267 = por %p265, %p266
      %p268 = scmp.ne.s32.totalorder %s254, %s255
      %p269 = scmp.eq.s32.totalorder %s33, 1
      %p270 = por %p268, %p269
      %p272 = scmp.ne.s32.totalorder %s255, %s271
      %p273 = scmp.eq.s32.totalorder %s33, 0
      %p274 = por %p272, %p273
      %s275 = ssub.s32 %s27, %s34
      %p276 = scmp.eq.s32.totalorder %s275, 0
      %s278 = sadd.s32 %s277, 1
      %s279 = scalar_select %p276, %s277, %s278
      %p282 = pneg %p276
      %p283 = scmp.eq.s32.totalorder %s27, 1
      %p284 = por %p282, %p283
      %p285 = scmp.ne.s32.totalorder %s277, %s280
      %p286 = scmp.eq.s32.totalorder %s27, 0
      %p287 = por %p285, %p286
      %p288 = scmp.ne.s32.totalorder %s277, %s280
      %p289 = scmp.eq.s32.totalorder %s32, 1
      %p290 = por %p288, %p289
      %p291 = scmp.ne.s32.totalorder %s280, %s281
      %p292 = scmp.eq.s32.totalorder %s32, 0
      %p293 = por %p291, %p292
      %p294 = scmp.ne.s32.totalorder %s280, %s281
      %p295 = scmp.eq.s32.totalorder %s33, 1
      %p296 = por %p294, %p295
      %p298 = scmp.ne.s32.totalorder %s281, %s297
      %p299 = scmp.eq.s32.totalorder %s33, 0
      %p300 = por %p298, %p299
      %s301 = ssub.s32 %s27, %s34
      %p302 = scmp.eq.s32.totalorder %s301, 0
      %s304 = sadd.s32 %s303, 1
      %s305 = scalar_select %p302, %s303, %s304
      %p308 = pneg %p302
      %p309 = scmp.eq.s32.totalorder %s27, 1
      %p310 = por %p308, %p309
      %p311 = scmp.ne.s32.totalorder %s303, %s306
      %p312 = scmp.eq.s32.totalorder %s27, 0
      %p313 = por %p311, %p312
      %p314 = scmp.ne.s32.totalorder %s303, %s306
      %p315 = scmp.eq.s32.totalorder %s32, 1
      %p316 = por %p314, %p315
      %p317 = scmp.ne.s32.totalorder %s306, %s307
      %p318 = scmp.eq.s32.totalorder %s32, 0
      %p319 = por %p317, %p318
      %p320 = scmp.ne.s32.totalorder %s306, %s307
      %p321 = scmp.eq.s32.totalorder %s33, 1
      %p322 = por %p320, %p321
      %p324 = scmp.ne.s32.totalorder %s307, %s323
      %p325 = scmp.eq.s32.totalorder %s33, 0
      %p326 = por %p324, %p325
      %s327 = ssub.s32 %s27, %s34
      %p328 = scmp.eq.s32.totalorder %s327, 0
      %s330 = sadd.s32 %s329, 1
      %s331 = scalar_select %p328, %s329, %s330
      %p334 = pneg %p328
      %p335 = scmp.eq.s32.totalorder %s27, 1
      %p336 = por %p334, %p335
      %p337 = scmp.ne.s32.totalorder %s329, %s332
      %p338 = scmp.eq.s32.totalorder %s27, 0
      %p339 = por %p337, %p338
      %p340 = scmp.ne.s32.totalorder %s329, %s332
      %p341 = scmp.eq.s32.totalorder %s32, 1
      %p342 = por %p340, %p341
      %p343 = scmp.ne.s32.totalorder %s332, %s333
      %p344 = scmp.eq.s32.totalorder %s32, 0
      %p345 = por %p343, %p344
      %p346 = scmp.ne.s32.totalorder %s332, %s333
      %p347 = scmp.eq.s32.totalorder %s33, 1
      %p348 = por %p346, %p347
      %p350 = scmp.ne.s32.totalorder %s333, %s349
      %p351 = scmp.eq.s32.totalorder %s33, 0
      %p352 = por %p350, %p351
      %s353 = ssub.s32 %s27, %s34
      %p354 = scmp.eq.s32.totalorder %s353, 0
      %s356 = sadd.s32 %s355, 1
      %s357 = scalar_select %p354, %s355, %s356
      %p360 = pneg %p354
      %p361 = scmp.eq.s32.totalorder %s27, 1
      %p362 = por %p360, %p361
      %p363 = scmp.ne.s32.totalorder %s355, %s358
      %p364 = scmp.eq.s32.totalorder %s27, 0
      %p365 = por %p363, %p364
      %p366 = scmp.ne.s32.totalorder %s355, %s358
      %p367 = scmp.eq.s32.totalorder %s32, 1
      %p368 = por %p366, %p367
      %p369 = scmp.ne.s32.totalorder %s358, %s359
      %p370 = scmp.eq.s32.totalorder %s32, 0
      %p371 = por %p369, %p370
      %p372 = scmp.ne.s32.totalorder %s358, %s359
      %p373 = scmp.eq.s32.totalorder %s33, 1
      %p374 = por %p372, %p373
      %p376 = scmp.ne.s32.totalorder %s359, %s375
      %p377 = scmp.eq.s32.totalorder %s33, 0
      %p378 = por %p376, %p377
      %s379 = ssub.s32 %s27, %s34
      %p380 = scmp.eq.s32.totalorder %s379, 0
      %s382 = sadd.s32 %s381, 1
      %s383 = scalar_select %p380, %s381, %s382
      %p386 = pneg %p380
      %p387 = scmp.eq.s32.totalorder %s27, 1
      %p388 = por %p386, %p387
      %p389 = scmp.ne.s32.totalorder %s381, %s384
      %p390 = scmp.eq.s32.totalorder %s27, 0
      %p391 = por %p389, %p390
      %p392 = scmp.ne.s32.totalorder %s381, %s384
      %p393 = scmp.eq.s32.totalorder %s32, 1
      %p394 = por %p392, %p393
      %p395 = scmp.ne.s32.totalorder %s384, %s385
      %p396 = scmp.eq.s32.totalorder %s32, 0
      %p397 = por %p395, %p396
      %p398 = scmp.ne.s32.totalorder %s384, %s385
      %p399 = scmp.eq.s32.totalorder %s33, 1
      %p400 = por %p398, %p399
      %p402 = scmp.ne.s32.totalorder %s385, %s401
      %p403 = scmp.eq.s32.totalorder %s33, 0
      %p404 = por %p402, %p403
      %s405 = ssub.s32 %s27, %s34
      %p406 = scmp.eq.s32.totalorder %s405, 0
      %s408 = sadd.s32 %s407, 1
      %s409 = scalar_select %p406, %s407, %s408
      %p412 = pneg %p406
      %p413 = scmp.eq.s32.totalorder %s27, 1
      %p414 = por %p412, %p413
      %p415 = scmp.ne.s32.totalorder %s407, %s410
      %p416 = scmp.eq.s32.totalorder %s27, 0
      %p417 = por %p415, %p416
      %p418 = scmp.ne.s32.totalorder %s407, %s410
      %p419 = scmp.eq.s32.totalorder %s32, 1
      %p420 = por %p418, %p419
      %p421 = scmp.ne.s32.totalorder %s410, %s411
      %p422 = scmp.eq.s32.totalorder %s32, 0
      %p423 = por %p421, %p422
      %p424 = scmp.ne.s32.totalorder %s410, %s411
      %p425 = scmp.eq.s32.totalorder %s33, 1
      %p426 = por %p424, %p425
      %p428 = scmp.ne.s32.totalorder %s411, %s427
      %p429 = scmp.eq.s32.totalorder %s33, 0
      %p430 = por %p428, %p429
      %s431 = ssub.s32 %s27, %s34
      %p432 = scmp.eq.s32.totalorder %s431, 0
      %s434 = sadd.s32 %s433, 1
      %s435 = scalar_select %p432, %s433, %s434
      %p438 = pneg %p432
      %p439 = scmp.eq.s32.totalorder %s27, 1
      %p440 = por %p438, %p439
      %p441 = scmp.ne.s32.totalorder %s433, %s436
      %p442 = scmp.eq.s32.totalorder %s27, 0
      %p443 = por %p441, %p442
      %p444 = scmp.ne.s32.totalorder %s433, %s436
      %p445 = scmp.eq.s32.totalorder %s32, 1
      %p446 = por %p444, %p445
      %p447 = scmp.ne.s32.totalorder %s436, %s437
      %p448 = scmp.eq.s32.totalorder %s32, 0
      %p449 = por %p447, %p448
      %p450 = scmp.ne.s32.totalorder %s436, %s437
      %p451 = scmp.eq.s32.totalorder %s33, 1
      %p452 = por %p450, %p451
      %p454 = scmp.ne.s32.totalorder %s437, %s453
      %p455 = scmp.eq.s32.totalorder %s33, 0
      %p456 = por %p454, %p455
      %s457 = ssub.s32 %s27, %s34
      %p458 = scmp.eq.s32.totalorder %s457, 0
      %s460 = sadd.s32 %s459, 1
      %s461 = scalar_select %p458, %s459, %s460
      %p464 = pneg %p458
      %p465 = scmp.eq.s32.totalorder %s27, 1
      %p466 = por %p464, %p465
      %p467 = scmp.ne.s32.totalorder %s459, %s462
      %p468 = scmp.eq.s32.totalorder %s27, 0
      %p469 = por %p467, %p468
      %p470 = scmp.ne.s32.totalorder %s459, %s462
      %p471 = scmp.eq.s32.totalorder %s32, 1
      %p472 = por %p470, %p471
      %p473 = scmp.ne.s32.totalorder %s462, %s463
      %p474 = scmp.eq.s32.totalorder %s32, 0
      %p475 = por %p473, %p474
      %p476 = scmp.ne.s32.totalorder %s462, %s463
      %p477 = scmp.eq.s32.totalorder %s33, 1
      %p478 = por %p476, %p477
      %p480 = scmp.ne.s32.totalorder %s463, %s479
      %p481 = scmp.eq.s32.totalorder %s33, 0
      %p482 = por %p480, %p481
      %s483 = ssub.s32 %s27, %s34
      %p484 = scmp.eq.s32.totalorder %s483, 0
      %s486 = sadd.s32 %s485, 1
      %s487 = scalar_select %p484, %s485, %s486
      %p490 = pneg %p484
      %p491 = scmp.eq.s32.totalorder %s27, 1
      %p492 = por %p490, %p491
      %p493 = scmp.ne.s32.totalorder %s485, %s488
      %p494 = scmp.eq.s32.totalorder %s27, 0
      %p495 = por %p493, %p494
      %p496 = scmp.ne.s32.totalorder %s485, %s488
      %p497 = scmp.eq.s32.totalorder %s32, 1
      %p498 = por %p496, %p497
      %p499 = scmp.ne.s32.totalorder %s488, %s489
      %p500 = scmp.eq.s32.totalorder %s32, 0
      %p501 = por %p499, %p500
      %p502 = scmp.ne.s32.totalorder %s488, %s489
      %p503 = scmp.eq.s32.totalorder %s33, 1
      %p504 = por %p502, %p503
      %p506 = scmp.ne.s32.totalorder %s489, %s505
      %p507 = scmp.eq.s32.totalorder %s33, 0
      %p508 = por %p506, %p507
      %s509 = ssub.s32 %s27, %s34
      %p510 = scmp.eq.s32.totalorder %s509, 0
      %s512 = sadd.s32 %s511, 1
      %s513 = scalar_select %p510, %s511, %s512
      %p516 = pneg %p510
      %p517 = scmp.eq.s32.totalorder %s27, 1
      %p518 = por %p516, %p517
      %p519 = scmp.ne.s32.totalorder %s511, %s514
      %p520 = scmp.eq.s32.totalorder %s27, 0
      %p521 = por %p519, %p520
      %p522 = scmp.ne.s32.totalorder %s511, %s514
      %p523 = scmp.eq.s32.totalorder %s32, 1
      %p524 = por %p522, %p523
      %p525 = scmp.ne.s32.totalorder %s514, %s515
      %p526 = scmp.eq.s32.totalorder %s32, 0
      %p527 = por %p525, %p526
      %p528 = scmp.ne.s32.totalorder %s514, %s515
      %p529 = scmp.eq.s32.totalorder %s33, 1
      %p530 = por %p528, %p529
      %p532 = scmp.ne.s32.totalorder %s515, %s531
      %p533 = scmp.eq.s32.totalorder %s33, 0
      %p534 = por %p532, %p533
      %s536 = sadd.s32 %s535, 1
      %p539 = scmp.eq.s32.totalorder %s27, 1
      %p540 = scmp.ne.s32.totalorder %s535, %s537
      %p541 = scmp.eq.s32.totalorder %s27, 0
      %p542 = por %p540, %p541
      %p543 = scmp.ne.s32.totalorder %s535, %s537
      %p544 = scmp.eq.s32.totalorder %s32, 1
      %p545 = por %p543, %p544
      %p546 = scmp.ne.s32.totalorder %s537, %s538
      %p547 = scmp.eq.s32.totalorder %s32, 0
      %p548 = por %p546, %p547
      %p549 = scmp.ne.s32.totalorder %s537, %s538
      %p550 = scmp.eq.s32.totalorder %s33, 1
      %p551 = por %p549, %p550
      %p553 = scmp.ne.s32.totalorder %s538, %s552
      %p554 = scmp.eq.s32.totalorder %s33, 0
      %p555 = por %p553, %p554
      %p556 = scmp.le.s32.totalorder 1, %s27
      %p557 = scmp.lt.s32.totalorder %s27, 3
      %p558 = pnand %p556, %p557
      %p559 = pneg %p558
      // Predicated region
      $region9: #{text_encoder_forward.1} parent=5 // pred_check
        _
      $region10: #{text_encoder_forward.1} parent=5 // pred_check_branch
        %561 = sbr.rel (%p558) target = $region12
      $region11: #{text_encoder_forward.1} parent=5 // pred_region
        %s562 = ssub.s32 %s27, 1
        // Predicated region
        $region13: #{text_encoder_forward.1} parent=11 // pred_check
          %p563 = pneg %p48
        $region14: #{text_encoder_forward.1} parent=11 // pred_check_branch
          %565 = sbr.rel (%p563) target = $region16
        $region15: #{text_encoder_forward.1} parent=11 // pred_region
          _
        $region16: #{text_encoder_forward.1} parent=11 // pred_fallthru
          _
        // Predicated region
        $region17: #{text_encoder_forward.1} parent=11 // pred_check
          %p566 = pneg %p69
        $region18: #{text_encoder_forward.1} parent=11 // pred_check_branch
          %568 = sbr.rel (%p566) target = $region20
        $region19: #{text_encoder_forward.1} parent=11 // pred_region
          _
        $region20: #{text_encoder_forward.1} parent=11 // pred_fallthru
          _
        // Predicated region
        $region21: #{text_encoder_forward.1} parent=11 // pred_check
          %p569 = pneg %p90
        $region22: #{text_encoder_forward.1} parent=11 // pred_check_branch
          %571 = sbr.rel (%p569) target = $region24
        $region23: #{text_encoder_forward.1} parent=11 // pred_region
          _
        $region24: #{text_encoder_forward.1} parent=11 // pred_fallthru
          _
        // Predicated region
        $region25: #{text_encoder_forward.1} parent=11 // pred_check
          %p572 = pneg %p111
        $region26: #{text_encoder_forward.1} parent=11 // pred_check_branch
          %574 = sbr.rel (%p572) target = $region28
        $region27: #{text_encoder_forward.1} parent=11 // pred_region
          _
        $region28: #{text_encoder_forward.1} parent=11 // pred_fallthru
          _
      $region12: #{text_encoder_forward.1} parent=5 // pred_fallthru
        _
      %p575 = scmp.lt.s32.totalorder %s27, 2
      // Predicated region
      $region29: #{text_encoder_forward.1} parent=5 // pred_check
        %p576 = pneg %p575
      $region30: #{text_encoder_forward.1} parent=5 // pred_check_branch
        %578 = sbr.rel (%p576) target = $region32
      $region31: #{text_encoder_forward.1} parent=5 // pred_region
        // Predicated region
        $region33: #{text_encoder_forward.1} parent=31 // pred_check
          %p579 = pneg %p131
        $region34: #{text_encoder_forward.1} parent=31 // pred_check_branch
          %581 = sbr.rel (%p579) target = $region36
        $region35: #{text_encoder_forward.1} parent=31 // pred_region
          %p582 = scmp.lt.s32.totalorder %s27, 1
          %s583 = scalar_select %p582, %s27, 1
          %s584 = smul.addr %s583, 8
          %s585 = smul.addr %s584, 4
          %s586 = scalar_lea.vmem %s4, %s585
        $region36: #{text_encoder_forward.1} parent=31 // pred_fallthru
          _
        // Predicated region
        $region37: #{text_encoder_forward.1} parent=31 // pred_check
          %p587 = pneg %p157
        $region38: #{text_encoder_forward.1} parent=31 // pred_check_branch
          %589 = sbr.rel (%p587) target = $region40
        $region39: #{text_encoder_forward.1} parent=31 // pred_region
          %p590 = scmp.lt.s32.totalorder %s27, 1
          %s591 = scalar_select %p590, %s27, 1
          %s592 = smul.addr %s591, 2
          %s593 = scalar_lea.vmem %s5, %s592
        $region40: #{text_encoder_forward.1} parent=31 // pred_fallthru
          _
        // Predicated region
        $region41: #{text_encoder_forward.1} parent=31 // pred_check
          %p594 = pneg %p183
        $region42: #{text_encoder_forward.1} parent=31 // pred_check_branch
          %596 = sbr.rel (%p594) target = $region44
        $region43: #{text_encoder_forward.1} parent=31 // pred_region
          %p597 = scmp.lt.s32.totalorder %s27, 1
          %s598 = scalar_select %p597, %s27, 1
          %s599 = smul.addr %s598, 8
          %s600 = smul.addr %s599, 4
          %s601 = scalar_lea.vmem %s6, %s600
        $region44: #{text_encoder_forward.1} parent=31 // pred_fallthru
          _
        // Predicated region
        $region45: #{text_encoder_forward.1} parent=31 // pred_check
          %p602 = pneg %p209
        $region46: #{text_encoder_forward.1} parent=31 // pred_check_branch
          %604 = sbr.rel (%p602) target = $region48
        $region47: #{text_encoder_forward.1} parent=31 // pred_region
          %p605 = scmp.lt.s32.totalorder %s27, 1
          %s606 = scalar_select %p605, %s27, 1
          %s607 = smul.addr %s606, 2
          %s608 = scalar_lea.vmem %s7, %s607
        $region48: #{text_encoder_forward.1} parent=31 // pred_fallthru
          _
        // Predicated region
        $region49: #{text_encoder_forward.1} parent=31 // pred_check
          %p609 = pneg %p235
        $region50: #{text_encoder_forward.1} parent=31 // pred_check_branch
          %611 = sbr.rel (%p609) target = $region52
        $region51: #{text_encoder_forward.1} parent=31 // pred_region
          %p612 = scmp.lt.s32.totalorder %s27, 1
          %s613 = scalar_select %p612, %s27, 1
          %s614 = smul.addr %s613, 8
          %s615 = smul.addr %s614, 4
          %s616 = scalar_lea.vmem %s8, %s615
        $region52: #{text_encoder_forward.1} parent=31 // pred_fallthru
          _
        // Predicated region
        $region53: #{text_encoder_forward.1} parent=31 // pred_check
          %p617 = pneg %p261
        $region54: #{text_encoder_forward.1} parent=31 // pred_check_branch
          %619 = sbr.rel (%p617) target = $region56
        $region55: #{text_encoder_forward.1} parent=31 // pred_region
          %p620 = scmp.lt.s32.totalorder %s27, 1
          %s621 = scalar_select %p620, %s27, 1
          %s622 = smul.addr %s621, 2
          %s623 = scalar_lea.vmem %s9, %s622
        $region56: #{text_encoder_forward.1} parent=31 // pred_fallthru
          _
        // Predicated region
        $region57: #{text_encoder_forward.1} parent=31 // pred_check
          %p624 = pneg %p287
        $region58: #{text_encoder_forward.1} parent=31 // pred_check_branch
          %626 = sbr.rel (%p624) target = $region60
        $region59: #{text_encoder_forward.1} parent=31 // pred_region
          %p627 = scmp.lt.s32.totalorder %s27, 1
          %s628 = scalar_select %p627, %s27, 1
          %s629 = smul.addr %s628, 4
          %s630 = smul.addr %s629, 4
          %s631 = scalar_lea.vmem %s10, %s630
        $region60: #{text_encoder_forward.1} parent=31 // pred_fallthru
          _
        // Predicated region
        $region61: #{text_encoder_forward.1} parent=31 // pred_check
          %p632 = pneg %p313
        $region62: #{text_encoder_forward.1} parent=31 // pred_check_branch
          %634 = sbr.rel (%p632) target = $region64
        $region63: #{text_encoder_forward.1} parent=31 // pred_region
          %p635 = scmp.lt.s32.totalorder %s27, 1
          %s636 = scalar_select %p635, %s27, 1
          %s637 = scalar_lea.vmem %s11, %s636
        $region64: #{text_encoder_forward.1} parent=31 // pred_fallthru
          _
        // Predicated region
        $region65: #{text_encoder_forward.1} parent=31 // pred_check
          %p638 = pneg %p339
        $region66: #{text_encoder_forward.1} parent=31 // pred_check_branch
          %640 = sbr.rel (%p638) target = $region68
        $region67: #{text_encoder_forward.1} parent=31 // pred_region
          %p641 = scmp.lt.s32.totalorder %s27, 1
          %s642 = scalar_select %p641, %s27, 1
          %s643 = scalar_lea.vmem %s12, %s642
        $region68: #{text_encoder_forward.1} parent=31 // pred_fallthru
          _
        // Predicated region
        $region69: #{text_encoder_forward.1} parent=31 // pred_check
          %p644 = pneg %p365
        $region70: #{text_encoder_forward.1} parent=31 // pred_check_branch
          %646 = sbr.rel (%p644) target = $region72
        $region71: #{text_encoder_forward.1} parent=31 // pred_region
          %p647 = scmp.lt.s32.totalorder %s27, 1
          %s648 = scalar_select %p647, %s27, 1
          %s649 = scalar_lea.vmem %s13, %s648
        $region72: #{text_encoder_forward.1} parent=31 // pred_fallthru
          _
        // Predicated region
        $region73: #{text_encoder_forward.1} parent=31 // pred_check
          %p650 = pneg %p391
        $region74: #{text_encoder_forward.1} parent=31 // pred_check_branch
          %652 = sbr.rel (%p650) target = $region76
        $region75: #{text_encoder_forward.1} parent=31 // pred_region
          %p653 = scmp.lt.s32.totalorder %s27, 1
          %s654 = scalar_select %p653, %s27, 1
          %s655 = smul.addr %s654, 4
          %s656 = smul.addr %s655, 4
          %s657 = scalar_lea.vmem %s14, %s656
        $region76: #{text_encoder_forward.1} parent=31 // pred_fallthru
          _
        // Predicated region
        $region77: #{text_encoder_forward.1} parent=31 // pred_check
          %p658 = pneg %p417
        $region78: #{text_encoder_forward.1} parent=31 // pred_check_branch
          %660 = sbr.rel (%p658) target = $region80
        $region79: #{text_encoder_forward.1} parent=31 // pred_region
          %p661 = scmp.lt.s32.totalorder %s27, 1
          %s662 = scalar_select %p661, %s27, 1
          %s663 = scalar_lea.vmem %s15, %s662
        $region80: #{text_encoder_forward.1} parent=31 // pred_fallthru
          _
        // Predicated region
        $region81: #{text_encoder_forward.1} parent=31 // pred_check
          %p664 = pneg %p443
        $region82: #{text_encoder_forward.1} parent=31 // pred_check_branch
          %666 = sbr.rel (%p664) target = $region84
        $region83: #{text_encoder_forward.1} parent=31 // pred_region
          %p667 = scmp.lt.s32.totalorder %s27, 1
          %s668 = scalar_select %p667, %s27, 1
          %s669 = smul.addr %s668, 8
          %s670 = smul.addr %s669, 4
          %s671 = scalar_lea.vmem %s16, %s670
        $region84: #{text_encoder_forward.1} parent=31 // pred_fallthru
          _
        // Predicated region
        $region85: #{text_encoder_forward.1} parent=31 // pred_check
          %p672 = pneg %p469
        $region86: #{text_encoder_forward.1} parent=31 // pred_check_branch
          %674 = sbr.rel (%p672) target = $region88
        $region87: #{text_encoder_forward.1} parent=31 // pred_region
          %p675 = scmp.lt.s32.totalorder %s27, 1
          %s676 = scalar_select %p675, %s27, 1
          %s677 = scalar_lea.vmem %s17, %s676
        $region88: #{text_encoder_forward.1} parent=31 // pred_fallthru
          _
        // Predicated region
        $region89: #{text_encoder_forward.1} parent=31 // pred_check
          %p678 = pneg %p495
        $region90: #{text_encoder_forward.1} parent=31 // pred_check_branch
          %680 = sbr.rel (%p678) target = $region92
        $region91: #{text_encoder_forward.1} parent=31 // pred_region
          %p681 = scmp.lt.s32.totalorder %s27, 1
          %s682 = scalar_select %p681, %s27, 1
          %s683 = scalar_lea.vmem %s18, %s682
        $region92: #{text_encoder_forward.1} parent=31 // pred_fallthru
          _
        // Predicated region
        $region93: #{text_encoder_forward.1} parent=31 // pred_check
          %p684 = pneg %p521
        $region94: #{text_encoder_forward.1} parent=31 // pred_check_branch
          %686 = sbr.rel (%p684) target = $region96
        $region95: #{text_encoder_forward.1} parent=31 // pred_region
          %p687 = scmp.lt.s32.totalorder %s27, 1
          %s688 = scalar_select %p687, %s27, 1
          %s689 = scalar_lea.vmem %s19, %s688
        $region96: #{text_encoder_forward.1} parent=31 // pred_fallthru
          _
      $region32: #{text_encoder_forward.1} parent=5 // pred_fallthru
        _
      %p690 = scmp.le.s32.totalorder 1, %s27
      %p691 = scmp.lt.s32.totalorder %s27, 3
      %p692 = pnand %p690, %p691
      %p693 = pneg %p692
      // Predicated region
      $region97: #{text_encoder_forward.1} parent=5 // pred_check
        _
      $region98: #{text_encoder_forward.1} parent=5 // pred_check_branch
        %695 = sbr.rel (%p692) target = $region100
      $region99: #{text_encoder_forward.1} parent=5 // pred_region
        %s696 = ssub.s32 %s27, 1
        %p697 = pneg %p48
        %p698 = pneg %p45
        %p699 = pneg %p69
        %p700 = pneg %p66
        %p701 = pneg %p90
        %p702 = pneg %p87
        %p703 = pneg %p111
        %p704 = pneg %p108
        %p705 = scmp.lt.s32.totalorder %s32, 1
        %s706 = scalar_select %p705, %s32, 1
        %s707 = smul.addr %s706, 8
        %s708 = smul.addr %s707, 4
        %s709 = scalar_lea.vmem %s4, %s708
        %p710 = pneg %p137
        %p711 = pneg %p134
        %p712 = scmp.lt.s32.totalorder %s32, 1
        %s713 = scalar_select %p712, %s32, 1
        %s714 = smul.addr %s713, 2
        %s715 = scalar_lea.vmem %s5, %s714
        %p716 = pneg %p163
        %p717 = pneg %p160
        %p718 = scmp.lt.s32.totalorder %s32, 1
        %s719 = scalar_select %p718, %s32, 1
        %s720 = smul.addr %s719, 8
        %s721 = smul.addr %s720, 4
        %s722 = scalar_lea.vmem %s6, %s721
        %p723 = pneg %p189
        %p724 = pneg %p186
        %p725 = scmp.lt.s32.totalorder %s32, 1
        %s726 = scalar_select %p725, %s32, 1
        %s727 = smul.addr %s726, 2
        %s728 = scalar_lea.vmem %s7, %s727
        %p729 = pneg %p215
        %p730 = pneg %p212
        %p731 = scmp.lt.s32.totalorder %s32, 1
        %s732 = scalar_select %p731, %s32, 1
        %s733 = smul.addr %s732, 8
        %s734 = smul.addr %s733, 4
        %s735 = scalar_lea.vmem %s8, %s734
        %p736 = pneg %p241
        %p737 = pneg %p238
        %p738 = scmp.lt.s32.totalorder %s32, 1
        %s739 = scalar_select %p738, %s32, 1
        %s740 = smul.addr %s739, 2
        %s741 = scalar_lea.vmem %s9, %s740
        %p742 = pneg %p267
        %p743 = pneg %p264
        %p744 = scmp.lt.s32.totalorder %s32, 1
        %s745 = scalar_select %p744, %s32, 1
        %s746 = smul.addr %s745, 4
        %s747 = smul.addr %s746, 4
        %s748 = scalar_lea.vmem %s10, %s747
        %p749 = pneg %p293
        %p750 = pneg %p290
        %p751 = scmp.lt.s32.totalorder %s32, 1
        %s752 = scalar_select %p751, %s32, 1
        %s753 = scalar_lea.vmem %s11, %s752
        %p754 = pneg %p319
        %p755 = pneg %p316
        %p756 = scmp.lt.s32.totalorder %s32, 1
        %s757 = scalar_select %p756, %s32, 1
        %s758 = scalar_lea.vmem %s12, %s757
        %p759 = pneg %p345
        %p760 = pneg %p342
        %p761 = scmp.lt.s32.totalorder %s32, 1
        %s762 = scalar_select %p761, %s32, 1
        %s763 = scalar_lea.vmem %s13, %s762
        %p764 = pneg %p371
        %p765 = pneg %p368
        %p766 = scmp.lt.s32.totalorder %s32, 1
        %s767 = scalar_select %p766, %s32, 1
        %s768 = smul.addr %s767, 4
        %s769 = smul.addr %s768, 4
        %s770 = scalar_lea.vmem %s14, %s769
        %p771 = pneg %p397
        %p772 = pneg %p394
        %p773 = scmp.lt.s32.totalorder %s32, 1
        %s774 = scalar_select %p773, %s32, 1
        %s775 = scalar_lea.vmem %s15, %s774
        %p776 = pneg %p423
        %p777 = pneg %p420
        %p778 = scmp.lt.s32.totalorder %s32, 1
        %s779 = scalar_select %p778, %s32, 1
        %s780 = smul.addr %s779, 8
        %s781 = smul.addr %s780, 4
        %s782 = scalar_lea.vmem %s16, %s781
        %p783 = pneg %p449
        %p784 = pneg %p446
        %p785 = scmp.lt.s32.totalorder %s32, 1
        %s786 = scalar_select %p785, %s32, 1
        %s787 = scalar_lea.vmem %s17, %s786
        %p788 = pneg %p475
        %p789 = pneg %p472
        %p790 = scmp.lt.s32.totalorder %s32, 1
        %s791 = scalar_select %p790, %s32, 1
        %s792 = scalar_lea.vmem %s18, %s791
        %p793 = pneg %p501
        %p794 = pneg %p498
        %p795 = scmp.lt.s32.totalorder %s32, 1
        %s796 = scalar_select %p795, %s32, 1
        %s797 = scalar_lea.vmem %s19, %s796
        %p798 = pneg %p527
        %p799 = pneg %p524
        %p800 = pneg %p548
        %p801 = pneg %p545
        %p802 = scmp.lt.s32.totalorder %s32, 1
        %s803 = scalar_select %p802, %s32, 1
        %s804 = smul.addr %s803, 8
        %s805 = smul.addr %s804, 4
        %s806 = scalar_lea.vmem %s4, %s805
        %p807 = scmp.lt.s32.totalorder %s32, 1
        %s808 = scalar_select %p807, %s32, 1
        %s809 = smul.addr %s808, 2
        %s810 = scalar_lea.vmem %s5, %s809
        %p811 = scmp.lt.s32.totalorder %s32, 1
        %s812 = scalar_select %p811, %s32, 1
        %s813 = smul.addr %s812, 8
        %s814 = smul.addr %s813, 4
        %s815 = scalar_lea.vmem %s6, %s814
        %p816 = scmp.lt.s32.totalorder %s32, 1
        %s817 = scalar_select %p816, %s32, 1
        %s818 = smul.addr %s817, 2
        %s819 = scalar_lea.vmem %s7, %s818
        %p820 = scmp.lt.s32.totalorder %s32, 1
        %s821 = scalar_select %p820, %s32, 1
        %s822 = smul.addr %s821, 8
        %s823 = smul.addr %s822, 4
        %s824 = scalar_lea.vmem %s8, %s823
        %p825 = scmp.lt.s32.totalorder %s32, 1
        %s826 = scalar_select %p825, %s32, 1
        %s827 = smul.addr %s826, 2
        %s828 = scalar_lea.vmem %s9, %s827
        %p829 = scmp.lt.s32.totalorder %s32, 1
        %s830 = scalar_select %p829, %s32, 1
        %s831 = smul.addr %s830, 4
        %s832 = smul.addr %s831, 4
        %s833 = scalar_lea.vmem %s10, %s832
        %p834 = scmp.lt.s32.totalorder %s32, 1
        %s835 = scalar_select %p834, %s32, 1
        %s836 = scalar_lea.vmem %s11, %s835
        %p837 = scmp.lt.s32.totalorder %s32, 1
        %s838 = scalar_select %p837, %s32, 1
        %s839 = scalar_lea.vmem %s12, %s838
        %p840 = scmp.lt.s32.totalorder %s32, 1
        %s841 = scalar_select %p840, %s32, 1
        %s842 = scalar_lea.vmem %s13, %s841
        %p843 = scmp.lt.s32.totalorder %s32, 1
        %s844 = scalar_select %p843, %s32, 1
        %s845 = smul.addr %s844, 4
        %s846 = smul.addr %s845, 4
        %s847 = scalar_lea.vmem %s14, %s846
        %p848 = scmp.lt.s32.totalorder %s32, 1
        %s849 = scalar_select %p848, %s32, 1
        %s850 = scalar_lea.vmem %s15, %s849
        %p851 = scmp.lt.s32.totalorder %s32, 1
        %s852 = scalar_select %p851, %s32, 1
        %s853 = smul.addr %s852, 8
        %s854 = smul.addr %s853, 4
        %s855 = scalar_lea.vmem %s16, %s854
        %p856 = scmp.lt.s32.totalorder %s32, 1
        %s857 = scalar_select %p856, %s32, 1
        %s858 = scalar_lea.vmem %s17, %s857
        %p859 = scmp.lt.s32.totalorder %s32, 1
        %s860 = scalar_select %p859, %s32, 1
        %s861 = scalar_lea.vmem %s18, %s860
        %p862 = scmp.lt.s32.totalorder %s32, 1
        %s863 = scalar_select %p862, %s32, 1
        %s864 = scalar_lea.vmem %s19, %s863
        %p866 = scmp.eq.s32.totalorder %s32, 0
        // Predicated region
        $region101: #{text_encoder_forward.1} parent=99 // pred_check
          %p867 = pneg %p866
        $region102: #{text_encoder_forward.1} parent=99 // pred_check_branch
          %869 = sbr.rel (%p867) target = $region104
        $region103: #{text_encoder_forward.1} parent=99 // pred_region
          %v870 = vld [vmem:[%s0] sm:$0xff]
          %v871 = vld [vmem:[%s0 + $0x8] sm:$0xff]
          %v872 = vld [vmem:[%s2] sm:$0x1]
          %v873 = vld [vmem:[%s3] sm:$0x1]
          %vm874 = vcmask 261120
          %v875 = vsel %vm874, %v870, 0.0
          %876 = vadd.xlane.f32.xlu0 %v875
          %v877 = vpop.xlane.xlu0 %876
          %v878 = vsel %vm874, %v871, 0.0
          %879 = vadd.xlane.f32.xlu0 %v878
          %v880 = vpop.xlane.xlu0 %879
          %v881 = vrcp.pop 32.0
          %v882 = vmul.f32 %v877, %v881
          %v883 = vmul.f32 %v880, %v881
          %v884 = vsub.f32 %v870, %v882
          %v885 = vsub.f32 %v871, %v883
          %v886 = vmul.f32 %v884, %v884
          %v887 = vmul.f32 %v885, %v885
          %v888 = vsel %vm874, %v886, 0.0
          %889 = vadd.xlane.f32.xlu0 %v888
          %v890 = vpop.xlane.xlu0 %889
          %v891 = vsel %vm874, %v887, 0.0
          %892 = vadd.xlane.f32.xlu0 %v891
          %v893 = vpop.xlane.xlu0 %892
          %v894 = vmul.f32 %v890, %v881
          %v895 = vmul.f32 %v893, %v881
          %v896 = vadd.f32 %v894, 1e-05
          %v897 = vadd.f32 %v895, 1e-05
          %v898 = vrsqrt.pop %v896
          %v899 = vrsqrt.pop %v897
          %v900 = vmul.f32 %v884, %v898
          %v901 = vmul.f32 %v885, %v899
          %v903 = vlaneseq
          %v904 = vshrl.u32 %v903, 7
          %v905 = vsub.s32 0, %v904
          %v906 = vrot.slane %v872, %v905
          %v908 = vmul.f32 %v900, %v906
          %v909 = vmul.f32 %v901, %v906
          %v911 = vlaneseq
          %v912 = vshrl.u32 %v911, 7
          %v913 = vsub.s32 0, %v912
          %v914 = vrot.slane %v873, %v913
          %v916 = vadd.f32 %v908, %v914
          %v917 = vadd.f32 %v909, %v914
          %918 = vst.msk [vmem:[#allocation2] sm:$0xff] %vm874, %v916
          %919 = vst.msk [vmem:[#allocation2 + $0x8] sm:$0xff] %vm874, %v917
        $region104: #{text_encoder_forward.1} parent=99 // pred_fallthru
          _
        %v920 = vld [vmem:[%s1] sm:$0x3]
        %v921 = vld [vmem:[#allocation2] sm:$0xff]
        %v922 = vld [vmem:[#allocation2 + $0x8] sm:$0xff]
        %v923 = vpack.c.bf16 %v922, %v921
        %v924 = vld [vmem:[%s806] sm:$0xf]
        %v925 = vld [vmem:[%s806 + $0x4] sm:$0xf]
        %v926 = vld [vmem:[%s806 + $0x8] sm:$0xf]
        %v927 = vld [vmem:[%s806 + $0xc] sm:$0xf]
        %v928 = vld [vmem:[%s810] sm:$0x1]
        %v930 = vlaneseq
        %v931 = vshrl.u32 %v930, 7
        %v932 = vsub.s32 0, %v931
        %v933 = vrot.slane %v928, %v932
        %v939 = vunpack.c.l.b16 %v924
        %v940 = vunpack.c.l.b16 %v925
        %v941 = vunpack.c.l.b16 %v926
        %v942 = vunpack.c.l.b16 %v927
        %v943 = vpack.c.b16 %v940, %v939
        %v944 = vpack.c.b16 %v942, %v941
        %vm947 = vcmask 261120
        %v949 = vsel %vm947, %v923, 0
        %951 = vmatprep.subr.bf16.mxu0 0
        %952 = vmatpush1.bf16.msra.mxu0 0
        %953 = vmatprep.subr.bf16.mxu0 0
        %954 = vmatpush1.bf16.msra.mxu0 0
        %955 = vmatprep.subr.bf16.mxu0 0
        %956 = vmatpush1.bf16.msra.mxu0 0
        %957 = vmatprep.subr.bf16.mxu0 0
        %958 = vmatpush1.bf16.msra.mxu0 0
        %959 = vmatprep.subr.bf16.mxu0 0
        %960 = vmatpush1.bf16.msra.mxu0 0
        %961 = vmatprep.subr.bf16.mxu0 0
        %962 = vmatpush1.bf16.msra.mxu0 0
        %963 = vmatprep.subr.bf16.mxu0 0
        %964 = vmatpush1.bf16.msra.mxu0 %v944
        %965 = vmatprep.subr.bf16.mxu0 0
        %966 = vmatpush1.bf16.msra.mxu0 %v943
        %967 = vmatprep.subr.bf16.mxu0 0
        %968 = vmatpush2.bf16.msra.mxu0 0
        %969 = vmatprep.subr.bf16.mxu0 0
        %970 = vmatpush2.bf16.msra.mxu0 0
        %971 = vmatprep.subr.bf16.mxu0 0
        %972 = vmatpush2.bf16.msra.mxu0 0
        %973 = vmatprep.subr.bf16.mxu0 0
        %974 = vmatpush2.bf16.msra.mxu0 0
        %975 = vmatprep.subr.bf16.mxu0 0
        %976 = vmatpush2.bf16.msra.mxu0 0
        %977 = vmatprep.subr.bf16.mxu0 0
        %978 = vmatpush2.bf16.msra.mxu0 0
        %979 = vmatprep.subr.bf16.mxu0 0
        %980 = vmatpush2.bf16.msra.mxu0 0
        %981 = vmatprep.subr.bf16.mxu0 0
        %982 = vmatpush2.bf16.msra.mxu0 0
        %983 = vmatprep.mubr.bf16.mxu0 0
        %984 = vmatmul.mubr.bf16.gmra.mxu0 %v949
        %v985 = vpop.f32.mrf.mxu0
        %v986 = vadd.f32 %v933, %v985
        %v987 = vpop.f32.mrf.mxu0
        %v988 = vpop.f32.mrf.mxu0
        %v989 = vadd.f32 %v933, %v988
        %v990 = vpop.f32.mrf.mxu0
        %991 = vdwg.mxu0
        %s992 = scalar_lea.vmem %s806, 16
        %v993 = vld [vmem:[%s992] sm:$0xf]
        %v994 = vld [vmem:[%s992 + $0x4] sm:$0xf]
        %v995 = vld [vmem:[%s992 + $0x8] sm:$0xf]
        %v996 = vld [vmem:[%s992 + $0xc] sm:$0xf]
        %s997 = scalar_lea.vmem %s810, 1
        %v998 = vld [vmem:[%s997] sm:$0x1]
        %v1000 = vlaneseq
        %v1001 = vshrl.u32 %v1000, 7
        %v1002 = vsub.s32 0, %v1001
        %v1003 = vrot.slane %v998, %v1002
        %v1009 = vunpack.c.l.b16 %v993
        %v1010 = vunpack.c.l.b16 %v994
        %v1011 = vunpack.c.l.b16 %v995
        %v1012 = vunpack.c.l.b16 %v996
        %v1013 = vpack.c.b16 %v1010, %v1009
        %v1014 = vpack.c.b16 %v1012, %v1011
        %1017 = vmatprep.subr.bf16.mxu0 0
        %1018 = vmatpush1.bf16.msra.mxu0 0
        %1019 = vmatprep.subr.bf16.mxu0 0
        %1020 = vmatpush1.bf16.msra.mxu0 0
        %1021 = vmatprep.subr.bf16.mxu0 0
        %1022 = vmatpush1.bf16.msra.mxu0 0
        %1023 = vmatprep.subr.bf16.mxu0 0
        %1024 = vmatpush1.bf16.msra.mxu0 0
        %1025 = vmatprep.subr.bf16.mxu0 0
        %1026 = vmatpush1.bf16.msra.mxu0 0
        %1027 = vmatprep.subr.bf16.mxu0 0
        %1028 = vmatpush1.bf16.msra.mxu0 0
        %1029 = vmatprep.subr.bf16.mxu0 0
        %1030 = vmatpush1.bf16.msra.mxu0 %v1014
        %1031 = vmatprep.subr.bf16.mxu0 0
        %1032 = vmatpush1.bf16.msra.mxu0 %v1013
        %1033 = vmatprep.subr.bf16.mxu0 0
        %1034 = vmatpush2.bf16.msra.mxu0 0
        %1035 = vmatprep.subr.bf16.mxu0 0
        %1036 = vmatpush2.bf16.msra.mxu0 0
        %1037 = vmatprep.subr.bf16.mxu0 0
        %1038 = vmatpush2.bf16.msra.mxu0 0
        %1039 = vmatprep.subr.bf16.mxu0 0
        %1040 = vmatpush2.bf16.msra.mxu0 0
        %1041 = vmatprep.subr.bf16.mxu0 0
        %1042 = vmatpush2.bf16.msra.mxu0 0
        %1043 = vmatprep.subr.bf16.mxu0 0
        %1044 = vmatpush2.bf16.msra.mxu0 0
        %1045 = vmatprep.subr.bf16.mxu0 0
        %1046 = vmatpush2.bf16.msra.mxu0 0
        %1047 = vmatprep.subr.bf16.mxu0 0
        %1048 = vmatpush2.bf16.msra.mxu0 0
        %1049 = vmatprep.mubr.bf16.mxu0 0
        %1050 = vmatmul.mubr.bf16.gmra.mxu0 %v949
        %v1051 = vpop.f32.mrf.mxu0
        %v1052 = vadd.f32 %v1003, %v1051
        %v1053 = vpop.f32.mrf.mxu0
        %v1054 = vpop.f32.mrf.mxu0
        %v1055 = vadd.f32 %v1003, %v1054
        %v1056 = vpop.f32.mrf.mxu0
        %1057 = vdwg.mxu0
        %v1058 = vld [vmem:[%s815] sm:$0xf]
        %v1059 = vld [vmem:[%s815 + $0x4] sm:$0xf]
        %v1060 = vld [vmem:[%s815 + $0x8] sm:$0xf]
        %v1061 = vld [vmem:[%s815 + $0xc] sm:$0xf]
        %v1062 = vld [vmem:[%s819] sm:$0x1]
        %v1064 = vlaneseq
        %v1065 = vshrl.u32 %v1064, 7
        %v1066 = vsub.s32 0, %v1065
        %v1067 = vrot.slane %v1062, %v1066
        %v1073 = vunpack.c.l.b16 %v1058
        %v1074 = vunpack.c.l.b16 %v1059
        %v1075 = vunpack.c.l.b16 %v1060
        %v1076 = vunpack.c.l.b16 %v1061
        %v1077 = vpack.c.b16 %v1074, %v1073
        %v1078 = vpack.c.b16 %v1076, %v1075
        %1081 = vmatprep.subr.bf16.mxu0 0
        %1082 = vmatpush1.bf16.msra.mxu0 0
        %1083 = vmatprep.subr.bf16.mxu0 0
        %1084 = vmatpush1.bf16.msra.mxu0 0
        %1085 = vmatprep.subr.bf16.mxu0 0
        %1086 = vmatpush1.bf16.msra.mxu0 0
        %1087 = vmatprep.subr.bf16.mxu0 0
        %1088 = vmatpush1.bf16.msra.mxu0 0
        %1089 = vmatprep.subr.bf16.mxu0 0
        %1090 = vmatpush1.bf16.msra.mxu0 0
        %1091 = vmatprep.subr.bf16.mxu0 0
        %1092 = vmatpush1.bf16.msra.mxu0 0
        %1093 = vmatprep.subr.bf16.mxu0 0
        %1094 = vmatpush1.bf16.msra.mxu0 %v1078
        %1095 = vmatprep.subr.bf16.mxu0 0
        %1096 = vmatpush1.bf16.msra.mxu0 %v1077
        %1097 = vmatprep.subr.bf16.mxu0 0
        %1098 = vmatpush2.bf16.msra.mxu0 0
        %1099 = vmatprep.subr.bf16.mxu0 0
        %1100 = vmatpush2.bf16.msra.mxu0 0
        %1101 = vmatprep.subr.bf16.mxu0 0
        %1102 = vmatpush2.bf16.msra.mxu0 0
        %1103 = vmatprep.subr.bf16.mxu0 0
        %1104 = vmatpush2.bf16.msra.mxu0 0
        %1105 = vmatprep.subr.bf16.mxu0 0
        %1106 = vmatpush2.bf16.msra.mxu0 0
        %1107 = vmatprep.subr.bf16.mxu0 0
        %1108 = vmatpush2.bf16.msra.mxu0 0
        %1109 = vmatprep.subr.bf16.mxu0 0
        %1110 = vmatpush2.bf16.msra.mxu0 0
        %1111 = vmatprep.subr.bf16.mxu0 0
        %1112 = vmatpush2.bf16.msra.mxu0 0
        %1113 = vmatprep.mubr.bf16.mxu0 0
        %1114 = vmatmul.mubr.bf16.gmra.mxu0 %v949
        %v1115 = vpop.f32.mrf.mxu0
        %v1116 = vadd.f32 %v1067, %v1115
        %v1117 = vpop.f32.mrf.mxu0
        %v1118 = vpop.f32.mrf.mxu0
        %v1119 = vadd.f32 %v1067, %v1118
        %v1120 = vpop.f32.mrf.mxu0
        %1121 = vdwg.mxu0
        %s1122 = scalar_lea.vmem %s815, 16
        %v1123 = vld [vmem:[%s1122] sm:$0xf]
        %v1124 = vld [vmem:[%s1122 + $0x4] sm:$0xf]
        %v1125 = vld [vmem:[%s1122 + $0x8] sm:$0xf]
        %v1126 = vld [vmem:[%s1122 + $0xc] sm:$0xf]
        %s1127 = scalar_lea.vmem %s819, 1
        %v1128 = vld [vmem:[%s1127] sm:$0x1]
        %v1130 = vlaneseq
        %v1131 = vshrl.u32 %v1130, 7
        %v1132 = vsub.s32 0, %v1131
        %v1133 = vrot.slane %v1128, %v1132
        %v1139 = vunpack.c.l.b16 %v1123
        %v1140 = vunpack.c.l.b16 %v1124
        %v1141 = vunpack.c.l.b16 %v1125
        %v1142 = vunpack.c.l.b16 %v1126
        %v1143 = vpack.c.b16 %v1140, %v1139
        %v1144 = vpack.c.b16 %v1142, %v1141
        %1147 = vmatprep.subr.bf16.mxu0 0
        %1148 = vmatpush1.bf16.msra.mxu0 0
        %1149 = vmatprep.subr.bf16.mxu0 0
        %1150 = vmatpush1.bf16.msra.mxu0 0
        %1151 = vmatprep.subr.bf16.mxu0 0
        %1152 = vmatpush1.bf16.msra.mxu0 0
        %1153 = vmatprep.subr.bf16.mxu0 0
        %1154 = vmatpush1.bf16.msra.mxu0 0
        %1155 = vmatprep.subr.bf16.mxu0 0
        %1156 = vmatpush1.bf16.msra.mxu0 0
        %1157 = vmatprep.subr.bf16.mxu0 0
        %1158 = vmatpush1.bf16.msra.mxu0 0
        %1159 = vmatprep.subr.bf16.mxu0 0
        %1160 = vmatpush1.bf16.msra.mxu0 %v1144
        %1161 = vmatprep.subr.bf16.mxu0 0
        %1162 = vmatpush1.bf16.msra.mxu0 %v1143
        %1163 = vmatprep.subr.bf16.mxu0 0
        %1164 = vmatpush2.bf16.msra.mxu0 0
        %1165 = vmatprep.subr.bf16.mxu0 0
        %1166 = vmatpush2.bf16.msra.mxu0 0
        %1167 = vmatprep.subr.bf16.mxu0 0
        %1168 = vmatpush2.bf16.msra.mxu0 0
        %1169 = vmatprep.subr.bf16.mxu0 0
        %1170 = vmatpush2.bf16.msra.mxu0 0
        %1171 = vmatprep.subr.bf16.mxu0 0
        %1172 = vmatpush2.bf16.msra.mxu0 0
        %1173 = vmatprep.subr.bf16.mxu0 0
        %1174 = vmatpush2.bf16.msra.mxu0 0
        %1175 = vmatprep.subr.bf16.mxu0 0
        %1176 = vmatpush2.bf16.msra.mxu0 0
        %1177 = vmatprep.subr.bf16.mxu0 0
        %1178 = vmatpush2.bf16.msra.mxu0 0
        %1179 = vmatprep.mubr.bf16.mxu0 0
        %1180 = vmatmul.mubr.bf16.gmra.mxu0 %v949
        %v1181 = vpop.f32.mrf.mxu0
        %v1182 = vadd.f32 %v1133, %v1181
        %v1183 = vpop.f32.mrf.mxu0
        %v1184 = vpop.f32.mrf.mxu0
        %v1185 = vadd.f32 %v1133, %v1184
        %v1186 = vpop.f32.mrf.mxu0
        %1187 = vdwg.mxu0
        %v1188 = vld [vmem:[%s824] sm:$0xf]
        %v1189 = vld [vmem:[%s824 + $0x4] sm:$0xf]
        %v1190 = vld [vmem:[%s824 + $0x8] sm:$0xf]
        %v1191 = vld [vmem:[%s824 + $0xc] sm:$0xf]
        %v1192 = vld [vmem:[%s828] sm:$0x1]
        %v1194 = vlaneseq
        %v1195 = vshrl.u32 %v1194, 7
        %v1196 = vsub.s32 0, %v1195
        %v1197 = vrot.slane %v1192, %v1196
        %v1203 = vunpack.c.l.b16 %v1188
        %v1204 = vunpack.c.l.b16 %v1189
        %v1205 = vunpack.c.l.b16 %v1190
        %v1206 = vunpack.c.l.b16 %v1191
        %v1207 = vpack.c.b16 %v1204, %v1203
        %v1208 = vpack.c.b16 %v1206, %v1205
        %1211 = vmatprep.subr.bf16.mxu0 0
        %1212 = vmatpush1.bf16.msra.mxu0 0
        %1213 = vmatprep.subr.bf16.mxu0 0
        %1214 = vmatpush1.bf16.msra.mxu0 0
        %1215 = vmatprep.subr.bf16.mxu0 0
        %1216 = vmatpush1.bf16.msra.mxu0 0
        %1217 = vmatprep.subr.bf16.mxu0 0
        %1218 = vmatpush1.bf16.msra.mxu0 0
        %1219 = vmatprep.subr.bf16.mxu0 0
        %1220 = vmatpush1.bf16.msra.mxu0 0
        %1221 = vmatprep.subr.bf16.mxu0 0
        %1222 = vmatpush1.bf16.msra.mxu0 0
        %1223 = vmatprep.subr.bf16.mxu0 0
        %1224 = vmatpush1.bf16.msra.mxu0 %v1208
        %1225 = vmatprep.subr.bf16.mxu0 0
        %1226 = vmatpush1.bf16.msra.mxu0 %v1207
        %1227 = vmatprep.subr.bf16.mxu0 0
        %1228 = vmatpush2.bf16.msra.mxu0 0
        %1229 = vmatprep.subr.bf16.mxu0 0
        %1230 = vmatpush2.bf16.msra.mxu0 0
        %1231 = vmatprep.subr.bf16.mxu0 0
        %1232 = vmatpush2.bf16.msra.mxu0 0
        %1233 = vmatprep.subr.bf16.mxu0 0
        %1234 = vmatpush2.bf16.msra.mxu0 0
        %1235 = vmatprep.subr.bf16.mxu0 0
        %1236 = vmatpush2.bf16.msra.mxu0 0
        %1237 = vmatprep.subr.bf16.mxu0 0
        %1238 = vmatpush2.bf16.msra.mxu0 0
        %1239 = vmatprep.subr.bf16.mxu0 0
        %1240 = vmatpush2.bf16.msra.mxu0 0
        %1241 = vmatprep.subr.bf16.mxu0 0
        %1242 = vmatpush2.bf16.msra.mxu0 0
        %1243 = vmatprep.mubr.bf16.mxu0 0
        %1244 = vmatmul.mubr.bf16.gmra.mxu0 %v949
        %v1245 = vpop.f32.mrf.mxu0
        %v1246 = vadd.f32 %v1197, %v1245
        %v1247 = vpop.f32.mrf.mxu0
        %v1248 = vpop.f32.mrf.mxu0
        %v1249 = vadd.f32 %v1197, %v1248
        %v1250 = vpop.f32.mrf.mxu0
        %1251 = vdwg.mxu0
        %s1252 = scalar_lea.vmem %s824, 16
        %v1253 = vld [vmem:[%s1252] sm:$0xf]
        %v1254 = vld [vmem:[%s1252 + $0x4] sm:$0xf]
        %v1255 = vld [vmem:[%s1252 + $0x8] sm:$0xf]
        %v1256 = vld [vmem:[%s1252 + $0xc] sm:$0xf]
        %s1257 = scalar_lea.vmem %s828, 1
        %v1258 = vld [vmem:[%s1257] sm:$0x1]
        %v1260 = vlaneseq
        %v1261 = vshrl.u32 %v1260, 7
        %v1262 = vsub.s32 0, %v1261
        %v1263 = vrot.slane %v1258, %v1262
        %v1269 = vunpack.c.l.b16 %v1253
        %v1270 = vunpack.c.l.b16 %v1254
        %v1271 = vunpack.c.l.b16 %v1255
        %v1272 = vunpack.c.l.b16 %v1256
        %v1273 = vpack.c.b16 %v1270, %v1269
        %v1274 = vpack.c.b16 %v1272, %v1271
        %1277 = vmatprep.subr.bf16.mxu0 0
        %1278 = vmatpush1.bf16.msra.mxu0 0
        %1279 = vmatprep.subr.bf16.mxu0 0
        %1280 = vmatpush1.bf16.msra.mxu0 0
        %1281 = vmatprep.subr.bf16.mxu0 0
        %1282 = vmatpush1.bf16.msra.mxu0 0
        %1283 = vmatprep.subr.bf16.mxu0 0
        %1284 = vmatpush1.bf16.msra.mxu0 0
        %1285 = vmatprep.subr.bf16.mxu0 0
        %1286 = vmatpush1.bf16.msra.mxu0 0
        %1287 = vmatprep.subr.bf16.mxu0 0
        %1288 = vmatpush1.bf16.msra.mxu0 0
        %1289 = vmatprep.subr.bf16.mxu0 0
        %1290 = vmatpush1.bf16.msra.mxu0 %v1274
        %1291 = vmatprep.subr.bf16.mxu0 0
        %1292 = vmatpush1.bf16.msra.mxu0 %v1273
        %1293 = vmatprep.subr.bf16.mxu0 0
        %1294 = vmatpush2.bf16.msra.mxu0 0
        %1295 = vmatprep.subr.bf16.mxu0 0
        %1296 = vmatpush2.bf16.msra.mxu0 0
        %1297 = vmatprep.subr.bf16.mxu0 0
        %1298 = vmatpush2.bf16.msra.mxu0 0
        %1299 = vmatprep.subr.bf16.mxu0 0
        %1300 = vmatpush2.bf16.msra.mxu0 0
        %1301 = vmatprep.subr.bf16.mxu0 0
        %1302 = vmatpush2.bf16.msra.mxu0 0
        %1303 = vmatprep.subr.bf16.mxu0 0
        %1304 = vmatpush2.bf16.msra.mxu0 0
        %1305 = vmatprep.subr.bf16.mxu0 0
        %1306 = vmatpush2.bf16.msra.mxu0 0
        %1307 = vmatprep.subr.bf16.mxu0 0
        %1308 = vmatpush2.bf16.msra.mxu0 0
        %1309 = vmatprep.mubr.bf16.mxu0 0
        %1310 = vmatmul.mubr.bf16.gmra.mxu0 %v949
        %v1311 = vpop.f32.mrf.mxu0
        %v1312 = vadd.f32 %v1263, %v1311
        %v1313 = vpop.f32.mrf.mxu0
        %v1314 = vpop.f32.mrf.mxu0
        %v1315 = vadd.f32 %v1263, %v1314
        %v1316 = vpop.f32.mrf.mxu0
        %1317 = vdwg.mxu0
        %v1318 = vsub.f32 %v920, 1.0
        %v1319 = vmul.f32 %v1318, 1e+09
        %v1320 = vpack.c.bf16 %v986, %v986
        %v1321 = vpack.c.bf16 %v1116, %v1116
        %v1322 = vlaneseq
        %v1323 = vshrl.u32 %v1322, 7
        %v1324 = vsub.s32 0, %v1323
        %v1325 = vrot.slane %v1319, %v1324
        %vm1326 = vcmask 130048
        %v1328 = vsel %vm1326, %v1320, 0
        %v1331 = vsel %vm1326, %v1321, 0
        %1333 = vmatprep.subr.bf16.mxu0 0
        %1334 = vmatpush1.bf16.xpose.msra.mxu0 0
        %1335 = vmatprep.subr.bf16.mxu0 0
        %1336 = vmatpush1.bf16.xpose.msra.mxu0 0
        %1337 = vmatprep.subr.bf16.mxu0 0
        %1338 = vmatpush1.bf16.xpose.msra.mxu0 0
        %1339 = vmatprep.subr.bf16.mxu0 0
        %1340 = vmatpush1.bf16.xpose.msra.mxu0 0
        %1341 = vmatprep.subr.bf16.mxu0 0
        %1342 = vmatpush1.bf16.xpose.msra.mxu0 0
        %1343 = vmatprep.subr.bf16.mxu0 0
        %1344 = vmatpush1.bf16.xpose.msra.mxu0 0
        %1345 = vmatprep.subr.bf16.mxu0 0
        %1346 = vmatpush1.bf16.xpose.msra.mxu0 0
        %1347 = vmatprep.subr.bf16.mxu0 0
        %1348 = vmatpush1.bf16.xpose.msra.mxu0 %v1331
        %1349 = vmatprep.subr.bf16.mxu0 0
        %1350 = vmatpush2.bf16.xpose.msra.mxu0 0
        %1351 = vmatprep.subr.bf16.mxu0 0
        %1352 = vmatpush2.bf16.xpose.msra.mxu0 0
        %1353 = vmatprep.subr.bf16.mxu0 0
        %1354 = vmatpush2.bf16.xpose.msra.mxu0 0
        %1355 = vmatprep.subr.bf16.mxu0 0
        %1356 = vmatpush2.bf16.xpose.msra.mxu0 0
        %1357 = vmatprep.subr.bf16.mxu0 0
        %1358 = vmatpush2.bf16.xpose.msra.mxu0 0
        %1359 = vmatprep.subr.bf16.mxu0 0
        %1360 = vmatpush2.bf16.xpose.msra.mxu0 0
        %1361 = vmatprep.subr.bf16.mxu0 0
        %1362 = vmatpush2.bf16.xpose.msra.mxu0 0
        %1363 = vmatprep.subr.bf16.mxu0 0
        %1364 = vmatpush2.bf16.xpose.msra.mxu0 0
        %1365 = vmatprep.mubr.bf16.mxu0 0
        %1366 = vmatmul.mubr.bf16.gmra.mxu0 %v1328
        %v1367 = vpop.f32.mrf.mxu0
        %v1368 = vadd.f32 %v1325, %v1367
        %v1369 = vpop.f32.mrf.mxu0
        %v1370 = vpop.f32.mrf.mxu0
        %v1371 = vpop.f32.mrf.mxu0
        %1372 = vdwg.mxu0
        %vm1373 = vcmask 64512
        %v1374 = vsel %vm1373, %v1368, -inf
        %1375 = vmax.xlane.f32.xlu0 %v1374
        %v1376 = vpop.xlane.xlu0 %1375
        %v1377 = vsub.f32 %v1368, %v1376
        %v1378 = vmul.f32 %v1377, 1.442695
        %v1379 = vpow.pop %v1378
        %v1380 = vsel %vm1373, %v1379, 0.0
        %1381 = vadd.xlane.f32.xlu0 %v1380
        %v1382 = vpop.xlane.xlu0 %1381
        %v1383 = vrcp.pop %v1382
        %v1384 = vmul.f32 %v1379, %v1383
        %v1385 = vpack.c.bf16 %v1384, %v1384
        %v1386 = vpack.c.bf16 %v1246, %v1246
        %v1388 = vsel %vm1373, %v1385, 0
        %vm1390 = vcmask 1043456
        %v1392 = vsel %vm1390, %v1386, 0
        %1394 = vmatprep.subr.bf16.mxu0 0
        %1395 = vmatpush1.bf16.msra.mxu0 0
        %1396 = vmatprep.subr.bf16.mxu0 0
        %1397 = vmatpush1.bf16.msra.mxu0 0
        %1398 = vmatprep.subr.bf16.mxu0 0
        %1399 = vmatpush1.bf16.msra.mxu0 0
        %1400 = vmatprep.subr.bf16.mxu0 0
        %1401 = vmatpush1.bf16.msra.mxu0 0
        %1402 = vmatprep.subr.bf16.mxu0 0
        %1403 = vmatpush1.bf16.msra.mxu0 0
        %1404 = vmatprep.subr.bf16.mxu0 0
        %1405 = vmatpush1.bf16.msra.mxu0 0
        %1406 = vmatprep.subr.bf16.mxu0 0
        %1407 = vmatpush1.bf16.msra.mxu0 0
        %1408 = vmatprep.subr.bf16.mxu0 0
        %1409 = vmatpush1.bf16.msra.mxu0 %v1392
        %1410 = vmatprep.subr.bf16.mxu0 0
        %1411 = vmatpush2.bf16.msra.mxu0 0
        %1412 = vmatprep.subr.bf16.mxu0 0
        %1413 = vmatpush2.bf16.msra.mxu0 0
        %1414 = vmatprep.subr.bf16.mxu0 0
        %1415 = vmatpush2.bf16.msra.mxu0 0
        %1416 = vmatprep.subr.bf16.mxu0 0
        %1417 = vmatpush2.bf16.msra.mxu0 0
        %1418 = vmatprep.subr.bf16.mxu0 0
        %1419 = vmatpush2.bf16.msra.mxu0 0
        %1420 = vmatprep.subr.bf16.mxu0 0
        %1421 = vmatpush2.bf16.msra.mxu0 0
        %1422 = vmatprep.subr.bf16.mxu0 0
        %1423 = vmatpush2.bf16.msra.mxu0 0
        %1424 = vmatprep.subr.bf16.mxu0 0
        %1425 = vmatpush2.bf16.msra.mxu0 0
        %1426 = vmatprep.mubr.bf16.mxu0 0
        %1427 = vmatmul.mubr.bf16.gmra.mxu0 %v1388
        %v1428 = vpop.f32.mrf.mxu0
        %v1429 = vadd.f32 0.0, %v1428
        %v1430 = vpop.f32.mrf.mxu0
        %v1431 = vpop.f32.mrf.mxu0
        %v1432 = vpop.f32.mrf.mxu0
        %1433 = vdwg.mxu0
        %v1434 = vpack.c.bf16 %v1429, %v1429
        %v1435 = vld [vmem:[%s833] sm:$0xf]
        %v1436 = vld [vmem:[%s833 + $0x4] sm:$0xf]
        %v1437 = vpack.c.bf16 %v1052, %v1052
        %v1438 = vpack.c.bf16 %v1182, %v1182
        %v1440 = vsel %vm1326, %v1437, 0
        %v1443 = vsel %vm1326, %v1438, 0
        %1445 = vmatprep.subr.bf16.mxu0 0
        %1446 = vmatpush1.bf16.xpose.msra.mxu0 0
        %1447 = vmatprep.subr.bf16.mxu0 0
        %1448 = vmatpush1.bf16.xpose.msra.mxu0 0
        %1449 = vmatprep.subr.bf16.mxu0 0
        %1450 = vmatpush1.bf16.xpose.msra.mxu0 0
        %1451 = vmatprep.subr.bf16.mxu0 0
        %1452 = vmatpush1.bf16.xpose.msra.mxu0 0
        %1453 = vmatprep.subr.bf16.mxu0 0
        %1454 = vmatpush1.bf16.xpose.msra.mxu0 0
        %1455 = vmatprep.subr.bf16.mxu0 0
        %1456 = vmatpush1.bf16.xpose.msra.mxu0 0
        %1457 = vmatprep.subr.bf16.mxu0 0
        %1458 = vmatpush1.bf16.xpose.msra.mxu0 0
        %1459 = vmatprep.subr.bf16.mxu0 0
        %1460 = vmatpush1.bf16.xpose.msra.mxu0 %v1443
        %1461 = vmatprep.subr.bf16.mxu0 0
        %1462 = vmatpush2.bf16.xpose.msra.mxu0 0
        %1463 = vmatprep.subr.bf16.mxu0 0
        %1464 = vmatpush2.bf16.xpose.msra.mxu0 0
        %1465 = vmatprep.subr.bf16.mxu0 0
        %1466 = vmatpush2.bf16.xpose.msra.mxu0 0
        %1467 = vmatprep.subr.bf16.mxu0 0
        %1468 = vmatpush2.bf16.xpose.msra.mxu0 0
        %1469 = vmatprep.subr.bf16.mxu0 0
        %1470 = vmatpush2.bf16.xpose.msra.mxu0 0
        %1471 = vmatprep.subr.bf16.mxu0 0
        %1472 = vmatpush2.bf16.xpose.msra.mxu0 0
        %1473 = vmatprep.subr.bf16.mxu0 0
        %1474 = vmatpush2.bf16.xpose.msra.mxu0 0
        %1475 = vmatprep.subr.bf16.mxu0 0
        %1476 = vmatpush2.bf16.xpose.msra.mxu0 0
        %1477 = vmatprep.mubr.bf16.mxu0 0
        %1478 = vmatmul.mubr.bf16.gmra.mxu0 %v1440
        %v1479 = vpop.f32.mrf.mxu0
        %v1480 = vadd.f32 %v1325, %v1479
        %v1481 = vpop.f32.mrf.mxu0
        %v1482 = vpop.f32.mrf.mxu0
        %v1483 = vpop.f32.mrf.mxu0
        %1484 = vdwg.mxu0
        %v1485 = vsel %vm1373, %v1480, -inf
        %1486 = vmax.xlane.f32.xlu0 %v1485
        %v1487 = vpop.xlane.xlu0 %1486
        %v1488 = vsub.f32 %v1480, %v1487
        %v1489 = vmul.f32 %v1488, 1.442695
        %v1490 = vpow.pop %v1489
        %v1491 = vsel %vm1373, %v1490, 0.0
        %1492 = vadd.xlane.f32.xlu0 %v1491
        %v1493 = vpop.xlane.xlu0 %1492
        %v1494 = vrcp.pop %v1493
        %v1495 = vmul.f32 %v1490, %v1494
        %v1496 = vpack.c.bf16 %v1495, %v1495
        %v1497 = vpack.c.bf16 %v1312, %v1312
        %v1499 = vsel %vm1373, %v1496, 0
        %v1502 = vsel %vm1390, %v1497, 0
        %1504 = vmatprep.subr.bf16.mxu0 0
        %1505 = vmatpush1.bf16.msra.mxu0 0
        %1506 = vmatprep.subr.bf16.mxu0 0
        %1507 = vmatpush1.bf16.msra.mxu0 0
        %1508 = vmatprep.subr.bf16.mxu0 0
        %1509 = vmatpush1.bf16.msra.mxu0 0
        %1510 = vmatprep.subr.bf16.mxu0 0
        %1511 = vmatpush1.bf16.msra.mxu0 0
        %1512 = vmatprep.subr.bf16.mxu0 0
        %1513 = vmatpush1.bf16.msra.mxu0 0
        %1514 = vmatprep.subr.bf16.mxu0 0
        %1515 = vmatpush1.bf16.msra.mxu0 0
        %1516 = vmatprep.subr.bf16.mxu0 0
        %1517 = vmatpush1.bf16.msra.mxu0 0
        %1518 = vmatprep.subr.bf16.mxu0 0
        %1519 = vmatpush1.bf16.msra.mxu0 %v1502
        %1520 = vmatprep.subr.bf16.mxu0 0
        %1521 = vmatpush2.bf16.msra.mxu0 0
        %1522 = vmatprep.subr.bf16.mxu0 0
        %1523 = vmatpush2.bf16.msra.mxu0 0
        %1524 = vmatprep.subr.bf16.mxu0 0
        %1525 = vmatpush2.bf16.msra.mxu0 0
        %1526 = vmatprep.subr.bf16.mxu0 0
        %1527 = vmatpush2.bf16.msra.mxu0 0
        %1528 = vmatprep.subr.bf16.mxu0 0
        %1529 = vmatpush2.bf16.msra.mxu0 0
        %1530 = vmatprep.subr.bf16.mxu0 0
        %1531 = vmatpush2.bf16.msra.mxu0 0
        %1532 = vmatprep.subr.bf16.mxu0 0
        %1533 = vmatpush2.bf16.msra.mxu0 0
        %1534 = vmatprep.subr.bf16.mxu0 0
        %1535 = vmatpush2.bf16.msra.mxu0 0
        %1536 = vmatprep.mubr.bf16.mxu0 0
        %1537 = vmatmul.mubr.bf16.gmra.mxu0 %v1499
        %v1538 = vpop.f32.mrf.mxu0
        %v1539 = vadd.f32 0.0, %v1538
        %v1540 = vpop.f32.mrf.mxu0
        %v1541 = vpop.f32.mrf.mxu0
        %v1542 = vpop.f32.mrf.mxu0
        %1543 = vdwg.mxu0
        %v1544 = vpack.c.bf16 %v1539, %v1539
        %s1545 = scalar_lea.vmem %s833, 8
        %v1546 = vld [vmem:[%s1545] sm:$0xf]
        %v1547 = vld [vmem:[%s1545 + $0x4] sm:$0xf]
        %v1550 = vunpack.c.l.b16 %v1546
        %v1551 = vunpack.c.l.b16 %v1547
        %v1552 = vpack.c.b16 %v1551, %v1550
        %v1555 = vsel %vm1326, %v1544, 0
        %1557 = vmatprep.subr.bf16.mxu0 0
        %1558 = vmatpush1.bf16.msra.mxu0 0
        %1559 = vmatprep.subr.bf16.mxu0 0
        %1560 = vmatpush1.bf16.msra.mxu0 0
        %1561 = vmatprep.subr.bf16.mxu0 0
        %1562 = vmatpush1.bf16.msra.mxu0 0
        %1563 = vmatprep.subr.bf16.mxu0 0
        %1564 = vmatpush1.bf16.msra.mxu0 0
        %1565 = vmatprep.subr.bf16.mxu0 0
        %1566 = vmatpush1.bf16.msra.mxu0 0
        %1567 = vmatprep.subr.bf16.mxu0 0
        %1568 = vmatpush1.bf16.msra.mxu0 0
        %1569 = vmatprep.subr.bf16.mxu0 0
        %1570 = vmatpush1.bf16.msra.mxu0 0
        %1571 = vmatprep.subr.bf16.mxu0 0
        %1572 = vmatpush1.bf16.msra.mxu0 %v1552
        %1573 = vmatprep.subr.bf16.mxu0 0
        %1574 = vmatpush2.bf16.msra.mxu0 0
        %1575 = vmatprep.subr.bf16.mxu0 0
        %1576 = vmatpush2.bf16.msra.mxu0 0
        %1577 = vmatprep.subr.bf16.mxu0 0
        %1578 = vmatpush2.bf16.msra.mxu0 0
        %1579 = vmatprep.subr.bf16.mxu0 0
        %1580 = vmatpush2.bf16.msra.mxu0 0
        %1581 = vmatprep.subr.bf16.mxu0 0
        %1582 = vmatpush2.bf16.msra.mxu0 0
        %1583 = vmatprep.subr.bf16.mxu0 0
        %1584 = vmatpush2.bf16.msra.mxu0 0
        %1585 = vmatprep.subr.bf16.mxu0 0
        %1586 = vmatpush2.bf16.msra.mxu0 0
        %1587 = vmatprep.subr.bf16.mxu0 0
        %1588 = vmatpush2.bf16.msra.mxu0 0
        %1589 = vmatprep.mubr.bf16.mxu0 0
        %1590 = vmatmul.mubr.bf16.gmra.mxu0 %v1555
        %v1591 = vpop.f32.mrf.mxu0
        %v1592 = vadd.f32 0.0, %v1591
        %v1593 = vpop.f32.mrf.mxu0
        %v1594 = vpop.f32.mrf.mxu0
        %v1595 = vpop.f32.mrf.mxu0
        %1596 = vdwg.mxu0
        %v1599 = vunpack.c.l.b16 %v1435
        %v1600 = vunpack.c.l.b16 %v1436
        %v1601 = vpack.c.b16 %v1600, %v1599
        %v1604 = vsel %vm1326, %v1434, 0
        %1606 = vmatprep.subr.bf16.mxu0 0
        %1607 = vmatpush1.bf16.msra.mxu0 0
        %1608 = vmatprep.subr.bf16.mxu0 0
        %1609 = vmatpush1.bf16.msra.mxu0 0
        %1610 = vmatprep.subr.bf16.mxu0 0
        %1611 = vmatpush1.bf16.msra.mxu0 0
        %1612 = vmatprep.subr.bf16.mxu0 0
        %1613 = vmatpush1.bf16.msra.mxu0 0
        %1614 = vmatprep.subr.bf16.mxu0 0
        %1615 = vmatpush1.bf16.msra.mxu0 0
        %1616 = vmatprep.subr.bf16.mxu0 0
        %1617 = vmatpush1.bf16.msra.mxu0 0
        %1618 = vmatprep.subr.bf16.mxu0 0
        %1619 = vmatpush1.bf16.msra.mxu0 0
        %1620 = vmatprep.subr.bf16.mxu0 0
        %1621 = vmatpush1.bf16.msra.mxu0 %v1601
        %1622 = vmatprep.subr.bf16.mxu0 0
        %1623 = vmatpush2.bf16.msra.mxu0 0
        %1624 = vmatprep.subr.bf16.mxu0 0
        %1625 = vmatpush2.bf16.msra.mxu0 0
        %1626 = vmatprep.subr.bf16.mxu0 0
        %1627 = vmatpush2.bf16.msra.mxu0 0
        %1628 = vmatprep.subr.bf16.mxu0 0
        %1629 = vmatpush2.bf16.msra.mxu0 0
        %1630 = vmatprep.subr.bf16.mxu0 0
        %1631 = vmatpush2.bf16.msra.mxu0 0
        %1632 = vmatprep.subr.bf16.mxu0 0
        %1633 = vmatpush2.bf16.msra.mxu0 0
        %1634 = vmatprep.subr.bf16.mxu0 0
        %1635 = vmatpush2.bf16.msra.mxu0 0
        %1636 = vmatprep.subr.bf16.mxu0 0
        %1637 = vmatpush2.bf16.msra.mxu0 0
        %1638 = vmatprep.mubr.bf16.mxu0 0
        %1639 = vmatmul.mubr.bf16.gmra.mxu0 %v1604
        %v1640 = vpop.f32.mrf.mxu0
        %v1641 = vadd.f32 %v1592, %v1640
        %v1642 = vpop.f32.mrf.mxu0
        %v1643 = vpop.f32.mrf.mxu0
        %v1644 = vpop.f32.mrf.mxu0
        %1645 = vdwg.mxu0
        %v1646 = vpack.c.bf16 %v989, %v989
        %v1647 = vpack.c.bf16 %v1119, %v1119
        %v1648 = vlaneseq
        %v1649 = vshrl.u32 %v1648, 7
        %v1650 = vsub.s32 1, %v1649
        %v1651 = vrot.slane %v1319, %v1650
        %v1653 = vsel %vm1326, %v1646, 0
        %v1656 = vsel %vm1326, %v1647, 0
        %1658 = vmatprep.subr.bf16.mxu0 0
        %1659 = vmatpush1.bf16.xpose.msra.mxu0 0
        %1660 = vmatprep.subr.bf16.mxu0 0
        %1661 = vmatpush1.bf16.xpose.msra.mxu0 0
        %1662 = vmatprep.subr.bf16.mxu0 0
        %1663 = vmatpush1.bf16.xpose.msra.mxu0 0
        %1664 = vmatprep.subr.bf16.mxu0 0
        %1665 = vmatpush1.bf16.xpose.msra.mxu0 0
        %1666 = vmatprep.subr.bf16.mxu0 0
        %1667 = vmatpush1.bf16.xpose.msra.mxu0 0
        %1668 = vmatprep.subr.bf16.mxu0 0
        %1669 = vmatpush1.bf16.xpose.msra.mxu0 0
        %1670 = vmatprep.subr.bf16.mxu0 0
        %1671 = vmatpush1.bf16.xpose.msra.mxu0 0
        %1672 = vmatprep.subr.bf16.mxu0 0
        %1673 = vmatpush1.bf16.xpose.msra.mxu0 %v1656
        %1674 = vmatprep.subr.bf16.mxu0 0
        %1675 = vmatpush2.bf16.xpose.msra.mxu0 0
        %1676 = vmatprep.subr.bf16.mxu0 0
        %1677 = vmatpush2.bf16.xpose.msra.mxu0 0
        %1678 = vmatprep.subr.bf16.mxu0 0
        %1679 = vmatpush2.bf16.xpose.msra.mxu0 0
        %1680 = vmatprep.subr.bf16.mxu0 0
        %1681 = vmatpush2.bf16.xpose.msra.mxu0 0
        %1682 = vmatprep.subr.bf16.mxu0 0
        %1683 = vmatpush2.bf16.xpose.msra.mxu0 0
        %1684 = vmatprep.subr.bf16.mxu0 0
        %1685 = vmatpush2.bf16.xpose.msra.mxu0 0
        %1686 = vmatprep.subr.bf16.mxu0 0
        %1687 = vmatpush2.bf16.xpose.msra.mxu0 0
        %1688 = vmatprep.subr.bf16.mxu0 0
        %1689 = vmatpush2.bf16.xpose.msra.mxu0 0
        %1690 = vmatprep.mubr.bf16.mxu0 0
        %1691 = vmatmul.mubr.bf16.gmra.mxu0 %v1653
        %v1692 = vpop.f32.mrf.mxu0
        %v1693 = vadd.f32 %v1651, %v1692
        %v1694 = vpop.f32.mrf.mxu0
        %v1695 = vpop.f32.mrf.mxu0
        %v1696 = vpop.f32.mrf.mxu0
        %1697 = vdwg.mxu0
        %v1698 = vsel %vm1373, %v1693, -inf
        %1699 = vmax.xlane.f32.xlu0 %v1698
        %v1700 = vpop.xlane.xlu0 %1699
        %v1701 = vsub.f32 %v1693, %v1700
        %v1702 = vmul.f32 %v1701, 1.442695
        %v1703 = vpow.pop %v1702
        %v1704 = vsel %vm1373, %v1703, 0.0
        %1705 = vadd.xlane.f32.xlu0 %v1704
        %v1706 = vpop.xlane.xlu0 %1705
        %v1707 = vrcp.pop %v1706
        %v1708 = vmul.f32 %v1703, %v1707
        %v1709 = vpack.c.bf16 %v1708, %v1708
        %v1710 = vpack.c.bf16 %v1249, %v1249
        %v1712 = vsel %vm1373, %v1709, 0
        %v1715 = vsel %vm1390, %v1710, 0
        %1717 = vmatprep.subr.bf16.mxu0 0
        %1718 = vmatpush1.bf16.msra.mxu0 0
        %1719 = vmatprep.subr.bf16.mxu0 0
        %1720 = vmatpush1.bf16.msra.mxu0 0
        %1721 = vmatprep.subr.bf16.mxu0 0
        %1722 = vmatpush1.bf16.msra.mxu0 0
        %1723 = vmatprep.subr.bf16.mxu0 0
        %1724 = vmatpush1.bf16.msra.mxu0 0
        %1725 = vmatprep.subr.bf16.mxu0 0
        %1726 = vmatpush1.bf16.msra.mxu0 0
        %1727 = vmatprep.subr.bf16.mxu0 0
        %1728 = vmatpush1.bf16.msra.mxu0 0
        %1729 = vmatprep.subr.bf16.mxu0 0
        %1730 = vmatpush1.bf16.msra.mxu0 0
        %1731 = vmatprep.subr.bf16.mxu0 0
        %1732 = vmatpush1.bf16.msra.mxu0 %v1715
        %1733 = vmatprep.subr.bf16.mxu0 0
        %1734 = vmatpush2.bf16.msra.mxu0 0
        %1735 = vmatprep.subr.bf16.mxu0 0
        %1736 = vmatpush2.bf16.msra.mxu0 0
        %1737 = vmatprep.subr.bf16.mxu0 0
        %1738 = vmatpush2.bf16.msra.mxu0 0
        %1739 = vmatprep.subr.bf16.mxu0 0
        %1740 = vmatpush2.bf16.msra.mxu0 0
        %1741 = vmatprep.subr.bf16.mxu0 0
        %1742 = vmatpush2.bf16.msra.mxu0 0
        %1743 = vmatprep.subr.bf16.mxu0 0
        %1744 = vmatpush2.bf16.msra.mxu0 0
        %1745 = vmatprep.subr.bf16.mxu0 0
        %1746 = vmatpush2.bf16.msra.mxu0 0
        %1747 = vmatprep.subr.bf16.mxu0 0
        %1748 = vmatpush2.bf16.msra.mxu0 0
        %1749 = vmatprep.mubr.bf16.mxu0 0
        %1750 = vmatmul.mubr.bf16.gmra.mxu0 %v1712
        %v1751 = vpop.f32.mrf.mxu0
        %v1752 = vadd.f32 0.0, %v1751
        %v1753 = vpop.f32.mrf.mxu0
        %v1754 = vpop.f32.mrf.mxu0
        %v1755 = vpop.f32.mrf.mxu0
        %1756 = vdwg.mxu0
        %v1757 = vpack.c.bf16 %v1752, %v1752
        %v1758 = vpack.c.bf16 %v1055, %v1055
        %v1759 = vpack.c.bf16 %v1185, %v1185
        %v1761 = vsel %vm1326, %v1758, 0
        %v1764 = vsel %vm1326, %v1759, 0
        %1766 = vmatprep.subr.bf16.mxu0 0
        %1767 = vmatpush1.bf16.xpose.msra.mxu0 0
        %1768 = vmatprep.subr.bf16.mxu0 0
        %1769 = vmatpush1.bf16.xpose.msra.mxu0 0
        %1770 = vmatprep.subr.bf16.mxu0 0
        %1771 = vmatpush1.bf16.xpose.msra.mxu0 0
        %1772 = vmatprep.subr.bf16.mxu0 0
        %1773 = vmatpush1.bf16.xpose.msra.mxu0 0
        %1774 = vmatprep.subr.bf16.mxu0 0
        %1775 = vmatpush1.bf16.xpose.msra.mxu0 0
        %1776 = vmatprep.subr.bf16.mxu0 0
        %1777 = vmatpush1.bf16.xpose.msra.mxu0 0
        %1778 = vmatprep.subr.bf16.mxu0 0
        %1779 = vmatpush1.bf16.xpose.msra.mxu0 0
        %1780 = vmatprep.subr.bf16.mxu0 0
        %1781 = vmatpush1.bf16.xpose.msra.mxu0 %v1764
        %1782 = vmatprep.subr.bf16.mxu0 0
        %1783 = vmatpush2.bf16.xpose.msra.mxu0 0
        %1784 = vmatprep.subr.bf16.mxu0 0
        %1785 = vmatpush2.bf16.xpose.msra.mxu0 0
        %1786 = vmatprep.subr.bf16.mxu0 0
        %1787 = vmatpush2.bf16.xpose.msra.mxu0 0
        %1788 = vmatprep.subr.bf16.mxu0 0
        %1789 = vmatpush2.bf16.xpose.msra.mxu0 0
        %1790 = vmatprep.subr.bf16.mxu0 0
        %1791 = vmatpush2.bf16.xpose.msra.mxu0 0
        %1792 = vmatprep.subr.bf16.mxu0 0
        %1793 = vmatpush2.bf16.xpose.msra.mxu0 0
        %1794 = vmatprep.subr.bf16.mxu0 0
        %1795 = vmatpush2.bf16.xpose.msra.mxu0 0
        %1796 = vmatprep.subr.bf16.mxu0 0
        %1797 = vmatpush2.bf16.xpose.msra.mxu0 0
        %1798 = vmatprep.mubr.bf16.mxu0 0
        %1799 = vmatmul.mubr.bf16.gmra.mxu0 %v1761
        %v1800 = vpop.f32.mrf.mxu0
        %v1801 = vadd.f32 %v1651, %v1800
        %v1802 = vpop.f32.mrf.mxu0
        %v1803 = vpop.f32.mrf.mxu0
        %v1804 = vpop.f32.mrf.mxu0
        %1805 = vdwg.mxu0
        %v1806 = vsel %vm1373, %v1801, -inf
        %1807 = vmax.xlane.f32.xlu0 %v1806
        %v1808 = vpop.xlane.xlu0 %1807
        %v1809 = vsub.f32 %v1801, %v1808
        %v1810 = vmul.f32 %v1809, 1.442695
        %v1811 = vpow.pop %v1810
        %v1812 = vsel %vm1373, %v1811, 0.0
        %1813 = vadd.xlane.f32.xlu0 %v1812
        %v1814 = vpop.xlane.xlu0 %1813
        %v1815 = vrcp.pop %v1814
        %v1816 = vmul.f32 %v1811, %v1815
        %v1817 = vpack.c.bf16 %v1816, %v1816
        %v1818 = vpack.c.bf16 %v1315, %v1315
        %v1820 = vsel %vm1373, %v1817, 0
        %v1823 = vsel %vm1390, %v1818, 0
        %1825 = vmatprep.subr.bf16.mxu0 0
        %1826 = vmatpush1.bf16.msra.mxu0 0
        %1827 = vmatprep.subr.bf16.mxu0 0
        %1828 = vmatpush1.bf16.msra.mxu0 0
        %1829 = vmatprep.subr.bf16.mxu0 0
        %1830 = vmatpush1.bf16.msra.mxu0 0
        %1831 = vmatprep.subr.bf16.mxu0 0
        %1832 = vmatpush1.bf16.msra.mxu0 0
        %1833 = vmatprep.subr.bf16.mxu0 0
        %1834 = vmatpush1.bf16.msra.mxu0 0
        %1835 = vmatprep.subr.bf16.mxu0 0
        %1836 = vmatpush1.bf16.msra.mxu0 0
        %1837 = vmatprep.subr.bf16.mxu0 0
        %1838 = vmatpush1.bf16.msra.mxu0 0
        %1839 = vmatprep.subr.bf16.mxu0 0
        %1840 = vmatpush1.bf16.msra.mxu0 %v1823
        %1841 = vmatprep.subr.bf16.mxu0 0
        %1842 = vmatpush2.bf16.msra.mxu0 0
        %1843 = vmatprep.subr.bf16.mxu0 0
        %1844 = vmatpush2.bf16.msra.mxu0 0
        %1845 = vmatprep.subr.bf16.mxu0 0
        %1846 = vmatpush2.bf16.msra.mxu0 0
        %1847 = vmatprep.subr.bf16.mxu0 0
        %1848 = vmatpush2.bf16.msra.mxu0 0
        %1849 = vmatprep.subr.bf16.mxu0 0
        %1850 = vmatpush2.bf16.msra.mxu0 0
        %1851 = vmatprep.subr.bf16.mxu0 0
        %1852 = vmatpush2.bf16.msra.mxu0 0
        %1853 = vmatprep.subr.bf16.mxu0 0
        %1854 = vmatpush2.bf16.msra.mxu0 0
        %1855 = vmatprep.subr.bf16.mxu0 0
        %1856 = vmatpush2.bf16.msra.mxu0 0
        %1857 = vmatprep.mubr.bf16.mxu0 0
        %1858 = vmatmul.mubr.bf16.gmra.mxu0 %v1820
        %v1859 = vpop.f32.mrf.mxu0
        %v1860 = vadd.f32 0.0, %v1859
        %v1861 = vpop.f32.mrf.mxu0
        %v1862 = vpop.f32.mrf.mxu0
        %v1863 = vpop.f32.mrf.mxu0
        %1864 = vdwg.mxu0
        %v1865 = vpack.c.bf16 %v1860, %v1860
        %v1867 = vsel %vm1326, %v1865, 0
        %1869 = vmatprep.subr.bf16.mxu0 0
        %1870 = vmatpush1.bf16.msra.mxu0 0
        %1871 = vmatprep.subr.bf16.mxu0 0
        %1872 = vmatpush1.bf16.msra.mxu0 0
        %1873 = vmatprep.subr.bf16.mxu0 0
        %1874 = vmatpush1.bf16.msra.mxu0 0
        %1875 = vmatprep.subr.bf16.mxu0 0
        %1876 = vmatpush1.bf16.msra.mxu0 0
        %1877 = vmatprep.subr.bf16.mxu0 0
        %1878 = vmatpush1.bf16.msra.mxu0 0
        %1879 = vmatprep.subr.bf16.mxu0 0
        %1880 = vmatpush1.bf16.msra.mxu0 0
        %1881 = vmatprep.subr.bf16.mxu0 0
        %1882 = vmatpush1.bf16.msra.mxu0 0
        %1883 = vmatprep.subr.bf16.mxu0 0
        %1884 = vmatpush1.bf16.msra.mxu0 %v1552
        %1885 = vmatprep.subr.bf16.mxu0 0
        %1886 = vmatpush2.bf16.msra.mxu0 0
        %1887 = vmatprep.subr.bf16.mxu0 0
        %1888 = vmatpush2.bf16.msra.mxu0 0
        %1889 = vmatprep.subr.bf16.mxu0 0
        %1890 = vmatpush2.bf16.msra.mxu0 0
        %1891 = vmatprep.subr.bf16.mxu0 0
        %1892 = vmatpush2.bf16.msra.mxu0 0
        %1893 = vmatprep.subr.bf16.mxu0 0
        %1894 = vmatpush2.bf16.msra.mxu0 0
        %1895 = vmatprep.subr.bf16.mxu0 0
        %1896 = vmatpush2.bf16.msra.mxu0 0
        %1897 = vmatprep.subr.bf16.mxu0 0
        %1898 = vmatpush2.bf16.msra.mxu0 0
        %1899 = vmatprep.subr.bf16.mxu0 0
        %1900 = vmatpush2.bf16.msra.mxu0 0
        %1901 = vmatprep.mubr.bf16.mxu0 0
        %1902 = vmatmul.mubr.bf16.gmra.mxu0 %v1867
        %v1903 = vpop.f32.mrf.mxu0
        %v1904 = vadd.f32 0.0, %v1903
        %v1905 = vpop.f32.mrf.mxu0
        %v1906 = vpop.f32.mrf.mxu0
        %v1907 = vpop.f32.mrf.mxu0
        %1908 = vdwg.mxu0
        %v1910 = vsel %vm1326, %v1757, 0
        %1912 = vmatprep.subr.bf16.mxu0 0
        %1913 = vmatpush1.bf16.msra.mxu0 0
        %1914 = vmatprep.subr.bf16.mxu0 0
        %1915 = vmatpush1.bf16.msra.mxu0 0
        %1916 = vmatprep.subr.bf16.mxu0 0
        %1917 = vmatpush1.bf16.msra.mxu0 0
        %1918 = vmatprep.subr.bf16.mxu0 0
        %1919 = vmatpush1.bf16.msra.mxu0 0
        %1920 = vmatprep.subr.bf16.mxu0 0
        %1921 = vmatpush1.bf16.msra.mxu0 0
        %1922 = vmatprep.subr.bf16.mxu0 0
        %1923 = vmatpush1.bf16.msra.mxu0 0
        %1924 = vmatprep.subr.bf16.mxu0 0
        %1925 = vmatpush1.bf16.msra.mxu0 0
        %1926 = vmatprep.subr.bf16.mxu0 0
        %1927 = vmatpush1.bf16.msra.mxu0 %v1601
        %1928 = vmatprep.subr.bf16.mxu0 0
        %1929 = vmatpush2.bf16.msra.mxu0 0
        %1930 = vmatprep.subr.bf16.mxu0 0
        %1931 = vmatpush2.bf16.msra.mxu0 0
        %1932 = vmatprep.subr.bf16.mxu0 0
        %1933 = vmatpush2.bf16.msra.mxu0 0
        %1934 = vmatprep.subr.bf16.mxu0 0
        %1935 = vmatpush2.bf16.msra.mxu0 0
        %1936 = vmatprep.subr.bf16.mxu0 0
        %1937 = vmatpush2.bf16.msra.mxu0 0
        %1938 = vmatprep.subr.bf16.mxu0 0
        %1939 = vmatpush2.bf16.msra.mxu0 0
        %1940 = vmatprep.subr.bf16.mxu0 0
        %1941 = vmatpush2.bf16.msra.mxu0 0
        %1942 = vmatprep.subr.bf16.mxu0 0
        %1943 = vmatpush2.bf16.msra.mxu0 0
        %1944 = vmatprep.mubr.bf16.mxu0 0
        %1945 = vmatmul.mubr.bf16.gmra.mxu0 %v1910
        %v1946 = vpop.f32.mrf.mxu0
        %v1947 = vadd.f32 %v1904, %v1946
        %v1948 = vpop.f32.mrf.mxu0
        %v1949 = vpop.f32.mrf.mxu0
        %v1950 = vpop.f32.mrf.mxu0
        %1951 = vdwg.mxu0
        %v1952 = vld [vmem:[%s836] sm:$0x1]
        %v1954 = vlaneseq
        %v1955 = vshrl.u32 %v1954, 7
        %v1956 = vsub.s32 0, %v1955
        %v1957 = vrot.slane %v1952, %v1956
        %v1959 = vadd.f32 %v1641, %v1957
        %v1960 = vadd.f32 %v1947, %v1957
        %v1961 = vadd.f32 %v921, %v1959
        %v1962 = vadd.f32 %v922, %v1960
        %v1963 = vld [vmem:[%s839] sm:$0x1]
        %v1964 = vld [vmem:[%s842] sm:$0x1]
        %v1965 = vsel %vm947, %v1961, 0.0
        %1966 = vadd.xlane.f32.xlu0 %v1965
        %v1967 = vpop.xlane.xlu0 %1966
        %v1968 = vsel %vm947, %v1962, 0.0
        %1969 = vadd.xlane.f32.xlu0 %v1968
        %v1970 = vpop.xlane.xlu0 %1969
        %v1971 = vrcp.pop 32.0
        %v1972 = vmul.f32 %v1967, %v1971
        %v1973 = vmul.f32 %v1970, %v1971
        %v1974 = vsub.f32 %v1961, %v1972
        %v1975 = vsub.f32 %v1962, %v1973
        %v1976 = vmul.f32 %v1974, %v1974
        %v1977 = vmul.f32 %v1975, %v1975
        %v1978 = vsel %vm947, %v1976, 0.0
        %1979 = vadd.xlane.f32.xlu0 %v1978
        %v1980 = vpop.xlane.xlu0 %1979
        %v1981 = vsel %vm947, %v1977, 0.0
        %1982 = vadd.xlane.f32.xlu0 %v1981
        %v1983 = vpop.xlane.xlu0 %1982
        %v1984 = vmul.f32 %v1980, %v1971
        %v1985 = vmul.f32 %v1983, %v1971
        %v1986 = vadd.f32 %v1984, 1e-05
        %v1987 = vadd.f32 %v1985, 1e-05
        %v1988 = vrsqrt.pop %v1986
        %v1989 = vrsqrt.pop %v1987
        %v1990 = vmul.f32 %v1974, %v1988
        %v1991 = vmul.f32 %v1975, %v1989
        %v1993 = vlaneseq
        %v1994 = vshrl.u32 %v1993, 7
        %v1995 = vsub.s32 0, %v1994
        %v1996 = vrot.slane %v1963, %v1995
        %v1998 = vmul.f32 %v1990, %v1996
        %v1999 = vmul.f32 %v1991, %v1996
        %v2001 = vlaneseq
        %v2002 = vshrl.u32 %v2001, 7
        %v2003 = vsub.s32 0, %v2002
        %v2004 = vrot.slane %v1964, %v2003
        %v2006 = vadd.f32 %v1998, %v2004
        %v2007 = vadd.f32 %v1999, %v2004
        %v2008 = vpack.c.bf16 %v2007, %v2006
        %v2009 = vld [vmem:[%s847] sm:$0xf]
        %v2010 = vld [vmem:[%s847 + $0x4] sm:$0xf]
        %v2011 = vld [vmem:[%s847 + $0x8] sm:$0xf]
        %v2012 = vld [vmem:[%s847 + $0xc] sm:$0xf]
        %v2013 = vld [vmem:[%s850] sm:$0x1]
        %v2015 = vlaneseq
        %v2016 = vshrl.u32 %v2015, 7
        %v2017 = vsub.s32 0, %v2016
        %v2018 = vrot.slane %v2013, %v2017
        %v2024 = vunpack.c.l.b16 %v2009
        %v2025 = vunpack.c.l.b16 %v2010
        %v2026 = vunpack.c.l.b16 %v2011
        %v2027 = vunpack.c.l.b16 %v2012
        %v2028 = vpack.c.b16 %v2025, %v2024
        %v2029 = vpack.c.b16 %v2027, %v2026
        %v2033 = vsel %vm947, %v2008, 0
        %2035 = vmatprep.subr.bf16.mxu0 0
        %2036 = vmatpush1.bf16.msra.mxu0 0
        %2037 = vmatprep.subr.bf16.mxu0 0
        %2038 = vmatpush1.bf16.msra.mxu0 0
        %2039 = vmatprep.subr.bf16.mxu0 0
        %2040 = vmatpush1.bf16.msra.mxu0 0
        %2041 = vmatprep.subr.bf16.mxu0 0
        %2042 = vmatpush1.bf16.msra.mxu0 0
        %2043 = vmatprep.subr.bf16.mxu0 0
        %2044 = vmatpush1.bf16.msra.mxu0 0
        %2045 = vmatprep.subr.bf16.mxu0 0
        %2046 = vmatpush1.bf16.msra.mxu0 0
        %2047 = vmatprep.subr.bf16.mxu0 0
        %2048 = vmatpush1.bf16.msra.mxu0 %v2029
        %2049 = vmatprep.subr.bf16.mxu0 0
        %2050 = vmatpush1.bf16.msra.mxu0 %v2028
        %2051 = vmatprep.subr.bf16.mxu0 0
        %2052 = vmatpush2.bf16.msra.mxu0 0
        %2053 = vmatprep.subr.bf16.mxu0 0
        %2054 = vmatpush2.bf16.msra.mxu0 0
        %2055 = vmatprep.subr.bf16.mxu0 0
        %2056 = vmatpush2.bf16.msra.mxu0 0
        %2057 = vmatprep.subr.bf16.mxu0 0
        %2058 = vmatpush2.bf16.msra.mxu0 0
        %2059 = vmatprep.subr.bf16.mxu0 0
        %2060 = vmatpush2.bf16.msra.mxu0 0
        %2061 = vmatprep.subr.bf16.mxu0 0
        %2062 = vmatpush2.bf16.msra.mxu0 0
        %2063 = vmatprep.subr.bf16.mxu0 0
        %2064 = vmatpush2.bf16.msra.mxu0 0
        %2065 = vmatprep.subr.bf16.mxu0 0
        %2066 = vmatpush2.bf16.msra.mxu0 0
        %2067 = vmatprep.mubr.bf16.mxu0 0
        %2068 = vmatmul.mubr.bf16.gmra.mxu0 %v2033
        %v2069 = vpop.f32.mrf.mxu0
        %v2070 = vadd.f32 %v2018, %v2069
        %v2071 = vpop.f32.mrf.mxu0
        %v2072 = vpop.f32.mrf.mxu0
        %v2073 = vadd.f32 %v2018, %v2072
        %v2074 = vpop.f32.mrf.mxu0
        %2075 = vdwg.mxu0
        %v2076 = vmul.f32 %v2070, 0.5
        %v2077 = vmul.f32 %v2073, 0.5
        %v2078 = vmul.f32 %v2070, 0.044715
        %v2079 = vmul.f32 %v2073, 0.044715
        %v2080 = vmul.f32 %v2078, %v2070
        %v2081 = vmul.f32 %v2079, %v2073
        %v2082 = vmul.f32 %v2080, %v2070
        %v2083 = vmul.f32 %v2081, %v2073
        %v2084 = vadd.f32 %v2070, %v2082
        %v2085 = vadd.f32 %v2073, %v2083
        %v2086 = vmul.f32 %v2084, 0.7978846
        %v2087 = vmul.f32 %v2085, 0.7978846
        %v2088 = vtanh.pop %v2086
        %v2089 = vtanh.pop %v2087
        %v2090 = vadd.f32 %v2088, 1.0
        %v2091 = vadd.f32 %v2089, 1.0
        %v2092 = vmul.f32 %v2076, %v2090
        %v2093 = vmul.f32 %v2077, %v2091
        %v2094 = vpack.c.bf16 %v2093, %v2092
        %v2095 = vld [vmem:[%s855] sm:$0xf]
        %v2096 = vld [vmem:[%s855 + $0x4] sm:$0xf]
        %v2097 = vld [vmem:[%s855 + $0x8] sm:$0xf]
        %v2098 = vld [vmem:[%s855 + $0xc] sm:$0xf]
        %v2099 = vld [vmem:[%s855 + $0x10] sm:$0xf]
        %v2100 = vld [vmem:[%s855 + $0x14] sm:$0xf]
        %v2101 = vld [vmem:[%s855 + $0x18] sm:$0xf]
        %v2102 = vld [vmem:[%s855 + $0x1c] sm:$0xf]
        %v2103 = vld [vmem:[%s858] sm:$0x1]
        %v2105 = vlaneseq
        %v2106 = vshrl.u32 %v2105, 7
        %v2107 = vsub.s32 0, %v2106
        %v2108 = vrot.slane %v2103, %v2107
        %v2118 = vunpack.c.l.b16 %v2095
        %v2119 = vunpack.c.l.b16 %v2096
        %v2120 = vunpack.c.l.b16 %v2097
        %v2121 = vunpack.c.l.b16 %v2098
        %v2122 = vunpack.c.l.b16 %v2099
        %v2123 = vunpack.c.l.b16 %v2100
        %v2124 = vunpack.c.l.b16 %v2101
        %v2125 = vunpack.c.l.b16 %v2102
        %v2126 = vpack.c.b16 %v2119, %v2118
        %v2127 = vpack.c.b16 %v2121, %v2120
        %v2128 = vpack.c.b16 %v2123, %v2122
        %v2129 = vpack.c.b16 %v2125, %v2124
        %vm2134 = vcmask 523264
        %v2136 = vsel %vm2134, %v2094, 0
        %2138 = vmatprep.subr.bf16.mxu0 0
        %2139 = vmatpush1.bf16.msra.mxu0 0
        %2140 = vmatprep.subr.bf16.mxu0 0
        %2141 = vmatpush1.bf16.msra.mxu0 0
        %2142 = vmatprep.subr.bf16.mxu0 0
        %2143 = vmatpush1.bf16.msra.mxu0 0
        %2144 = vmatprep.subr.bf16.mxu0 0
        %2145 = vmatpush1.bf16.msra.mxu0 0
        %2146 = vmatprep.subr.bf16.mxu0 0
        %2147 = vmatpush1.bf16.msra.mxu0 %v2129
        %2148 = vmatprep.subr.bf16.mxu0 0
        %2149 = vmatpush1.bf16.msra.mxu0 %v2128
        %2150 = vmatprep.subr.bf16.mxu0 0
        %2151 = vmatpush1.bf16.msra.mxu0 %v2127
        %2152 = vmatprep.subr.bf16.mxu0 0
        %2153 = vmatpush1.bf16.msra.mxu0 %v2126
        %2154 = vmatprep.subr.bf16.mxu0 0
        %2155 = vmatpush2.bf16.msra.mxu0 0
        %2156 = vmatprep.subr.bf16.mxu0 0
        %2157 = vmatpush2.bf16.msra.mxu0 0
        %2158 = vmatprep.subr.bf16.mxu0 0
        %2159 = vmatpush2.bf16.msra.mxu0 0
        %2160 = vmatprep.subr.bf16.mxu0 0
        %2161 = vmatpush2.bf16.msra.mxu0 0
        %2162 = vmatprep.subr.bf16.mxu0 0
        %2163 = vmatpush2.bf16.msra.mxu0 0
        %2164 = vmatprep.subr.bf16.mxu0 0
        %2165 = vmatpush2.bf16.msra.mxu0 0
        %2166 = vmatprep.subr.bf16.mxu0 0
        %2167 = vmatpush2.bf16.msra.mxu0 0
        %2168 = vmatprep.subr.bf16.mxu0 0
        %2169 = vmatpush2.bf16.msra.mxu0 0
        %2170 = vmatprep.mubr.bf16.mxu0 0
        %2171 = vmatmul.mubr.bf16.gmra.mxu0 %v2136
        %v2172 = vpop.f32.mrf.mxu0
        %v2173 = vadd.f32 %v2108, %v2172
        %v2174 = vpop.f32.mrf.mxu0
        %v2175 = vpop.f32.mrf.mxu0
        %v2176 = vadd.f32 %v2108, %v2175
        %v2177 = vpop.f32.mrf.mxu0
        %2178 = vdwg.mxu0
        %v2179 = vadd.f32 %v2006, %v2173
        %v2180 = vadd.f32 %v2007, %v2176
        %v2181 = vld [vmem:[%s861] sm:$0x1]
        %v2182 = vld [vmem:[%s864] sm:$0x1]
        %v2183 = vsel %vm947, %v2179, 0.0
        %2184 = vadd.xlane.f32.xlu0 %v2183
        %v2185 = vpop.xlane.xlu0 %2184
        %v2186 = vsel %vm947, %v2180, 0.0
        %2187 = vadd.xlane.f32.xlu0 %v2186
        %v2188 = vpop.xlane.xlu0 %2187
        %v2189 = vmul.f32 %v2185, %v1971
        %v2190 = vmul.f32 %v2188, %v1971
        %v2191 = vsub.f32 %v2179, %v2189
        %v2192 = vsub.f32 %v2180, %v2190
        %v2193 = vmul.f32 %v2191, %v2191
        %v2194 = vmul.f32 %v2192, %v2192
        %v2195 = vsel %vm947, %v2193, 0.0
        %2196 = vadd.xlane.f32.xlu0 %v2195
        %v2197 = vpop.xlane.xlu0 %2196
        %v2198 = vsel %vm947, %v2194, 0.0
        %2199 = vadd.xlane.f32.xlu0 %v2198
        %v2200 = vpop.xlane.xlu0 %2199
        %v2201 = vmul.f32 %v2197, %v1971
        %v2202 = vmul.f32 %v2200, %v1971
        %v2203 = vadd.f32 %v2201, 1e-05
        %v2204 = vadd.f32 %v2202, 1e-05
        %v2205 = vrsqrt.pop %v2203
        %v2206 = vrsqrt.pop %v2204
        %v2207 = vmul.f32 %v2191, %v2205
        %v2208 = vmul.f32 %v2192, %v2206
        %v2210 = vlaneseq
        %v2211 = vshrl.u32 %v2210, 7
        %v2212 = vsub.s32 0, %v2211
        %v2213 = vrot.slane %v2181, %v2212
        %v2215 = vmul.f32 %v2207, %v2213
        %v2216 = vmul.f32 %v2208, %v2213
        %v2218 = vlaneseq
        %v2219 = vshrl.u32 %v2218, 7
        %v2220 = vsub.s32 0, %v2219
        %v2221 = vrot.slane %v2182, %v2220
        %v2223 = vadd.f32 %v2215, %v2221
        %v2224 = vadd.f32 %v2216, %v2221
        %2225 = vst.msk [vmem:[#allocation2] sm:$0xff] %vm947, %v2223
        %2226 = vst.msk [vmem:[#allocation2 + $0x8] sm:$0xff] %vm947, %v2224
        %p2227 = scmp.eq.s32.totalorder %s32, 1
        // Predicated region
        $region105: #{text_encoder_forward.1} parent=99 // pred_check
          %p2228 = pneg %p2227
        $region106: #{text_encoder_forward.1} parent=99 // pred_check_branch
          %2230 = sbr.rel (%p2228) target = $region108
        $region107: #{text_encoder_forward.1} parent=99 // pred_region
          %v2231 = vld [vmem:[#allocation2] sm:$0xff]
          %v2232 = vld [vmem:[#allocation2 + $0x8] sm:$0xff]
          %v2234 = vsel %vm1373, %v920, 0
          %2236 = vmatprep.subr.mxu0 0.0
          %2237 = vmatpush1.msra.mxu0 0.0
          %2238 = vmatprep.subr.mxu0 0.0
          %2239 = vmatpush1.msra.mxu0 0.0
          %2240 = vmatprep.subr.mxu0 0.0
          %2241 = vmatpush1.msra.mxu0 0.0
          %2242 = vmatprep.subr.mxu0 0.0
          %2243 = vmatpush1.msra.mxu0 0.0
          %2244 = vmatprep.subr.mxu0 0.0
          %2245 = vmatpush1.msra.mxu0 0.0
          %2246 = vmatprep.subr.mxu0 0.0
          %2247 = vmatpush1.msra.mxu0 0.0
          %2248 = vmatprep.subr.mxu0 0.0
          %2249 = vmatpush1.msra.mxu0 0.0
          %2250 = vmatprep.subr.mxu0 0.0
          %2251 = vmatpush1.msra.mxu0 0.0
          %2252 = vmatprep.subr.mxu0 0.0
          %2253 = vmatpush1.msra.mxu0 0.0
          %2254 = vmatprep.subr.mxu0 0.0
          %2255 = vmatpush1.msra.mxu0 0.0
          %2256 = vmatprep.subr.mxu0 0.0
          %2257 = vmatpush1.msra.mxu0 0.0
          %2258 = vmatprep.subr.mxu0 0.0
          %2259 = vmatpush1.msra.mxu0 0.0
          %2260 = vmatprep.subr.mxu0 0.0
          %2261 = vmatpush1.msra.mxu0 0.0
          %2262 = vmatprep.subr.mxu0 0.0
          %2263 = vmatpush1.msra.mxu0 0.0
          %2264 = vmatprep.subr.mxu0 0.0
          %2265 = vmatpush1.msra.mxu0 0.0
          %2266 = vmatprep.subr.mxu0 0.0
          %2267 = vmatpush1.msra.mxu0 %v2231
          %2268 = vmatprep.subr.mxu0 0.0
          %2269 = vmatpush2.msra.mxu0 0.0
          %2270 = vmatprep.subr.mxu0 0.0
          %2271 = vmatpush2.msra.mxu0 0.0
          %2272 = vmatprep.subr.mxu0 0.0
          %2273 = vmatpush2.msra.mxu0 0.0
          %2274 = vmatprep.subr.mxu0 0.0
          %2275 = vmatpush2.msra.mxu0 0.0
          %2276 = vmatprep.subr.mxu0 0.0
          %2277 = vmatpush2.msra.mxu0 0.0
          %2278 = vmatprep.subr.mxu0 0.0
          %2279 = vmatpush2.msra.mxu0 0.0
          %2280 = vmatprep.subr.mxu0 0.0
          %2281 = vmatpush2.msra.mxu0 0.0
          %2282 = vmatprep.subr.mxu0 0.0
          %2283 = vmatpush2.msra.mxu0 0.0
          %2284 = vmatprep.subr.mxu0 0.0
          %2285 = vmatpush2.msra.mxu0 0.0
          %2286 = vmatprep.subr.mxu0 0.0
          %2287 = vmatpush2.msra.mxu0 0.0
          %2288 = vmatprep.subr.mxu0 0.0
          %2289 = vmatpush2.msra.mxu0 0.0
          %2290 = vmatprep.subr.mxu0 0.0
          %2291 = vmatpush2.msra.mxu0 0.0
          %2292 = vmatprep.subr.mxu0 0.0
          %2293 = vmatpush2.msra.mxu0 0.0
          %2294 = vmatprep.subr.mxu0 0.0
          %2295 = vmatpush2.msra.mxu0 0.0
          %2296 = vmatprep.subr.mxu0 0.0
          %2297 = vmatpush2.msra.mxu0 0.0
          %2298 = vmatprep.subr.mxu0 0.0
          %2299 = vmatpush2.msra.mxu0 0.0
          %2300 = vmatprep.mubr.f32.mxu0 0.0
          %2301 = vmatmul.mubr.f32.gmra.mxu0 %v2234
          %v2302 = vpop.f32.mrf.mxu0
          %v2303 = vadd.f32 0.0, %v2302
          %v2304 = vpop.f32.mrf.mxu0
          %2305 = vdwg.mxu0
          %vm2306 = vcmask 57344
          %v2307 = vsel %vm2306, %v920, 0.0
          %2308 = vadd.xlane.f32.xlu0 %v2307
          %v2309 = vpop.xlane.xlu0 %2308
          %v2310 = vmax.f32 %v2309, 1e-09
          %v2311 = vrcp.pop %v2310
          %v2312 = vmul.f32 %v2303, %v2311
          %v2313 = vrot.slane %v920, 1
          %v2314 = vsel %vm1373, %v2313, 0
          %2316 = vmatprep.subr.mxu0 0.0
          %2317 = vmatpush1.msra.mxu0 0.0
          %2318 = vmatprep.subr.mxu0 0.0
          %2319 = vmatpush1.msra.mxu0 0.0
          %2320 = vmatprep.subr.mxu0 0.0
          %2321 = vmatpush1.msra.mxu0 0.0
          %2322 = vmatprep.subr.mxu0 0.0
          %2323 = vmatpush1.msra.mxu0 0.0
          %2324 = vmatprep.subr.mxu0 0.0
          %2325 = vmatpush1.msra.mxu0 0.0
          %2326 = vmatprep.subr.mxu0 0.0
          %2327 = vmatpush1.msra.mxu0 0.0
          %2328 = vmatprep.subr.mxu0 0.0
          %2329 = vmatpush1.msra.mxu0 0.0
          %2330 = vmatprep.subr.mxu0 0.0
          %2331 = vmatpush1.msra.mxu0 0.0
          %2332 = vmatprep.subr.mxu0 0.0
          %2333 = vmatpush1.msra.mxu0 0.0
          %2334 = vmatprep.subr.mxu0 0.0
          %2335 = vmatpush1.msra.mxu0 0.0
          %2336 = vmatprep.subr.mxu0 0.0
          %2337 = vmatpush1.msra.mxu0 0.0
          %2338 = vmatprep.subr.mxu0 0.0
          %2339 = vmatpush1.msra.mxu0 0.0
          %2340 = vmatprep.subr.mxu0 0.0
          %2341 = vmatpush1.msra.mxu0 0.0
          %2342 = vmatprep.subr.mxu0 0.0
          %2343 = vmatpush1.msra.mxu0 0.0
          %2344 = vmatprep.subr.mxu0 0.0
          %2345 = vmatpush1.msra.mxu0 0.0
          %2346 = vmatprep.subr.mxu0 0.0
          %2347 = vmatpush1.msra.mxu0 %v2232
          %2348 = vmatprep.subr.mxu0 0.0
          %2349 = vmatpush2.msra.mxu0 0.0
          %2350 = vmatprep.subr.mxu0 0.0
          %2351 = vmatpush2.msra.mxu0 0.0
          %2352 = vmatprep.subr.mxu0 0.0
          %2353 = vmatpush2.msra.mxu0 0.0
          %2354 = vmatprep.subr.mxu0 0.0
          %2355 = vmatpush2.msra.mxu0 0.0
          %2356 = vmatprep.subr.mxu0 0.0
          %2357 = vmatpush2.msra.mxu0 0.0
          %2358 = vmatprep.subr.mxu0 0.0
          %2359 = vmatpush2.msra.mxu0 0.0
          %2360 = vmatprep.subr.mxu0 0.0
          %2361 = vmatpush2.msra.mxu0 0.0
          %2362 = vmatprep.subr.mxu0 0.0
          %2363 = vmatpush2.msra.mxu0 0.0
          %2364 = vmatprep.subr.mxu0 0.0
          %2365 = vmatpush2.msra.mxu0 0.0
          %2366 = vmatprep.subr.mxu0 0.0
          %2367 = vmatpush2.msra.mxu0 0.0
          %2368 = vmatprep.subr.mxu0 0.0
          %2369 = vmatpush2.msra.mxu0 0.0
          %2370 = vmatprep.subr.mxu0 0.0
          %2371 = vmatpush2.msra.mxu0 0.0
          %2372 = vmatprep.subr.mxu0 0.0
          %2373 = vmatpush2.msra.mxu0 0.0
          %2374 = vmatprep.subr.mxu0 0.0
          %2375 = vmatpush2.msra.mxu0 0.0
          %2376 = vmatprep.subr.mxu0 0.0
          %2377 = vmatpush2.msra.mxu0 0.0
          %2378 = vmatprep.subr.mxu0 0.0
          %2379 = vmatpush2.msra.mxu0 0.0
          %2380 = vmatprep.mubr.f32.mxu0 0.0
          %2381 = vmatmul.mubr.f32.gmra.mxu0 %v2314
          %v2382 = vpop.f32.mrf.mxu0
          %v2383 = vadd.f32 0.0, %v2382
          %v2384 = vpop.f32.mrf.mxu0
          %2385 = vdwg.mxu0
          %vm2386 = vcmask 58369
          %v2387 = vsel %vm2386, %v920, 0.0
          %2388 = vadd.xlane.f32.xlu0 %v2387
          %v2389 = vpop.xlane.xlu0 %2388
          %v2390 = vmax.f32 %v2389, 1e-09
          %v2391 = vrcp.pop %v2390
          %v2393 = vrot.slane %v2391, 1
          %v2395 = vmul.f32 %v2383, %v2393
          %v2397 = vrot.slane %v2395, 7
          %vm2399 = vcmask 1040384
          %v2400 = vsel %vm2399, %v2312, %v2397
          %vm2401 = vcmask 254976
          %2402 = vst.msk [vmem:[#allocation3] sm:$0x3] %vm2401, %v2400
        $region108: #{text_encoder_forward.1} parent=99 // pred_fallthru
          _
        // Predicated region
        $region109: #{text_encoder_forward.1} parent=99 // pred_check
          %p2403 = pneg %p545
        $region110: #{text_encoder_forward.1} parent=99 // pred_check_branch
          %2405 = sbr.rel (%p2403) target = $region112
        $region111: #{text_encoder_forward.1} parent=99 // pred_region
          %s2407 = ssub.s32 32, 32
          %2408 = vsyncadd [#allocation4], %s2407
          %s2410 = sshll.u32 [#allocation3], 4
          %s2411 = int_to_ptr.vmem [resolvable:$true] %s2410
          %2413 = dma.vmem_to_hbm [thread:$0]  %s2411, 32, %s20, [#allocation4]
        $region112: #{text_encoder_forward.1} parent=99 // pred_fallthru
          _
        // Predicated region
        $region113: #{text_encoder_forward.1} parent=99 // pred_check
          %p2414 = pneg %p545
        $region114: #{text_encoder_forward.1} parent=99 // pred_check_branch
          %2416 = sbr.rel (%p2414) target = $region116
        $region115: #{text_encoder_forward.1} parent=99 // pred_region
          %2417 = dma.done [#allocation4], 32
        $region116: #{text_encoder_forward.1} parent=99 // pred_fallthru
          _
      $region100: #{text_encoder_forward.1} parent=5 // pred_fallthru
        _
      %p2418 = scmp.le.s32.totalorder 2, %s27
      // Predicated region
      $region117: #{text_encoder_forward.1} parent=5 // pred_check
        %p2419 = pneg %p2418
      $region118: #{text_encoder_forward.1} parent=5 // pred_check_branch
        %2421 = sbr.rel (%p2419) target = $region120
      $region119: #{text_encoder_forward.1} parent=5 // pred_region
        %s2422 = ssub.s32 %s27, 2
      $region120: #{text_encoder_forward.1} parent=5 // pred_fallthru
        _
    $region6: #{text_encoder_forward.1} parent=1 // loop_footer
      %s31 = sadd.s32 1, %s27
    $region7: #{text_encoder_forward.1} parent=1 // loop_footer_branch
      %26 = sbr.rel target = $region3
    $region8: #{text_encoder_forward.1} parent=1 // loop_exit
      _
    %2423 = vsyncpa [#allocation4], 1
    %s2424 = scalar_lea.sflag [#allocation4], 1
    %2425 = vsyncpa %s2424, 1

</llo_original>
